<compile_context>
chip_gen: v7x
topology: tpu7x:2x2x1
jax: 0.10.0
libtpu: 0.0.40
codegen_flags: <defaults>
</compile_context>

<pallas_src>
import functools

import jax
import jax.numpy as jnp
from jax.experimental import pallas as pl
from jax.experimental.pallas import tpu as pltpu


def _round_up(n, m):
    return ((n + m - 1) // m) * m


def _softplus(y):
    # torch.nn.Softplus (beta=1, threshold=20): y if y > 20 else log1p(exp(y))
    return jnp.where(y > 20.0, y, jnp.log1p(jnp.exp(jnp.minimum(y, 20.0))))


def _fused_mlp_kernel(*refs, softplus_flags):
    """refs = (x_ref, w_0..w_{L-1}, b_0..b_{L-1}, o_ref).

    Runs the full layer chain on one (TB, pad_in) activation tile.
    Intermediates never leave VMEM/vregs; only the final tile is stored.
    """
    n = len(softplus_flags)
    x_ref = refs[0]
    w_refs = refs[1:1 + n]
    b_refs = refs[1 + n:1 + 2 * n]
    o_ref = refs[1 + 2 * n]

    h = x_ref[...]
    for i in range(n):
        # MXU matmul with f32 accumulation; bias + softplus stay in f32
        # (VPU add, EUP exp/log1p — off the MXU critical path).
        y = jnp.dot(h, w_refs[i][...], preferred_element_type=jnp.float32)
        y = y + b_refs[i][...]
        if softplus_flags[i]:
            y = _softplus(y)
        # Cast to the next layer's operand dtype (no-op for f32 weights).
        h = y.astype(w_refs[i + 1].dtype) if i + 1 < n else y
    o_ref[...] = h.astype(o_ref.dtype)


def _pick_batch_tile(batch):
    # 128 rows: full MXU M-occupancy on every generation and a modest VMEM
    # footprint even at space_dim=7200.  Non-dividing batches are handled by
    # padding the batch (cdiv grid) in the wrapper — no tiny-tile fallback.
    if batch >= 128:
        return 128
    return max(8, _round_up(batch, 8))


def _vmem_limit_bytes(tb, pad_in, pad_out, weights, biases, act_itemsize):
    need = 2 * tb * pad_in * act_itemsize          # x tile, double-buffered
    need += 2 * tb * pad_out * 4                   # f32 out tile, double-buffered
    for a in list(weights) + list(biases):         # worst case: double-buffered
        need += 2 * int(a.size) * a.dtype.itemsize
    need += 8 << 20                                # compiler scratch headroom
    return int(min(max(need, 32 << 20), 64 << 20))


def autoencoder_forward(params, x, *, tile_batch=None,
                        compute_dtype=jnp.float32):
    """Fused encoder+decoder forward pass: one pallas_call for all layers."""
    weights = [w for (w, _) in params["layers"]]
    biases = [b for (_, b) in params["layers"]]
    flags = tuple(bool(f) for f in params["softplus"])

    batch, in_dim = x.shape
    assert in_dim == weights[0].shape[0]
    out_dim = weights[-1].shape[1]

    # ---- lane padding: make in/out dims multiples of 128 (dense vld/vst) ----
    pad_in = _round_up(in_dim, 128)
    pad_out = _round_up(out_dim, 128)
    if pad_in != in_dim:
        x = jnp.pad(x, ((0, 0), (0, pad_in - in_dim)))
        weights[0] = jnp.pad(weights[0], ((0, pad_in - in_dim), (0, 0)))
    if pad_out != out_dim:
        weights[-1] = jnp.pad(weights[-1], ((0, 0), (0, pad_out - out_dim)))
        biases[-1] = jnp.pad(biases[-1], ((0, 0), (0, pad_out - out_dim)))

    # ---- batch tiling: cdiv-robust, pad rows to a multiple of the tile ----
    tb = tile_batch if tile_batch is not None else _pick_batch_tile(batch)
    pad_batch = _round_up(batch, tb)
    if pad_batch != batch:
        x = jnp.pad(x, ((0, pad_batch - batch), (0, 0)))
    grid = (pad_batch // tb,)

    # ---- bf16 MXU operands (v6e/v7x fast path); accumulation stays f32 ----
    if compute_dtype != jnp.float32:
        x = x.astype(compute_dtype)
        weights = [w.astype(compute_dtype) for w in weights]

    act_itemsize = jnp.dtype(compute_dtype).itemsize
    vmem_limit = _vmem_limit_bytes(tb, pad_in, pad_out, weights, biases,
                                   act_itemsize)

    kernel = functools.partial(_fused_mlp_kernel, softplus_flags=flags)

    def run(single_buffer_weights):
        # Weights/biases are grid-invariant (index_map always (0,0)): DMA'd once
        # and VMEM-resident; single-buffer them to halve their VMEM footprint.
        kw = ({"pipeline_mode": pl.Buffered(1)}
              if single_buffer_weights else {})
        in_specs = [pl.BlockSpec((tb, pad_in), lambda i: (i, 0))]
        in_specs += [pl.BlockSpec(w.shape, lambda i: (0, 0), **kw)
                     for w in weights]
        in_specs += [pl.BlockSpec(b.shape, lambda i: (0, 0), **kw)
                     for b in biases]
        out_spec = pl.BlockSpec((tb, pad_out), lambda i: (i, 0))

        return pl.pallas_call(
            kernel,
            out_shape=jax.ShapeDtypeStruct((pad_batch, pad_out), jnp.float32),
            grid_spec=pltpu.PrefetchScalarGridSpec(
                num_scalar_prefetch=0,
                grid=grid,
                in_specs=in_specs,
                out_specs=out_spec,
            ),
            compiler_params=pltpu.CompilerParams(
                dimension_semantics=("parallel",),
                vmem_limit_bytes=vmem_limit),
        )(x, *weights, *biases)

    try:
        out = run(True)
    except Exception:
        # Fallback for JAX versions without pipeline_mode / Buffered(1) support:
        # identical semantics, default double-buffered weights.
        out = run(False)

    return out[:batch, :out_dim]


def _init_linear_params(key, in_dim, out_dim):
    # torch.nn.Linear default init: uniform(+/- 1/sqrt(in_dim)) for W and b.
    kw, kb = jax.random.split(key)
    bound = 1.0 / jnp.sqrt(jnp.float32(in_dim))
    # Stored already transposed to (in, out); bias stored as (1, out).
    w = jax.random.uniform(kw, (in_dim, out_dim), jnp.float32, -bound, bound)
    b = jax.random.uniform(kb, (1, out_dim), jnp.float32, -bound, bound)
    return w, b


def build_autoencoder_params(key, space_dim, hidden_units, n_z):
    """Mirrors Autoencoder.__init__ layer structure (encoder then decoder).

    Softplus is applied after every layer except the last encoder layer and
    the last decoder layer, matching Autoencoder.encoder / .decoder.
    """
    dims_e = [space_dim] + list(hidden_units) + [n_z]
    dims_d = [n_z] + list(hidden_units)[::-1] + [space_dim]
    dims = list(zip(dims_e[:-1], dims_e[1:])) + list(zip(dims_d[:-1], dims_d[1:]))
    n_enc = len(dims_e) - 1
    n_dec = len(dims_d) - 1
    softplus = [i < n_enc - 1 for i in range(n_enc)] + \
               [i < n_dec - 1 for i in range(n_dec)]

    keys = jax.random.split(key, len(dims))
    layers = [_init_linear_params(k, di, do) for k, (di, do) in zip(keys, dims)]
    return {"layers": layers, "softplus": softplus}


def reference_forward(params, x):
    h = x
    for (w, b), sp in zip(params["layers"], params["softplus"]):
        h = h @ w + b
        if sp:
            h = _softplus(h)
    return h


if __name__ == "__main__":
    # Small shapes consistent with the module (real model: space_dim=7200 and
    # hundreds of snapshots).  batch=200 and space_dim=200 deliberately exercise
    # the new cdiv batch padding (200 -> 256 rows, 2 parallel grid steps) and the
    # lane padding (200 -> 256 cols) paths.
    batch = 200
    space_dim = 200
    hidden_units = [64, 32]
    n_z = 8

    key = jax.random.PRNGKey(0)
    kp, kx = jax.random.split(key)
    params = build_autoencoder_params(kp, space_dim, hidden_units, n_z)
    x = jax.random.normal(kx, (batch, space_dim), jnp.float32)

    ref = reference_forward(params, x)

    # f32 path: tight tolerance.
    out = jax.block_until_ready(autoencoder_forward(params, x))
    assert out.shape == (batch, space_dim)
    assert jnp.allclose(out, ref, atol=1e-4, rtol=1e-4), "f32 mismatch vs reference"

    # bf16 MXU-operand path (v5e/v6e/v7x fast path): loose, norm-relative check.
    out_bf16 = jax.block_until_ready(
        autoencoder_forward(params, x, compute_dtype=jnp.bfloat16))
    rel = jnp.linalg.norm(out_bf16 - ref) / jnp.linalg.norm(ref)
    assert rel < 5e-2, f"bf16 relative error too large: {rel}"

    print("KERNEL_OK")
</pallas_src>

<mosaic_0001>
module attributes {stable_mosaic.version = 11 : i64} {
  func.func @_fused_mlp_kernel(%arg0: i32, %arg1: memref<128x256xf32, #tpu.memory_space<vmem>>, %arg2: memref<256x64xf32, #tpu.memory_space<vmem>>, %arg3: memref<64x32xf32, #tpu.memory_space<vmem>>, %arg4: memref<32x8xf32, #tpu.memory_space<vmem>>, %arg5: memref<8x32xf32, #tpu.memory_space<vmem>>, %arg6: memref<32x64xf32, #tpu.memory_space<vmem>>, %arg7: memref<64x256xf32, #tpu.memory_space<vmem>>, %arg8: memref<1x64xf32, #tpu.memory_space<vmem>>, %arg9: memref<1x32xf32, #tpu.memory_space<vmem>>, %arg10: memref<1x8xf32, #tpu.memory_space<vmem>>, %arg11: memref<1x32xf32, #tpu.memory_space<vmem>>, %arg12: memref<1x64xf32, #tpu.memory_space<vmem>>, %arg13: memref<1x256xf32, #tpu.memory_space<vmem>>, %arg14: memref<128x256xf32, #tpu.memory_space<vmem>>) attributes {dimension_semantics = [#tpu.dimension_semantics<parallel>], iteration_bounds = array<i64: 2>, scalar_prefetch = 0 : i64, scratch_operands = 0 : i64, tpu.core_type = #tpu.core_type<tc>, window_params = [{transform_indices = @transform_0, window_bounds = array<i64: 128, 256>}, {pipeline_mode = #tpu.pipeline_mode<synchronous>, transform_indices = @transform_1, window_bounds = array<i64: 256, 64>}, {pipeline_mode = #tpu.pipeline_mode<synchronous>, transform_indices = @transform_2, window_bounds = array<i64: 64, 32>}, {pipeline_mode = #tpu.pipeline_mode<synchronous>, transform_indices = @transform_3, window_bounds = array<i64: 32, 8>}, {pipeline_mode = #tpu.pipeline_mode<synchronous>, transform_indices = @transform_4, window_bounds = array<i64: 8, 32>}, {pipeline_mode = #tpu.pipeline_mode<synchronous>, transform_indices = @transform_5, window_bounds = array<i64: 32, 64>}, {pipeline_mode = #tpu.pipeline_mode<synchronous>, transform_indices = @transform_6, window_bounds = array<i64: 64, 256>}, {pipeline_mode = #tpu.pipeline_mode<synchronous>, transform_indices = @transform_7, window_bounds = array<i64: 1, 64>}, {pipeline_mode = #tpu.pipeline_mode<synchronous>, transform_indices = @transform_8, window_bounds = array<i64: 1, 32>}, {pipeline_mode = #tpu.pipeline_mode<synchronous>, transform_indices = @transform_9, window_bounds = array<i64: 1, 8>}, {pipeline_mode = #tpu.pipeline_mode<synchronous>, transform_indices = @transform_10, window_bounds = array<i64: 1, 32>}, {pipeline_mode = #tpu.pipeline_mode<synchronous>, transform_indices = @transform_11, window_bounds = array<i64: 1, 64>}, {pipeline_mode = #tpu.pipeline_mode<synchronous>, transform_indices = @transform_12, window_bounds = array<i64: 1, 256>}, {transform_indices = @transform_13, window_bounds = array<i64: 128, 256>}]} {
    %c0 = arith.constant 0 : index
    %c0_0 = arith.constant 0 : index
    %0 = vector.load %arg1[%c0, %c0_0] : memref<128x256xf32, #tpu.memory_space<vmem>>, vector<128x256xf32>
    %c0_1 = arith.constant 0 : index
    %c0_2 = arith.constant 0 : index
    %1 = vector.load %arg2[%c0_1, %c0_2] : memref<256x64xf32, #tpu.memory_space<vmem>>, vector<256x64xf32>
    %cst = arith.constant dense<0.000000e+00> : vector<128x64xf32>
    %2 = tpu.matmul %0, %1, %cst {dimension_numbers = #tpu.dot_dimension_numbers<[1], [0], [0], [1], [0, 0, 1, 1], [], []>} : vector<128x256xf32>, vector<256x64xf32>, vector<128x64xf32> -> vector<128x64xf32>
    %c0_3 = arith.constant 0 : index
    %c0_4 = arith.constant 0 : index
    %3 = vector.load %arg8[%c0_3, %c0_4] : memref<1x64xf32, #tpu.memory_space<vmem>>, vector<1x64xf32>
    %4 = vector.broadcast %3 : vector<1x64xf32> to vector<128x64xf32>
    %5 = arith.addf %2, %4 : vector<128x64xf32>
    %cst_5 = arith.constant 2.000000e+01 : f32
    %6 = vector.broadcast %cst_5 : f32 to vector<128x64xf32>
    %7 = arith.cmpf ogt, %5, %6 : vector<128x64xf32>
    %cst_6 = arith.constant 2.000000e+01 : f32
    %8 = vector.broadcast %cst_6 : f32 to vector<128x64xf32>
    %9 = arith.minimumf %5, %8 : vector<128x64xf32>
    %10 = math.exp %9 : vector<128x64xf32>
    %11 = math.log1p %10 : vector<128x64xf32>
    %12 = arith.select %7, %5, %11 : vector<128x64xi1>, vector<128x64xf32>
    %c0_7 = arith.constant 0 : index
    %c0_8 = arith.constant 0 : index
    %13 = vector.load %arg3[%c0_7, %c0_8] : memref<64x32xf32, #tpu.memory_space<vmem>>, vector<64x32xf32>
    %cst_9 = arith.constant dense<0.000000e+00> : vector<128x32xf32>
    %14 = tpu.matmul %12, %13, %cst_9 {dimension_numbers = #tpu.dot_dimension_numbers<[1], [0], [0], [1], [0, 0, 1, 1], [], []>} : vector<128x64xf32>, vector<64x32xf32>, vector<128x32xf32> -> vector<128x32xf32>
    %c0_10 = arith.constant 0 : index
    %c0_11 = arith.constant 0 : index
    %15 = vector.load %arg9[%c0_10, %c0_11] : memref<1x32xf32, #tpu.memory_space<vmem>>, vector<1x32xf32>
    %16 = vector.broadcast %15 : vector<1x32xf32> to vector<128x32xf32>
    %17 = arith.addf %14, %16 : vector<128x32xf32>
    %cst_12 = arith.constant 2.000000e+01 : f32
    %18 = vector.broadcast %cst_12 : f32 to vector<128x32xf32>
    %19 = arith.cmpf ogt, %17, %18 : vector<128x32xf32>
    %cst_13 = arith.constant 2.000000e+01 : f32
    %20 = vector.broadcast %cst_13 : f32 to vector<128x32xf32>
    %21 = arith.minimumf %17, %20 : vector<128x32xf32>
    %22 = math.exp %21 : vector<128x32xf32>
    %23 = math.log1p %22 : vector<128x32xf32>
    %24 = arith.select %19, %17, %23 : vector<128x32xi1>, vector<128x32xf32>
    %c0_14 = arith.constant 0 : index
    %c0_15 = arith.constant 0 : index
    %25 = vector.load %arg4[%c0_14, %c0_15] : memref<32x8xf32, #tpu.memory_space<vmem>>, vector<32x8xf32>
    %cst_16 = arith.constant dense<0.000000e+00> : vector<128x8xf32>
    %26 = tpu.matmul %24, %25, %cst_16 {dimension_numbers = #tpu.dot_dimension_numbers<[1], [0], [0], [1], [0, 0, 1, 1], [], []>} : vector<128x32xf32>, vector<32x8xf32>, vector<128x8xf32> -> vector<128x8xf32>
    %c0_17 = arith.constant 0 : index
    %c0_18 = arith.constant 0 : index
    %27 = vector.load %arg10[%c0_17, %c0_18] : memref<1x8xf32, #tpu.memory_space<vmem>>, vector<1x8xf32>
    %28 = vector.broadcast %27 : vector<1x8xf32> to vector<128x8xf32>
    %29 = arith.addf %26, %28 : vector<128x8xf32>
    %c0_19 = arith.constant 0 : index
    %c0_20 = arith.constant 0 : index
    %30 = vector.load %arg5[%c0_19, %c0_20] : memref<8x32xf32, #tpu.memory_space<vmem>>, vector<8x32xf32>
    %cst_21 = arith.constant dense<0.000000e+00> : vector<128x32xf32>
    %31 = tpu.matmul %29, %30, %cst_21 {dimension_numbers = #tpu.dot_dimension_numbers<[1], [0], [0], [1], [0, 0, 1, 1], [], []>} : vector<128x8xf32>, vector<8x32xf32>, vector<128x32xf32> -> vector<128x32xf32>
    %c0_22 = arith.constant 0 : index
    %c0_23 = arith.constant 0 : index
    %32 = vector.load %arg11[%c0_22, %c0_23] : memref<1x32xf32, #tpu.memory_space<vmem>>, vector<1x32xf32>
    %33 = vector.broadcast %32 : vector<1x32xf32> to vector<128x32xf32>
    %34 = arith.addf %31, %33 : vector<128x32xf32>
    %cst_24 = arith.constant 2.000000e+01 : f32
    %35 = vector.broadcast %cst_24 : f32 to vector<128x32xf32>
    %36 = arith.cmpf ogt, %34, %35 : vector<128x32xf32>
    %cst_25 = arith.constant 2.000000e+01 : f32
    %37 = vector.broadcast %cst_25 : f32 to vector<128x32xf32>
    %38 = arith.minimumf %34, %37 : vector<128x32xf32>
    %39 = math.exp %38 : vector<128x32xf32>
    %40 = math.log1p %39 : vector<128x32xf32>
    %41 = arith.select %36, %34, %40 : vector<128x32xi1>, vector<128x32xf32>
    %c0_26 = arith.constant 0 : index
    %c0_27 = arith.constant 0 : index
    %42 = vector.load %arg6[%c0_26, %c0_27] : memref<32x64xf32, #tpu.memory_space<vmem>>, vector<32x64xf32>
    %cst_28 = arith.constant dense<0.000000e+00> : vector<128x64xf32>
    %43 = tpu.matmul %41, %42, %cst_28 {dimension_numbers = #tpu.dot_dimension_numbers<[1], [0], [0], [1], [0, 0, 1, 1], [], []>} : vector<128x32xf32>, vector<32x64xf32>, vector<128x64xf32> -> vector<128x64xf32>
    %c0_29 = arith.constant 0 : index
    %c0_30 = arith.constant 0 : index
    %44 = vector.load %arg12[%c0_29, %c0_30] : memref<1x64xf32, #tpu.memory_space<vmem>>, vector<1x64xf32>
    %45 = vector.broadcast %44 : vector<1x64xf32> to vector<128x64xf32>
    %46 = arith.addf %43, %45 : vector<128x64xf32>
    %cst_31 = arith.constant 2.000000e+01 : f32
    %47 = vector.broadcast %cst_31 : f32 to vector<128x64xf32>
    %48 = arith.cmpf ogt, %46, %47 : vector<128x64xf32>
    %cst_32 = arith.constant 2.000000e+01 : f32
    %49 = vector.broadcast %cst_32 : f32 to vector<128x64xf32>
    %50 = arith.minimumf %46, %49 : vector<128x64xf32>
    %51 = math.exp %50 : vector<128x64xf32>
    %52 = math.log1p %51 : vector<128x64xf32>
    %53 = arith.select %48, %46, %52 : vector<128x64xi1>, vector<128x64xf32>
    %c0_33 = arith.constant 0 : index
    %c0_34 = arith.constant 0 : index
    %54 = vector.load %arg7[%c0_33, %c0_34] : memref<64x256xf32, #tpu.memory_space<vmem>>, vector<64x256xf32>
    %cst_35 = arith.constant dense<0.000000e+00> : vector<128x256xf32>
    %55 = tpu.matmul %53, %54, %cst_35 {dimension_numbers = #tpu.dot_dimension_numbers<[1], [0], [0], [1], [0, 0, 1, 1], [], []>} : vector<128x64xf32>, vector<64x256xf32>, vector<128x256xf32> -> vector<128x256xf32>
    %c0_36 = arith.constant 0 : index
    %c0_37 = arith.constant 0 : index
    %56 = vector.load %arg13[%c0_36, %c0_37] : memref<1x256xf32, #tpu.memory_space<vmem>>, vector<1x256xf32>
    %57 = vector.broadcast %56 : vector<1x256xf32> to vector<128x256xf32>
    %58 = arith.addf %55, %57 : vector<128x256xf32>
    %c0_38 = arith.constant 0 : index
    %c0_39 = arith.constant 0 : index
    %59 = vector.load %arg14[%c0_38, %c0_39] : memref<128x256xf32, #tpu.memory_space<vmem>>, vector<128x256xf32>
    tpu.vector_store %arg14[%c0_38, %c0_39], %58 {strides = array<i32>} : memref<128x256xf32, #tpu.memory_space<vmem>>, vector<128x256xf32>,
    return
  }
  func.func @transform_0(%arg0: i32) -> (i32, i32) {
    %c0_i32 = arith.constant 0 : i32
    %c0_i32_0 = arith.constant 0 : i32
    return %arg0, %c0_i32 : i32, i32
  }
  func.func @transform_1(%arg0: i32) -> (i32, i32) {
    %c0_i32 = arith.constant 0 : i32
    %c0_i32_0 = arith.constant 0 : i32
    %c0_i32_1 = arith.constant 0 : i32
    return %c0_i32, %c0_i32_0 : i32, i32
  }
  func.func @transform_2(%arg0: i32) -> (i32, i32) {
    %c0_i32 = arith.constant 0 : i32
    %c0_i32_0 = arith.constant 0 : i32
    %c0_i32_1 = arith.constant 0 : i32
    return %c0_i32, %c0_i32_0 : i32, i32
  }
  func.func @transform_3(%arg0: i32) -> (i32, i32) {
    %c0_i32 = arith.constant 0 : i32
    %c0_i32_0 = arith.constant 0 : i32
    %c0_i32_1 = arith.constant 0 : i32
    return %c0_i32, %c0_i32_0 : i32, i32
  }
  func.func @transform_4(%arg0: i32) -> (i32, i32) {
    %c0_i32 = arith.constant 0 : i32
    %c0_i32_0 = arith.constant 0 : i32
    %c0_i32_1 = arith.constant 0 : i32
    return %c0_i32, %c0_i32_0 : i32, i32
  }
  func.func @transform_5(%arg0: i32) -> (i32, i32) {
    %c0_i32 = arith.constant 0 : i32
    %c0_i32_0 = arith.constant 0 : i32
    %c0_i32_1 = arith.constant 0 : i32
    return %c0_i32, %c0_i32_0 : i32, i32
  }
  func.func @transform_6(%arg0: i32) -> (i32, i32) {
    %c0_i32 = arith.constant 0 : i32
    %c0_i32_0 = arith.constant 0 : i32
    %c0_i32_1 = arith.constant 0 : i32
    return %c0_i32, %c0_i32_0 : i32, i32
  }
  func.func @transform_7(%arg0: i32) -> (i32, i32) {
    %c0_i32 = arith.constant 0 : i32
    %c0_i32_0 = arith.constant 0 : i32
    %c0_i32_1 = arith.constant 0 : i32
    return %c0_i32, %c0_i32_0 : i32, i32
  }
  func.func @transform_8(%arg0: i32) -> (i32, i32) {
    %c0_i32 = arith.constant 0 : i32
    %c0_i32_0 = arith.constant 0 : i32
    %c0_i32_1 = arith.constant 0 : i32
    return %c0_i32, %c0_i32_0 : i32, i32
  }
  func.func @transform_9(%arg0: i32) -> (i32, i32) {
    %c0_i32 = arith.constant 0 : i32
    %c0_i32_0 = arith.constant 0 : i32
    %c0_i32_1 = arith.constant 0 : i32
    return %c0_i32, %c0_i32_0 : i32, i32
  }
  func.func @transform_10(%arg0: i32) -> (i32, i32) {
    %c0_i32 = arith.constant 0 : i32
    %c0_i32_0 = arith.constant 0 : i32
    %c0_i32_1 = arith.constant 0 : i32
    return %c0_i32, %c0_i32_0 : i32, i32
  }
  func.func @transform_11(%arg0: i32) -> (i32, i32) {
    %c0_i32 = arith.constant 0 : i32
    %c0_i32_0 = arith.constant 0 : i32
    %c0_i32_1 = arith.constant 0 : i32
    return %c0_i32, %c0_i32_0 : i32, i32
  }
  func.func @transform_12(%arg0: i32) -> (i32, i32) {
    %c0_i32 = arith.constant 0 : i32
    %c0_i32_0 = arith.constant 0 : i32
    %c0_i32_1 = arith.constant 0 : i32
    return %c0_i32, %c0_i32_0 : i32, i32
  }
  func.func @transform_13(%arg0: i32) -> (i32, i32) {
    %c0_i32 = arith.constant 0 : i32
    %c0_i32_0 = arith.constant 0 : i32
    return %arg0, %c0_i32 : i32, i32
  }
}

module attributes {stable_mosaic.version = 11 : i64} {
  func.func @_fused_mlp_kernel(%arg0: i32, %arg1: memref<128x256xf32, #tpu.memory_space<vmem>>, %arg2: memref<256x64xf32, #tpu.memory_space<vmem>>, %arg3: memref<64x32xf32, #tpu.memory_space<vmem>>, %arg4: memref<32x8xf32, #tpu.memory_space<vmem>>, %arg5: memref<8x32xf32, #tpu.memory_space<vmem>>, %arg6: memref<32x64xf32, #tpu.memory_space<vmem>>, %arg7: memref<64x256xf32, #tpu.memory_space<vmem>>, %arg8: memref<1x64xf32, #tpu.memory_space<vmem>>, %arg9: memref<1x32xf32, #tpu.memory_space<vmem>>, %arg10: memref<1x8xf32, #tpu.memory_space<vmem>>, %arg11: memref<1x32xf32, #tpu.memory_space<vmem>>, %arg12: memref<1x64xf32, #tpu.memory_space<vmem>>, %arg13: memref<1x256xf32, #tpu.memory_space<vmem>>, %arg14: memref<128x256xf32, #tpu.memory_space<vmem>>) attributes {dimension_semantics = [#tpu.dimension_semantics<parallel>], iteration_bounds = array<i64: 2>, scalar_prefetch = 0 : i64, scratch_operands = 0 : i64, tpu.core_type = #tpu.core_type<tc>, window_params = [{transform_indices = @transform_0, window_bounds = array<i64: 128, 256>}, {pipeline_mode = #tpu.pipeline_mode<synchronous>, transform_indices = @transform_1, window_bounds = array<i64: 256, 64>}, {pipeline_mode = #tpu.pipeline_mode<synchronous>, transform_indices = @transform_2, window_bounds = array<i64: 64, 32>}, {pipeline_mode = #tpu.pipeline_mode<synchronous>, transform_indices = @transform_3, window_bounds = array<i64: 32, 8>}, {pipeline_mode = #tpu.pipeline_mode<synchronous>, transform_indices = @transform_4, window_bounds = array<i64: 8, 32>}, {pipeline_mode = #tpu.pipeline_mode<synchronous>, transform_indices = @transform_5, window_bounds = array<i64: 32, 64>}, {pipeline_mode = #tpu.pipeline_mode<synchronous>, transform_indices = @transform_6, window_bounds = array<i64: 64, 256>}, {pipeline_mode = #tpu.pipeline_mode<synchronous>, transform_indices = @transform_7, window_bounds = array<i64: 1, 64>}, {pipeline_mode = #tpu.pipeline_mode<synchronous>, transform_indices = @transform_8, window_bounds = array<i64: 1, 32>}, {pipeline_mode = #tpu.pipeline_mode<synchronous>, transform_indices = @transform_9, window_bounds = array<i64: 1, 8>}, {pipeline_mode = #tpu.pipeline_mode<synchronous>, transform_indices = @transform_10, window_bounds = array<i64: 1, 32>}, {pipeline_mode = #tpu.pipeline_mode<synchronous>, transform_indices = @transform_11, window_bounds = array<i64: 1, 64>}, {pipeline_mode = #tpu.pipeline_mode<synchronous>, transform_indices = @transform_12, window_bounds = array<i64: 1, 256>}, {transform_indices = @transform_13, window_bounds = array<i64: 128, 256>}]} {
    %c0 = arith.constant 0 : index
    %c0_0 = arith.constant 0 : index
    %0 = vector.load %arg1[%c0, %c0_0] : memref<128x256xf32, #tpu.memory_space<vmem>>, vector<128x256xf32>
    %c0_1 = arith.constant 0 : index
    %c0_2 = arith.constant 0 : index
    %1 = vector.load %arg2[%c0_1, %c0_2] : memref<256x64xf32, #tpu.memory_space<vmem>>, vector<256x64xf32>
    %cst = arith.constant dense<0.000000e+00> : vector<128x64xf32>
    %2 = tpu.matmul %0, %1, %cst {dimension_numbers = #tpu.dot_dimension_numbers<[1], [0], [0], [1], [0, 0, 1, 1], [], []>} : vector<128x256xf32>, vector<256x64xf32>, vector<128x64xf32> -> vector<128x64xf32>
    %c0_3 = arith.constant 0 : index
    %c0_4 = arith.constant 0 : index
    %3 = vector.load %arg8[%c0_3, %c0_4] : memref<1x64xf32, #tpu.memory_space<vmem>>, vector<1x64xf32>
    %4 = vector.broadcast %3 : vector<1x64xf32> to vector<128x64xf32>
    %5 = arith.addf %2, %4 : vector<128x64xf32>
    %cst_5 = arith.constant 2.000000e+01 : f32
    %6 = vector.broadcast %cst_5 : f32 to vector<128x64xf32>
    %7 = arith.cmpf ogt, %5, %6 : vector<128x64xf32>
    %cst_6 = arith.constant 2.000000e+01 : f32
    %8 = vector.broadcast %cst_6 : f32 to vector<128x64xf32>
    %9 = arith.minimumf %5, %8 : vector<128x64xf32>
    %10 = math.exp %9 : vector<128x64xf32>
    %11 = math.log1p %10 : vector<128x64xf32>
    %12 = arith.select %7, %5, %11 : vector<128x64xi1>, vector<128x64xf32>
    %c0_7 = arith.constant 0 : index
    %c0_8 = arith.constant 0 : index
    %13 = vector.load %arg3[%c0_7, %c0_8] : memref<64x32xf32, #tpu.memory_space<vmem>>, vector<64x32xf32>
    %cst_9 = arith.constant dense<0.000000e+00> : vector<128x32xf32>
    %14 = tpu.matmul %12, %13, %cst_9 {dimension_numbers = #tpu.dot_dimension_numbers<[1], [0], [0], [1], [0, 0, 1, 1], [], []>} : vector<128x64xf32>, vector<64x32xf32>, vector<128x32xf32> -> vector<128x32xf32>
    %c0_10 = arith.constant 0 : index
    %c0_11 = arith.constant 0 : index
    %15 = vector.load %arg9[%c0_10, %c0_11] : memref<1x32xf32, #tpu.memory_space<vmem>>, vector<1x32xf32>
    %16 = vector.broadcast %15 : vector<1x32xf32> to vector<128x32xf32>
    %17 = arith.addf %14, %16 : vector<128x32xf32>
    %cst_12 = arith.constant 2.000000e+01 : f32
    %18 = vector.broadcast %cst_12 : f32 to vector<128x32xf32>
    %19 = arith.cmpf ogt, %17, %18 : vector<128x32xf32>
    %cst_13 = arith.constant 2.000000e+01 : f32
    %20 = vector.broadcast %cst_13 : f32 to vector<128x32xf32>
    %21 = arith.minimumf %17, %20 : vector<128x32xf32>
    %22 = math.exp %21 : vector<128x32xf32>
    %23 = math.log1p %22 : vector<128x32xf32>
    %24 = arith.select %19, %17, %23 : vector<128x32xi1>, vector<128x32xf32>
    %c0_14 = arith.constant 0 : index
    %c0_15 = arith.constant 0 : index
    %25 = vector.load %arg4[%c0_14, %c0_15] : memref<32x8xf32, #tpu.memory_space<vmem>>, vector<32x8xf32>
    %cst_16 = arith.constant dense<0.000000e+00> : vector<128x8xf32>
    %26 = tpu.matmul %24, %25, %cst_16 {dimension_numbers = #tpu.dot_dimension_numbers<[1], [0], [0], [1], [0, 0, 1, 1], [], []>} : vector<128x32xf32>, vector<32x8xf32>, vector<128x8xf32> -> vector<128x8xf32>
    %c0_17 = arith.constant 0 : index
    %c0_18 = arith.constant 0 : index
    %27 = vector.load %arg10[%c0_17, %c0_18] : memref<1x8xf32, #tpu.memory_space<vmem>>, vector<1x8xf32>
    %28 = vector.broadcast %27 : vector<1x8xf32> to vector<128x8xf32>
    %29 = arith.addf %26, %28 : vector<128x8xf32>
    %c0_19 = arith.constant 0 : index
    %c0_20 = arith.constant 0 : index
    %30 = vector.load %arg5[%c0_19, %c0_20] : memref<8x32xf32, #tpu.memory_space<vmem>>, vector<8x32xf32>
    %cst_21 = arith.constant dense<0.000000e+00> : vector<128x32xf32>
    %31 = tpu.matmul %29, %30, %cst_21 {dimension_numbers = #tpu.dot_dimension_numbers<[1], [0], [0], [1], [0, 0, 1, 1], [], []>} : vector<128x8xf32>, vector<8x32xf32>, vector<128x32xf32> -> vector<128x32xf32>
    %c0_22 = arith.constant 0 : index
    %c0_23 = arith.constant 0 : index
    %32 = vector.load %arg11[%c0_22, %c0_23] : memref<1x32xf32, #tpu.memory_space<vmem>>, vector<1x32xf32>
    %33 = vector.broadcast %32 : vector<1x32xf32> to vector<128x32xf32>
    %34 = arith.addf %31, %33 : vector<128x32xf32>
    %cst_24 = arith.constant 2.000000e+01 : f32
    %35 = vector.broadcast %cst_24 : f32 to vector<128x32xf32>
    %36 = arith.cmpf ogt, %34, %35 : vector<128x32xf32>
    %cst_25 = arith.constant 2.000000e+01 : f32
    %37 = vector.broadcast %cst_25 : f32 to vector<128x32xf32>
    %38 = arith.minimumf %34, %37 : vector<128x32xf32>
    %39 = math.exp %38 : vector<128x32xf32>
    %40 = math.log1p %39 : vector<128x32xf32>
    %41 = arith.select %36, %34, %40 : vector<128x32xi1>, vector<128x32xf32>
    %c0_26 = arith.constant 0 : index
    %c0_27 = arith.constant 0 : index
    %42 = vector.load %arg6[%c0_26, %c0_27] : memref<32x64xf32, #tpu.memory_space<vmem>>, vector<32x64xf32>
    %cst_28 = arith.constant dense<0.000000e+00> : vector<128x64xf32>
    %43 = tpu.matmul %41, %42, %cst_28 {dimension_numbers = #tpu.dot_dimension_numbers<[1], [0], [0], [1], [0, 0, 1, 1], [], []>} : vector<128x32xf32>, vector<32x64xf32>, vector<128x64xf32> -> vector<128x64xf32>
    %c0_29 = arith.constant 0 : index
    %c0_30 = arith.constant 0 : index
    %44 = vector.load %arg12[%c0_29, %c0_30] : memref<1x64xf32, #tpu.memory_space<vmem>>, vector<1x64xf32>
    %45 = vector.broadcast %44 : vector<1x64xf32> to vector<128x64xf32>
    %46 = arith.addf %43, %45 : vector<128x64xf32>
    %cst_31 = arith.constant 2.000000e+01 : f32
    %47 = vector.broadcast %cst_31 : f32 to vector<128x64xf32>
    %48 = arith.cmpf ogt, %46, %47 : vector<128x64xf32>
    %cst_32 = arith.constant 2.000000e+01 : f32
    %49 = vector.broadcast %cst_32 : f32 to vector<128x64xf32>
    %50 = arith.minimumf %46, %49 : vector<128x64xf32>
    %51 = math.exp %50 : vector<128x64xf32>
    %52 = math.log1p %51 : vector<128x64xf32>
    %53 = arith.select %48, %46, %52 : vector<128x64xi1>, vector<128x64xf32>
    %c0_33 = arith.constant 0 : index
    %c0_34 = arith.constant 0 : index
    %54 = vector.load %arg7[%c0_33, %c0_34] : memref<64x256xf32, #tpu.memory_space<vmem>>, vector<64x256xf32>
    %cst_35 = arith.constant dense<0.000000e+00> : vector<128x256xf32>
    %55 = tpu.matmul %53, %54, %cst_35 {dimension_numbers = #tpu.dot_dimension_numbers<[1], [0], [0], [1], [0, 0, 1, 1], [], []>} : vector<128x64xf32>, vector<64x256xf32>, vector<128x256xf32> -> vector<128x256xf32>
    %c0_36 = arith.constant 0 : index
    %c0_37 = arith.constant 0 : index
    %56 = vector.load %arg13[%c0_36, %c0_37] : memref<1x256xf32, #tpu.memory_space<vmem>>, vector<1x256xf32>
    %57 = vector.broadcast %56 : vector<1x256xf32> to vector<128x256xf32>
    %58 = arith.addf %55, %57 : vector<128x256xf32>
    %c0_38 = arith.constant 0 : index
    %c0_39 = arith.constant 0 : index
    %59 = vector.load %arg14[%c0_38, %c0_39] : memref<128x256xf32, #tpu.memory_space<vmem>>, vector<128x256xf32>
    tpu.vector_store %arg14[%c0_38, %c0_39], %58 {strides = array<i32>} : memref<128x256xf32, #tpu.memory_space<vmem>>, vector<128x256xf32>,
    return
  }
  func.func @transform_0(%arg0: i32) -> (i32, i32) {
    %c0_i32 = arith.constant 0 : i32
    %c0_i32_0 = arith.constant 0 : i32
    return %arg0, %c0_i32 : i32, i32
  }
  func.func @transform_1(%arg0: i32) -> (i32, i32) {
    %c0_i32 = arith.constant 0 : i32
    %c0_i32_0 = arith.constant 0 : i32
    %c0_i32_1 = arith.constant 0 : i32
    return %c0_i32, %c0_i32_0 : i32, i32
  }
  func.func @transform_2(%arg0: i32) -> (i32, i32) {
    %c0_i32 = arith.constant 0 : i32
    %c0_i32_0 = arith.constant 0 : i32
    %c0_i32_1 = arith.constant 0 : i32
    return %c0_i32, %c0_i32_0 : i32, i32
  }
  func.func @transform_3(%arg0: i32) -> (i32, i32) {
    %c0_i32 = arith.constant 0 : i32
    %c0_i32_0 = arith.constant 0 : i32
    %c0_i32_1 = arith.constant 0 : i32
    return %c0_i32, %c0_i32_0 : i32, i32
  }
  func.func @transform_4(%arg0: i32) -> (i32, i32) {
    %c0_i32 = arith.constant 0 : i32
    %c0_i32_0 = arith.constant 0 : i32
    %c0_i32_1 = arith.constant 0 : i32
    return %c0_i32, %c0_i32_0 : i32, i32
  }
  func.func @transform_5(%arg0: i32) -> (i32, i32) {
    %c0_i32 = arith.constant 0 : i32
    %c0_i32_0 = arith.constant 0 : i32
    %c0_i32_1 = arith.constant 0 : i32
    return %c0_i32, %c0_i32_0 : i32, i32
  }
  func.func @transform_6(%arg0: i32) -> (i32, i32) {
    %c0_i32 = arith.constant 0 : i32
    %c0_i32_0 = arith.constant 0 : i32
    %c0_i32_1 = arith.constant 0 : i32
    return %c0_i32, %c0_i32_0 : i32, i32
  }
  func.func @transform_7(%arg0: i32) -> (i32, i32) {
    %c0_i32 = arith.constant 0 : i32
    %c0_i32_0 = arith.constant 0 : i32
    %c0_i32_1 = arith.constant 0 : i32
    return %c0_i32, %c0_i32_0 : i32, i32
  }
  func.func @transform_8(%arg0: i32) -> (i32, i32) {
    %c0_i32 = arith.constant 0 : i32
    %c0_i32_0 = arith.constant 0 : i32
    %c0_i32_1 = arith.constant 0 : i32
    return %c0_i32, %c0_i32_0 : i32, i32
  }
  func.func @transform_9(%arg0: i32) -> (i32, i32) {
    %c0_i32 = arith.constant 0 : i32
    %c0_i32_0 = arith.constant 0 : i32
    %c0_i32_1 = arith.constant 0 : i32
    return %c0_i32, %c0_i32_0 : i32, i32
  }
  func.func @transform_10(%arg0: i32) -> (i32, i32) {
    %c0_i32 = arith.constant 0 : i32
    %c0_i32_0 = arith.constant 0 : i32
    %c0_i32_1 = arith.constant 0 : i32
    return %c0_i32, %c0_i32_0 : i32, i32
  }
  func.func @transform_11(%arg0: i32) -> (i32, i32) {
    %c0_i32 = arith.constant 0 : i32
    %c0_i32_0 = arith.constant 0 : i32
    %c0_i32_1 = arith.constant 0 : i32
    return %c0_i32, %c0_i32_0 : i32, i32
  }
  func.func @transform_12(%arg0: i32) -> (i32, i32) {
    %c0_i32 = arith.constant 0 : i32
    %c0_i32_0 = arith.constant 0 : i32
    %c0_i32_1 = arith.constant 0 : i32
    return %c0_i32, %c0_i32_0 : i32, i32
  }
  func.func @transform_13(%arg0: i32) -> (i32, i32) {
    %c0_i32 = arith.constant 0 : i32
    %c0_i32_0 = arith.constant 0 : i32
    return %arg0, %c0_i32 : i32, i32
  }
}

</mosaic_0001>

<llo_original>
// kernel: tpu_custom_call.1
$region0: #{tpu_custom_call.1}
  #allocation0 [shape = 'u32[]', space=smem, size = 0x4, offset = 0x4, fixed_abs, tag = 'smem constant byte address 0x4 - core index']
  #allocation1 [shape = 'u32[144,128]{1,0:T(1,128)}', space=vmem, size = 0x12000, scoped, tag = 'internal scratch']
  %s0 = inlined_call_operand.vmem [shape: f32[256,256], index: 0, kind: input, shape index: {}]
  %s1 = inlined_call_operand.vmem [shape: f32[256,64], index: 1, kind: input, shape index: {}]
  %s2 = inlined_call_operand.vmem [shape: f32[64,32], index: 2, kind: input, shape index: {}]
  %s3 = inlined_call_operand.vmem [shape: f32[32,8], index: 3, kind: input, shape index: {}]
  %s4 = inlined_call_operand.vmem [shape: f32[8,32], index: 4, kind: input, shape index: {}]
  %s5 = inlined_call_operand.hbm [shape: f32[32,64], index: 5, kind: input, shape index: {}]
  %s6 = inlined_call_operand.hbm [shape: f32[64,256], index: 6, kind: input, shape index: {}]
  %s7 = inlined_call_operand.vmem [shape: f32[1,64], index: 7, kind: input, shape index: {}]
  %s8 = inlined_call_operand.vmem [shape: f32[1,32], index: 8, kind: input, shape index: {}]
  %s9 = inlined_call_operand.vmem [shape: f32[1,8], index: 9, kind: input, shape index: {}]
  %s10 = inlined_call_operand.vmem [shape: f32[1,32], index: 10, kind: input, shape index: {}]
  %s11 = inlined_call_operand.vmem [shape: f32[1,64], index: 11, kind: input, shape index: {}]
  %s12 = inlined_call_operand.vmem [shape: f32[1,256], index: 12, kind: input, shape index: {}]
  %s13 = inlined_call_operand.hbm [shape: f32[256,256], index: 13, kind: output, shape index: {}]
  %s14 = sld [smem:[#allocation0]]
  $region93: #{tpu_custom_call.1} parent=0
    _
  %s16 = ssub.s32 1, %s14
  %s17 = scalar_select 0, %s16, %s14
  $region1: #{tpu_custom_call.1} parent=0
    #allocation2 [shape = 'u8[16384]{0}', space=vmem, size = 0x4000, scoped, tag = 'input window, operand 5, single buffered']
    #allocation3 [shape = 's32[2]{0}', space=sflag, size = 0x8, scoped, tag = 'scoped memory for tpu_custom_call.1']
    #allocation4 [shape = 's32[2]{0}', space=sflag, size = 0x8, scoped, tag = 'scoped memory for tpu_custom_call.1']
    #allocation5 [shape = 'u8[65536]{0}', space=vmem, size = 0x10000, scoped, tag = 'input window, operand 6, single buffered']
    #allocation6 [shape = 's32[1]{0}', space=sflag, size = 0x4, scoped, tag = 'scoped memory for tpu_custom_call.1']
    #allocation7 [shape = 'u8[262144]{0}', space=vmem, size = 0x40000, scoped, tag = 'output window, operand 0']
    %18 = vsyncpa [#allocation3], 0
    %19 = vsyncpa [#allocation6], 0
    %20 = vsyncpa [#allocation4], 0
    %s21 = scalar_lea.sflag [#allocation4], 1
    %22 = vsyncpa %s21, 0
    loop: start=0, step=1, limit=4
    $region2: #{tpu_custom_call.1} parent=1 // loop_pre_header
      _
    $region3: #{tpu_custom_call.1} parent=1 // loop_header
      %s24 = sphi 0, %s28
      %p25 = scmp.ge.s32.totalorder %s24, 4
      %s34 = sphi 0, %s36
      %s37 = sphi 0, %s34
      %s38 = sphi 0, %s37
      %s54 = sphi 0, %s38
      %s58 = sphi 0, %s58
      %s60 = sphi 0, %s58
      %s61 = sphi 0, %s60
      %s75 = sphi 0, %s61
      %s79 = sphi 0, %s79
      %s81 = sphi 0, %s79
      %s82 = sphi 0, %s81
      %s96 = sphi 0, %s82
      %s100 = sphi 0, %s100
      %s102 = sphi 0, %s100
      %s103 = sphi 0, %s102
      %s117 = sphi 0, %s103
      %s121 = sphi 0, %s121
      %s123 = sphi 0, %s121
      %s124 = sphi 0, %s123
      %s138 = sphi 0, %s124
      %s142 = sphi 0, %s142
      %s144 = sphi 0, %s142
      %s145 = sphi 0, %s144
      %s159 = sphi 0, %s145
      %s163 = sphi 0, %s163
      %s165 = sphi 0, %s163
      %s166 = sphi 0, %s165
      %s180 = sphi 0, %s166
      %s184 = sphi 0, %s184
      %s186 = sphi 0, %s184
      %s187 = sphi 0, %s186
      %s201 = sphi 0, %s187
      %s205 = sphi 0, %s205
      %s207 = sphi 0, %s205
      %s208 = sphi 0, %s207
      %s222 = sphi 0, %s208
      %s226 = sphi 0, %s226
      %s228 = sphi 0, %s226
      %s229 = sphi 0, %s228
      %s243 = sphi 0, %s229
      %s247 = sphi 0, %s247
      %s249 = sphi 0, %s247
      %s250 = sphi 0, %s249
      %s264 = sphi 0, %s250
      %s268 = sphi 0, %s268
      %s270 = sphi 0, %s268
      %s271 = sphi 0, %s270
      %s285 = sphi 0, %s271
      %s289 = sphi 0, %s289
      %s291 = sphi 0, %s289
      %s292 = sphi 0, %s291
      %s306 = sphi 0, %s292
      %s312 = sphi 0, %s314
      %s315 = sphi 0, %s312
      %s316 = sphi 0, %s315
      %s332 = sphi 0, %s316
    $region4: #{tpu_custom_call.1} parent=1 // loop_header_branch
      %27 = sbr.rel (%p25) target = $region8
    $region5: #{tpu_custom_call.1} parent=1 // loop_body
      %s29 = ssub.s32 %s24, 1
      %s30 = ssub.s32 %s24, 2
      %s31 = sadd.s32 %s24, 1
      %s32 = ssub.s32 %s24, %s31
      %p33 = scmp.eq.s32.totalorder %s32, 0
      %s35 = sadd.s32 %s34, 1
      %s36 = scalar_select %p33, %s34, %s35
      %p39 = pneg %p33
      %p40 = scmp.eq.s32.totalorder %s24, 1
      %p41 = por %p39, %p40
      %p42 = scmp.ne.s32.totalorder %s34, %s37
      %p43 = scmp.eq.s32.totalorder %s24, 0
      %p44 = por %p42, %p43
      %p45 = scmp.ne.s32.totalorder %s34, %s37
      %p46 = scmp.eq.s32.totalorder %s29, 1
      %p47 = por %p45, %p46
      %p48 = scmp.ne.s32.totalorder %s37, %s38
      %p49 = scmp.eq.s32.totalorder %s29, 0
      %p50 = por %p48, %p49
      %p51 = scmp.ne.s32.totalorder %s37, %s38
      %p52 = scmp.eq.s32.totalorder %s30, 1
      %p53 = por %p51, %p52
      %p55 = scmp.ne.s32.totalorder %s38, %s54
      %p56 = scmp.eq.s32.totalorder %s30, 0
      %p57 = por %p55, %p56
      %s59 = sadd.s32 %s58, 1
      %p62 = scmp.eq.s32.totalorder %s24, 1
      %p63 = scmp.ne.s32.totalorder %s58, %s60
      %p64 = scmp.eq.s32.totalorder %s24, 0
      %p65 = por %p63, %p64
      %p66 = scmp.ne.s32.totalorder %s58, %s60
      %p67 = scmp.eq.s32.totalorder %s29, 1
      %p68 = por %p66, %p67
      %p69 = scmp.ne.s32.totalorder %s60, %s61
      %p70 = scmp.eq.s32.totalorder %s29, 0
      %p71 = por %p69, %p70
      %p72 = scmp.ne.s32.totalorder %s60, %s61
      %p73 = scmp.eq.s32.totalorder %s30, 1
      %p74 = por %p72, %p73
      %p76 = scmp.ne.s32.totalorder %s61, %s75
      %p77 = scmp.eq.s32.totalorder %s30, 0
      %p78 = por %p76, %p77
      %s80 = sadd.s32 %s79, 1
      %p83 = scmp.eq.s32.totalorder %s24, 1
      %p84 = scmp.ne.s32.totalorder %s79, %s81
      %p85 = scmp.eq.s32.totalorder %s24, 0
      %p86 = por %p84, %p85
      %p87 = scmp.ne.s32.totalorder %s79, %s81
      %p88 = scmp.eq.s32.totalorder %s29, 1
      %p89 = por %p87, %p88
      %p90 = scmp.ne.s32.totalorder %s81, %s82
      %p91 = scmp.eq.s32.totalorder %s29, 0
      %p92 = por %p90, %p91
      %p93 = scmp.ne.s32.totalorder %s81, %s82
      %p94 = scmp.eq.s32.totalorder %s30, 1
      %p95 = por %p93, %p94
      %p97 = scmp.ne.s32.totalorder %s82, %s96
      %p98 = scmp.eq.s32.totalorder %s30, 0
      %p99 = por %p97, %p98
      %s101 = sadd.s32 %s100, 1
      %p104 = scmp.eq.s32.totalorder %s24, 1
      %p105 = scmp.ne.s32.totalorder %s100, %s102
      %p106 = scmp.eq.s32.totalorder %s24, 0
      %p107 = por %p105, %p106
      %p108 = scmp.ne.s32.totalorder %s100, %s102
      %p109 = scmp.eq.s32.totalorder %s29, 1
      %p110 = por %p108, %p109
      %p111 = scmp.ne.s32.totalorder %s102, %s103
      %p112 = scmp.eq.s32.totalorder %s29, 0
      %p113 = por %p111, %p112
      %p114 = scmp.ne.s32.totalorder %s102, %s103
      %p115 = scmp.eq.s32.totalorder %s30, 1
      %p116 = por %p114, %p115
      %p118 = scmp.ne.s32.totalorder %s103, %s117
      %p119 = scmp.eq.s32.totalorder %s30, 0
      %p120 = por %p118, %p119
      %s122 = sadd.s32 %s121, 1
      %p125 = scmp.eq.s32.totalorder %s24, 1
      %p126 = scmp.ne.s32.totalorder %s121, %s123
      %p127 = scmp.eq.s32.totalorder %s24, 0
      %p128 = por %p126, %p127
      %p129 = scmp.ne.s32.totalorder %s121, %s123
      %p130 = scmp.eq.s32.totalorder %s29, 1
      %p131 = por %p129, %p130
      %p132 = scmp.ne.s32.totalorder %s123, %s124
      %p133 = scmp.eq.s32.totalorder %s29, 0
      %p134 = por %p132, %p133
      %p135 = scmp.ne.s32.totalorder %s123, %s124
      %p136 = scmp.eq.s32.totalorder %s30, 1
      %p137 = por %p135, %p136
      %p139 = scmp.ne.s32.totalorder %s124, %s138
      %p140 = scmp.eq.s32.totalorder %s30, 0
      %p141 = por %p139, %p140
      %s143 = sadd.s32 %s142, 1
      %p146 = scmp.eq.s32.totalorder %s24, 1
      %p147 = scmp.ne.s32.totalorder %s142, %s144
      %p148 = scmp.eq.s32.totalorder %s24, 0
      %p149 = por %p147, %p148
      %p150 = scmp.ne.s32.totalorder %s142, %s144
      %p151 = scmp.eq.s32.totalorder %s29, 1
      %p152 = por %p150, %p151
      %p153 = scmp.ne.s32.totalorder %s144, %s145
      %p154 = scmp.eq.s32.totalorder %s29, 0
      %p155 = por %p153, %p154
      %p156 = scmp.ne.s32.totalorder %s144, %s145
      %p157 = scmp.eq.s32.totalorder %s30, 1
      %p158 = por %p156, %p157
      %p160 = scmp.ne.s32.totalorder %s145, %s159
      %p161 = scmp.eq.s32.totalorder %s30, 0
      %p162 = por %p160, %p161
      %s164 = sadd.s32 %s163, 1
      %p167 = scmp.eq.s32.totalorder %s24, 1
      %p168 = scmp.ne.s32.totalorder %s163, %s165
      %p169 = scmp.eq.s32.totalorder %s24, 0
      %p170 = por %p168, %p169
      %p171 = scmp.ne.s32.totalorder %s163, %s165
      %p172 = scmp.eq.s32.totalorder %s29, 1
      %p173 = por %p171, %p172
      %p174 = scmp.ne.s32.totalorder %s165, %s166
      %p175 = scmp.eq.s32.totalorder %s29, 0
      %p176 = por %p174, %p175
      %p177 = scmp.ne.s32.totalorder %s165, %s166
      %p178 = scmp.eq.s32.totalorder %s30, 1
      %p179 = por %p177, %p178
      %p181 = scmp.ne.s32.totalorder %s166, %s180
      %p182 = scmp.eq.s32.totalorder %s30, 0
      %p183 = por %p181, %p182
      %s185 = sadd.s32 %s184, 1
      %p188 = scmp.eq.s32.totalorder %s24, 1
      %p189 = scmp.ne.s32.totalorder %s184, %s186
      %p190 = scmp.eq.s32.totalorder %s24, 0
      %p191 = por %p189, %p190
      %p192 = scmp.ne.s32.totalorder %s184, %s186
      %p193 = scmp.eq.s32.totalorder %s29, 1
      %p194 = por %p192, %p193
      %p195 = scmp.ne.s32.totalorder %s186, %s187
      %p196 = scmp.eq.s32.totalorder %s29, 0
      %p197 = por %p195, %p196
      %p198 = scmp.ne.s32.totalorder %s186, %s187
      %p199 = scmp.eq.s32.totalorder %s30, 1
      %p200 = por %p198, %p199
      %p202 = scmp.ne.s32.totalorder %s187, %s201
      %p203 = scmp.eq.s32.totalorder %s30, 0
      %p204 = por %p202, %p203
      %s206 = sadd.s32 %s205, 1
      %p209 = scmp.eq.s32.totalorder %s24, 1
      %p210 = scmp.ne.s32.totalorder %s205, %s207
      %p211 = scmp.eq.s32.totalorder %s24, 0
      %p212 = por %p210, %p211
      %p213 = scmp.ne.s32.totalorder %s205, %s207
      %p214 = scmp.eq.s32.totalorder %s29, 1
      %p215 = por %p213, %p214
      %p216 = scmp.ne.s32.totalorder %s207, %s208
      %p217 = scmp.eq.s32.totalorder %s29, 0
      %p218 = por %p216, %p217
      %p219 = scmp.ne.s32.totalorder %s207, %s208
      %p220 = scmp.eq.s32.totalorder %s30, 1
      %p221 = por %p219, %p220
      %p223 = scmp.ne.s32.totalorder %s208, %s222
      %p224 = scmp.eq.s32.totalorder %s30, 0
      %p225 = por %p223, %p224
      %s227 = sadd.s32 %s226, 1
      %p230 = scmp.eq.s32.totalorder %s24, 1
      %p231 = scmp.ne.s32.totalorder %s226, %s228
      %p232 = scmp.eq.s32.totalorder %s24, 0
      %p233 = por %p231, %p232
      %p234 = scmp.ne.s32.totalorder %s226, %s228
      %p235 = scmp.eq.s32.totalorder %s29, 1
      %p236 = por %p234, %p235
      %p237 = scmp.ne.s32.totalorder %s228, %s229
      %p238 = scmp.eq.s32.totalorder %s29, 0
      %p239 = por %p237, %p238
      %p240 = scmp.ne.s32.totalorder %s228, %s229
      %p241 = scmp.eq.s32.totalorder %s30, 1
      %p242 = por %p240, %p241
      %p244 = scmp.ne.s32.totalorder %s229, %s243
      %p245 = scmp.eq.s32.totalorder %s30, 0
      %p246 = por %p244, %p245
      %s248 = sadd.s32 %s247, 1
      %p251 = scmp.eq.s32.totalorder %s24, 1
      %p252 = scmp.ne.s32.totalorder %s247, %s249
      %p253 = scmp.eq.s32.totalorder %s24, 0
      %p254 = por %p252, %p253
      %p255 = scmp.ne.s32.totalorder %s247, %s249
      %p256 = scmp.eq.s32.totalorder %s29, 1
      %p257 = por %p255, %p256
      %p258 = scmp.ne.s32.totalorder %s249, %s250
      %p259 = scmp.eq.s32.totalorder %s29, 0
      %p260 = por %p258, %p259
      %p261 = scmp.ne.s32.totalorder %s249, %s250
      %p262 = scmp.eq.s32.totalorder %s30, 1
      %p263 = por %p261, %p262
      %p265 = scmp.ne.s32.totalorder %s250, %s264
      %p266 = scmp.eq.s32.totalorder %s30, 0
      %p267 = por %p265, %p266
      %s269 = sadd.s32 %s268, 1
      %p272 = scmp.eq.s32.totalorder %s24, 1
      %p273 = scmp.ne.s32.totalorder %s268, %s270
      %p274 = scmp.eq.s32.totalorder %s24, 0
      %p275 = por %p273, %p274
      %p276 = scmp.ne.s32.totalorder %s268, %s270
      %p277 = scmp.eq.s32.totalorder %s29, 1
      %p278 = por %p276, %p277
      %p279 = scmp.ne.s32.totalorder %s270, %s271
      %p280 = scmp.eq.s32.totalorder %s29, 0
      %p281 = por %p279, %p280
      %p282 = scmp.ne.s32.totalorder %s270, %s271
      %p283 = scmp.eq.s32.totalorder %s30, 1
      %p284 = por %p282, %p283
      %p286 = scmp.ne.s32.totalorder %s271, %s285
      %p287 = scmp.eq.s32.totalorder %s30, 0
      %p288 = por %p286, %p287
      %s290 = sadd.s32 %s289, 1
      %p293 = scmp.eq.s32.totalorder %s24, 1
      %p294 = scmp.ne.s32.totalorder %s289, %s291
      %p295 = scmp.eq.s32.totalorder %s24, 0
      %p296 = por %p294, %p295
      %p297 = scmp.ne.s32.totalorder %s289, %s291
      %p298 = scmp.eq.s32.totalorder %s29, 1
      %p299 = por %p297, %p298
      %p300 = scmp.ne.s32.totalorder %s291, %s292
      %p301 = scmp.eq.s32.totalorder %s29, 0
      %p302 = por %p300, %p301
      %p303 = scmp.ne.s32.totalorder %s291, %s292
      %p304 = scmp.eq.s32.totalorder %s30, 1
      %p305 = por %p303, %p304
      %p307 = scmp.ne.s32.totalorder %s292, %s306
      %p308 = scmp.eq.s32.totalorder %s30, 0
      %p309 = por %p307, %p308
      %s310 = ssub.s32 %s24, %s31
      %p311 = scmp.eq.s32.totalorder %s310, 0
      %s313 = sadd.s32 %s312, 1
      %s314 = scalar_select %p311, %s312, %s313
      %p317 = pneg %p311
      %p318 = scmp.eq.s32.totalorder %s24, 1
      %p319 = por %p317, %p318
      %p320 = scmp.ne.s32.totalorder %s312, %s315
      %p321 = scmp.eq.s32.totalorder %s24, 0
      %p322 = por %p320, %p321
      %p323 = scmp.ne.s32.totalorder %s312, %s315
      %p324 = scmp.eq.s32.totalorder %s29, 1
      %p325 = por %p323, %p324
      %p326 = scmp.ne.s32.totalorder %s315, %s316
      %p327 = scmp.eq.s32.totalorder %s29, 0
      %p328 = por %p326, %p327
      %p329 = scmp.ne.s32.totalorder %s315, %s316
      %p330 = scmp.eq.s32.totalorder %s30, 1
      %p331 = por %p329, %p330
      %p333 = scmp.ne.s32.totalorder %s316, %s332
      %p334 = scmp.eq.s32.totalorder %s30, 0
      %p335 = por %p333, %p334
      %p336 = scmp.le.s32.totalorder 1, %s24
      %p337 = scmp.lt.s32.totalorder %s24, 3
      %p338 = pnand %p336, %p337
      %p339 = pneg %p338
      // Predicated region
      $region9: #{tpu_custom_call.1} parent=5 // pred_check
        _
      $region10: #{tpu_custom_call.1} parent=5 // pred_check_branch
        %341 = sbr.rel (%p338) target = $region12
      $region11: #{tpu_custom_call.1} parent=5 // pred_region
        %s342 = ssub.s32 %s24, 1
        // Predicated region
        $region13: #{tpu_custom_call.1} parent=11 // pred_check
          %p343 = pneg %p71
        $region14: #{tpu_custom_call.1} parent=11 // pred_check_branch
          %345 = sbr.rel (%p343) target = $region16
        $region15: #{tpu_custom_call.1} parent=11 // pred_region
          _
        $region16: #{tpu_custom_call.1} parent=11 // pred_fallthru
          _
        // Predicated region
        $region17: #{tpu_custom_call.1} parent=11 // pred_check
          %p346 = pneg %p92
        $region18: #{tpu_custom_call.1} parent=11 // pred_check_branch
          %348 = sbr.rel (%p346) target = $region20
        $region19: #{tpu_custom_call.1} parent=11 // pred_region
          _
        $region20: #{tpu_custom_call.1} parent=11 // pred_fallthru
          _
        // Predicated region
        $region21: #{tpu_custom_call.1} parent=11 // pred_check
          %p349 = pneg %p113
        $region22: #{tpu_custom_call.1} parent=11 // pred_check_branch
          %351 = sbr.rel (%p349) target = $region24
        $region23: #{tpu_custom_call.1} parent=11 // pred_region
          _
        $region24: #{tpu_custom_call.1} parent=11 // pred_fallthru
          _
        // Predicated region
        $region25: #{tpu_custom_call.1} parent=11 // pred_check
          %p352 = pneg %p134
        $region26: #{tpu_custom_call.1} parent=11 // pred_check_branch
          %354 = sbr.rel (%p352) target = $region28
        $region27: #{tpu_custom_call.1} parent=11 // pred_region
          _
        $region28: #{tpu_custom_call.1} parent=11 // pred_fallthru
          _
        // Predicated region
        $region29: #{tpu_custom_call.1} parent=11 // pred_check
          %p355 = pneg %p155
        $region30: #{tpu_custom_call.1} parent=11 // pred_check_branch
          %357 = sbr.rel (%p355) target = $region32
        $region31: #{tpu_custom_call.1} parent=11 // pred_region
          %s359 = ssub.s32 512, 512
          %360 = vsyncadd [#allocation3], %s359
          %s361 = sshll.u32 [#allocation2], 4
          %s362 = int_to_ptr.vmem [resolvable:$true] %s361
          %367 = dma.hbm_to_vmem [thread:$0]  %s5, 512, %s362, [#allocation3], 128, 128, 8
        $region32: #{tpu_custom_call.1} parent=11 // pred_fallthru
          _
        // Predicated region
        $region33: #{tpu_custom_call.1} parent=11 // pred_check
          %p368 = pneg %p176
        $region34: #{tpu_custom_call.1} parent=11 // pred_check_branch
          %370 = sbr.rel (%p368) target = $region36
        $region35: #{tpu_custom_call.1} parent=11 // pred_region
          %s372 = ssub.s32 2048, 2048
          %373 = vsyncadd [#allocation6], %s372
          %s374 = sshll.u32 [#allocation5], 4
          %s375 = int_to_ptr.vmem [resolvable:$true] %s374
          %380 = dma.hbm_to_vmem [thread:$0]  %s6, 2048, %s375, [#allocation6], 256, 256, 16
        $region36: #{tpu_custom_call.1} parent=11 // pred_fallthru
          _
        // Predicated region
        $region37: #{tpu_custom_call.1} parent=11 // pred_check
          %p381 = pneg %p197
        $region38: #{tpu_custom_call.1} parent=11 // pred_check_branch
          %383 = sbr.rel (%p381) target = $region40
        $region39: #{tpu_custom_call.1} parent=11 // pred_region
          _
        $region40: #{tpu_custom_call.1} parent=11 // pred_fallthru
          _
        // Predicated region
        $region41: #{tpu_custom_call.1} parent=11 // pred_check
          %p384 = pneg %p218
        $region42: #{tpu_custom_call.1} parent=11 // pred_check_branch
          %386 = sbr.rel (%p384) target = $region44
        $region43: #{tpu_custom_call.1} parent=11 // pred_region
          _
        $region44: #{tpu_custom_call.1} parent=11 // pred_fallthru
          _
        // Predicated region
        $region45: #{tpu_custom_call.1} parent=11 // pred_check
          %p387 = pneg %p239
        $region46: #{tpu_custom_call.1} parent=11 // pred_check_branch
          %389 = sbr.rel (%p387) target = $region48
        $region47: #{tpu_custom_call.1} parent=11 // pred_region
          _
        $region48: #{tpu_custom_call.1} parent=11 // pred_fallthru
          _
        // Predicated region
        $region49: #{tpu_custom_call.1} parent=11 // pred_check
          %p390 = pneg %p260
        $region50: #{tpu_custom_call.1} parent=11 // pred_check_branch
          %392 = sbr.rel (%p390) target = $region52
        $region51: #{tpu_custom_call.1} parent=11 // pred_region
          _
        $region52: #{tpu_custom_call.1} parent=11 // pred_fallthru
          _
        // Predicated region
        $region53: #{tpu_custom_call.1} parent=11 // pred_check
          %p393 = pneg %p281
        $region54: #{tpu_custom_call.1} parent=11 // pred_check_branch
          %395 = sbr.rel (%p393) target = $region56
        $region55: #{tpu_custom_call.1} parent=11 // pred_region
          _
        $region56: #{tpu_custom_call.1} parent=11 // pred_fallthru
          _
        // Predicated region
        $region57: #{tpu_custom_call.1} parent=11 // pred_check
          %p396 = pneg %p302
        $region58: #{tpu_custom_call.1} parent=11 // pred_check_branch
          %398 = sbr.rel (%p396) target = $region60
        $region59: #{tpu_custom_call.1} parent=11 // pred_region
          _
        $region60: #{tpu_custom_call.1} parent=11 // pred_fallthru
          _
      $region12: #{tpu_custom_call.1} parent=5 // pred_fallthru
        _
      %p399 = scmp.lt.s32.totalorder %s24, 2
      // Predicated region
      $region61: #{tpu_custom_call.1} parent=5 // pred_check
        %p400 = pneg %p399
      $region62: #{tpu_custom_call.1} parent=5 // pred_check_branch
        %402 = sbr.rel (%p400) target = $region64
      $region63: #{tpu_custom_call.1} parent=5 // pred_region
        // Predicated region
        $region65: #{tpu_custom_call.1} parent=63 // pred_check
          %p403 = pneg %p44
        $region66: #{tpu_custom_call.1} parent=63 // pred_check_branch
          %405 = sbr.rel (%p403) target = $region68
        $region67: #{tpu_custom_call.1} parent=63 // pred_region
          %s406 = smul.u32 16, %s24
          %p407 = scmp.lt.s32.totalorder %s406, 31
          %s408 = scalar_select %p407, %s406, 31
          %s409 = smul.addr %s408, 2
          %s410 = smul.addr %s409, 8
          %s411 = scalar_lea.vmem %s0, %s410
          %s412 = smul.u32 16, %s24
        $region68: #{tpu_custom_call.1} parent=63 // pred_fallthru
          _
      $region64: #{tpu_custom_call.1} parent=5 // pred_fallthru
        _
      %p413 = scmp.le.s32.totalorder 1, %s24
      %p414 = scmp.lt.s32.totalorder %s24, 3
      %p415 = pnand %p413, %p414
      %p416 = pneg %p415
      // Predicated region
      $region69: #{tpu_custom_call.1} parent=5 // pred_check
        _
      $region70: #{tpu_custom_call.1} parent=5 // pred_check_branch
        %418 = sbr.rel (%p415) target = $region72
      $region71: #{tpu_custom_call.1} parent=5 // pred_region
        %s419 = ssub.s32 %s24, 1
        // Predicated region
        $region73: #{tpu_custom_call.1} parent=71 // pred_check
          %p420 = pneg %p155
        $region74: #{tpu_custom_call.1} parent=71 // pred_check_branch
          %422 = sbr.rel (%p420) target = $region76
        $region75: #{tpu_custom_call.1} parent=71 // pred_region
          %423 = dma.done [#allocation3], 512
        $region76: #{tpu_custom_call.1} parent=71 // pred_fallthru
          _
        // Predicated region
        $region77: #{tpu_custom_call.1} parent=71 // pred_check
          %p424 = pneg %p176
        $region78: #{tpu_custom_call.1} parent=71 // pred_check_branch
          %426 = sbr.rel (%p424) target = $region80
        $region79: #{tpu_custom_call.1} parent=71 // pred_region
          %427 = dma.done [#allocation6], 2048
        $region80: #{tpu_custom_call.1} parent=71 // pred_fallthru
          _
        %s428 = smul.u32 16, %s29
        %p429 = scmp.lt.s32.totalorder %s428, 31
        %s430 = scalar_select %p429, %s428, 31
        %s431 = smul.addr %s430, 2
        %s432 = smul.addr %s431, 8
        %s433 = scalar_lea.vmem %s0, %s432
        %p434 = pneg %p50
        %p435 = pneg %p47
        %p436 = pneg %p71
        %p437 = pneg %p68
        %p438 = pneg %p92
        %p439 = pneg %p89
        %p440 = pneg %p113
        %p441 = pneg %p110
        %p442 = pneg %p134
        %p443 = pneg %p131
        %p444 = pneg %p155
        %p445 = pneg %p152
        %p446 = pneg %p176
        %p447 = pneg %p173
        %p448 = pneg %p197
        %p449 = pneg %p194
        %p450 = pneg %p218
        %p451 = pneg %p215
        %p452 = pneg %p239
        %p453 = pneg %p236
        %p454 = pneg %p260
        %p455 = pneg %p257
        %p456 = pneg %p281
        %p457 = pneg %p278
        %p458 = pneg %p302
        %p459 = pneg %p299
        %p460 = pneg %p328
        %p461 = pneg %p325
        %s462 = sand.u32 %s315, 1
        %s463 = scalar_lea.sflag [#allocation4], %s462
        %s464 = sand.u32 %s315, 1
        %s465 = smul.addr %s464, 256
        %s466 = scalar_lea.vmem [#allocation7], %s465
        %s467 = smul.u32 16, %s29
        %p468 = scmp.lt.s32.totalorder %s467, 31
        %s469 = scalar_select %p468, %s467, 31
        %s470 = smul.addr %s469, 2
        %s471 = smul.addr %s470, 8
        %s472 = scalar_lea.vmem %s0, %s471
        %s473 = smul.u32 16, %s29
        %s474 = smul.u32 16, %s29
        %v475 = vld [vmem:[%s472] sm:$0xff]
        %v476 = vld [vmem:[%s472 + $0x8] sm:$0xff]
        %v477 = vld [vmem:[%s472 + $0x10] sm:$0xff]
        %v478 = vld [vmem:[%s472 + $0x18] sm:$0xff]
        %v479 = vld [vmem:[%s472 + $0x20] sm:$0xff]
        %v480 = vld [vmem:[%s472 + $0x28] sm:$0xff]
        %v481 = vld [vmem:[%s472 + $0x30] sm:$0xff]
        %v482 = vld [vmem:[%s472 + $0x38] sm:$0xff]
        %v483 = vld [vmem:[%s472 + $0x40] sm:$0xff]
        %v484 = vld [vmem:[%s472 + $0x48] sm:$0xff]
        %v485 = vld [vmem:[%s472 + $0x50] sm:$0xff]
        %v486 = vld [vmem:[%s472 + $0x58] sm:$0xff]
        %v487 = vld [vmem:[%s472 + $0x60] sm:$0xff]
        %v488 = vld [vmem:[%s472 + $0x68] sm:$0xff]
        %v489 = vld [vmem:[%s472 + $0x70] sm:$0xff]
        %v490 = vld [vmem:[%s472 + $0x78] sm:$0xff]
        %v491 = vld [vmem:[%s472 + $0x80] sm:$0xff]
        %v492 = vld [vmem:[%s472 + $0x88] sm:$0xff]
        %v493 = vld [vmem:[%s472 + $0x90] sm:$0xff]
        %v494 = vld [vmem:[%s472 + $0x98] sm:$0xff]
        %v495 = vld [vmem:[%s472 + $0xa0] sm:$0xff]
        %v496 = vld [vmem:[%s472 + $0xa8] sm:$0xff]
        %v497 = vld [vmem:[%s472 + $0xb0] sm:$0xff]
        %v498 = vld [vmem:[%s472 + $0xb8] sm:$0xff]
        %v499 = vld [vmem:[%s472 + $0xc0] sm:$0xff]
        %v500 = vld [vmem:[%s472 + $0xc8] sm:$0xff]
        %v501 = vld [vmem:[%s472 + $0xd0] sm:$0xff]
        %v502 = vld [vmem:[%s472 + $0xd8] sm:$0xff]
        %v503 = vld [vmem:[%s472 + $0xe0] sm:$0xff]
        %v504 = vld [vmem:[%s472 + $0xe8] sm:$0xff]
        %v505 = vld [vmem:[%s472 + $0xf0] sm:$0xff]
        %v506 = vld [vmem:[%s472 + $0xf8] sm:$0xff]
        %v507 = vld [vmem:[%s1] sm:$0xff]
        %v508 = vld [vmem:[%s1 + $0x8] sm:$0xff]
        %v509 = vld [vmem:[%s1 + $0x10] sm:$0xff]
        %v510 = vld [vmem:[%s1 + $0x18] sm:$0xff]
        %v511 = vld [vmem:[%s1 + $0x20] sm:$0xff]
        %v512 = vld [vmem:[%s1 + $0x28] sm:$0xff]
        %v513 = vld [vmem:[%s1 + $0x30] sm:$0xff]
        %v514 = vld [vmem:[%s1 + $0x38] sm:$0xff]
        %v515 = vld [vmem:[%s1 + $0x40] sm:$0xff]
        %v516 = vld [vmem:[%s1 + $0x48] sm:$0xff]
        %v517 = vld [vmem:[%s1 + $0x50] sm:$0xff]
        %v518 = vld [vmem:[%s1 + $0x58] sm:$0xff]
        %v519 = vld [vmem:[%s1 + $0x60] sm:$0xff]
        %v520 = vld [vmem:[%s1 + $0x68] sm:$0xff]
        %v521 = vld [vmem:[%s1 + $0x70] sm:$0xff]
        %v522 = vld [vmem:[%s1 + $0x78] sm:$0xff]
        %v523 = vld [vmem:[%s1 + $0x80] sm:$0xff]
        %v524 = vld [vmem:[%s1 + $0x88] sm:$0xff]
        %v525 = vld [vmem:[%s1 + $0x90] sm:$0xff]
        %v526 = vld [vmem:[%s1 + $0x98] sm:$0xff]
        %v527 = vld [vmem:[%s1 + $0xa0] sm:$0xff]
        %v528 = vld [vmem:[%s1 + $0xa8] sm:$0xff]
        %v529 = vld [vmem:[%s1 + $0xb0] sm:$0xff]
        %v530 = vld [vmem:[%s1 + $0xb8] sm:$0xff]
        %v531 = vld [vmem:[%s1 + $0xc0] sm:$0xff]
        %v532 = vld [vmem:[%s1 + $0xc8] sm:$0xff]
        %v533 = vld [vmem:[%s1 + $0xd0] sm:$0xff]
        %v534 = vld [vmem:[%s1 + $0xd8] sm:$0xff]
        %v535 = vld [vmem:[%s1 + $0xe0] sm:$0xff]
        %v536 = vld [vmem:[%s1 + $0xe8] sm:$0xff]
        %v537 = vld [vmem:[%s1 + $0xf0] sm:$0xff]
        %v538 = vld [vmem:[%s1 + $0xf8] sm:$0xff]
        %v539 = vld [vmem:[%s7] sm:$0x1]
        %v541 = vlaneseq
        %v542 = vshrl.u32 %v541, 7
        %v543 = vsub.s32 0, %v542
        %v544 = vrot.slane %v539, %v543
        %546 = vmatprep.subr.mxu0 0.0
        %547 = vmatpush1.msra.mxu0 %v507
        %548 = vmatprep.subr.mxu0 0.0
        %549 = vmatpush1.msra.mxu0 %v508
        %550 = vmatprep.subr.mxu0 0.0
        %551 = vmatpush1.msra.mxu0 %v509
        %552 = vmatprep.subr.mxu0 0.0
        %553 = vmatpush1.msra.mxu0 %v510
        %554 = vmatprep.subr.mxu0 0.0
        %555 = vmatpush1.msra.mxu0 %v511
        %556 = vmatprep.subr.mxu0 0.0
        %557 = vmatpush1.msra.mxu0 %v512
        %558 = vmatprep.subr.mxu0 0.0
        %559 = vmatpush1.msra.mxu0 %v513
        %560 = vmatprep.subr.mxu0 0.0
        %561 = vmatpush1.msra.mxu0 %v514
        %562 = vmatprep.subr.mxu0 0.0
        %563 = vmatpush1.msra.mxu0 %v515
        %564 = vmatprep.subr.mxu0 0.0
        %565 = vmatpush1.msra.mxu0 %v516
        %566 = vmatprep.subr.mxu0 0.0
        %567 = vmatpush1.msra.mxu0 %v517
        %568 = vmatprep.subr.mxu0 0.0
        %569 = vmatpush1.msra.mxu0 %v518
        %570 = vmatprep.subr.mxu0 0.0
        %571 = vmatpush1.msra.mxu0 %v519
        %572 = vmatprep.subr.mxu0 0.0
        %573 = vmatpush1.msra.mxu0 %v520
        %574 = vmatprep.subr.mxu0 0.0
        %575 = vmatpush1.msra.mxu0 %v521
        %576 = vmatprep.subr.mxu0 0.0
        %577 = vmatpush1.msra.mxu0 %v522
        %578 = vmatprep.subr.mxu0 0.0
        %579 = vmatpush1.msra.mxu0 %v523
        %580 = vmatprep.subr.mxu0 0.0
        %581 = vmatpush1.msra.mxu0 %v524
        %582 = vmatprep.subr.mxu0 0.0
        %583 = vmatpush1.msra.mxu0 %v525
        %584 = vmatprep.subr.mxu0 0.0
        %585 = vmatpush1.msra.mxu0 %v526
        %586 = vmatprep.subr.mxu0 0.0
        %587 = vmatpush1.msra.mxu0 %v527
        %588 = vmatprep.subr.mxu0 0.0
        %589 = vmatpush1.msra.mxu0 %v528
        %590 = vmatprep.subr.mxu0 0.0
        %591 = vmatpush1.msra.mxu0 %v529
        %592 = vmatprep.subr.mxu0 0.0
        %593 = vmatpush1.msra.mxu0 %v530
        %594 = vmatprep.subr.mxu0 0.0
        %595 = vmatpush1.msra.mxu0 %v531
        %596 = vmatprep.subr.mxu0 0.0
        %597 = vmatpush1.msra.mxu0 %v532
        %598 = vmatprep.subr.mxu0 0.0
        %599 = vmatpush1.msra.mxu0 %v533
        %600 = vmatprep.subr.mxu0 0.0
        %601 = vmatpush1.msra.mxu0 %v534
        %602 = vmatprep.subr.mxu0 0.0
        %603 = vmatpush1.msra.mxu0 %v535
        %604 = vmatprep.subr.mxu0 0.0
        %605 = vmatpush1.msra.mxu0 %v536
        %606 = vmatprep.subr.mxu0 0.0
        %607 = vmatpush1.msra.mxu0 %v537
        %608 = vmatprep.subr.mxu0 0.0
        %609 = vmatpush1.msra.mxu0 %v538
        %610 = vmatprep.mubr.f32.mxu0 %v476
        %611 = vmatmul.mubr.f32.gmra.mrb[0].mxu0 %v475
        %v612 = vpop.f32.mrb[0].mxu0
        %v613 = vadd.f32 %v544, %v612
        %v614 = vpop.f32.mrb[0].mxu0
        %615 = vmatprep.mubr.f32.mxu0 %v478
        %616 = vmatmul.mubr.f32.gmra.mrb[0].mxu0 %v477
        %v617 = vpop.f32.mrb[0].mxu0
        %v618 = vadd.f32 %v544, %v617
        %v619 = vpop.f32.mrb[0].mxu0
        %620 = vmatprep.mubr.f32.mxu0 %v480
        %621 = vmatmul.mubr.f32.gmra.mrb[0].mxu0 %v479
        %v622 = vpop.f32.mrb[0].mxu0
        %v623 = vadd.f32 %v544, %v622
        %v624 = vpop.f32.mrb[0].mxu0
        %625 = vmatprep.mubr.f32.mxu0 %v482
        %626 = vmatmul.mubr.f32.gmra.mrb[0].mxu0 %v481
        %v627 = vpop.f32.mrb[0].mxu0
        %v628 = vadd.f32 %v544, %v627
        %v629 = vpop.f32.mrb[0].mxu0
        %630 = vmatprep.mubr.f32.mxu0 %v484
        %631 = vmatmul.mubr.f32.gmra.mrb[0].mxu0 %v483
        %v632 = vpop.f32.mrb[0].mxu0
        %v633 = vadd.f32 %v544, %v632
        %v634 = vpop.f32.mrb[0].mxu0
        %635 = vmatprep.mubr.f32.mxu0 %v486
        %636 = vmatmul.mubr.f32.gmra.mrb[0].mxu0 %v485
        %v637 = vpop.f32.mrb[0].mxu0
        %v638 = vadd.f32 %v544, %v637
        %v639 = vpop.f32.mrb[0].mxu0
        %640 = vmatprep.mubr.f32.mxu0 %v488
        %641 = vmatmul.mubr.f32.gmra.mrb[0].mxu0 %v487
        %v642 = vpop.f32.mrb[0].mxu0
        %v643 = vadd.f32 %v544, %v642
        %v644 = vpop.f32.mrb[0].mxu0
        %645 = vmatprep.mubr.f32.mxu0 %v490
        %646 = vmatmul.mubr.f32.gmra.mrb[0].mxu0 %v489
        %v647 = vpop.f32.mrb[0].mxu0
        %v648 = vadd.f32 %v544, %v647
        %v649 = vpop.f32.mrb[0].mxu0
        %650 = vmatprep.mubr.f32.mxu0 %v492
        %651 = vmatmul.mubr.f32.gmra.mrb[0].mxu0 %v491
        %v652 = vpop.f32.mrb[0].mxu0
        %v653 = vadd.f32 %v544, %v652
        %v654 = vpop.f32.mrb[0].mxu0
        %655 = vmatprep.mubr.f32.mxu0 %v494
        %656 = vmatmul.mubr.f32.gmra.mrb[0].mxu0 %v493
        %v657 = vpop.f32.mrb[0].mxu0
        %v658 = vadd.f32 %v544, %v657
        %v659 = vpop.f32.mrb[0].mxu0
        %660 = vmatprep.mubr.f32.mxu0 %v496
        %661 = vmatmul.mubr.f32.gmra.mrb[0].mxu0 %v495
        %v662 = vpop.f32.mrb[0].mxu0
        %v663 = vadd.f32 %v544, %v662
        %v664 = vpop.f32.mrb[0].mxu0
        %665 = vmatprep.mubr.f32.mxu0 %v498
        %666 = vmatmul.mubr.f32.gmra.mrb[0].mxu0 %v497
        %v667 = vpop.f32.mrb[0].mxu0
        %v668 = vadd.f32 %v544, %v667
        %v669 = vpop.f32.mrb[0].mxu0
        %670 = vmatprep.mubr.f32.mxu0 %v500
        %671 = vmatmul.mubr.f32.gmra.mrb[0].mxu0 %v499
        %v672 = vpop.f32.mrb[0].mxu0
        %v673 = vadd.f32 %v544, %v672
        %v674 = vpop.f32.mrb[0].mxu0
        %675 = vmatprep.mubr.f32.mxu0 %v502
        %676 = vmatmul.mubr.f32.gmra.mrb[0].mxu0 %v501
        %v677 = vpop.f32.mrb[0].mxu0
        %v678 = vadd.f32 %v544, %v677
        %v679 = vpop.f32.mrb[0].mxu0
        %680 = vmatprep.mubr.f32.mxu0 %v504
        %681 = vmatmul.mubr.f32.gmra.mrb[0].mxu0 %v503
        %v682 = vpop.f32.mrb[0].mxu0
        %v683 = vadd.f32 %v544, %v682
        %v684 = vpop.f32.mrb[0].mxu0
        %685 = vmatprep.mubr.f32.mxu0 %v506
        %686 = vmatmul.mubr.f32.gmra.mrb[0].mxu0 %v505
        %v687 = vpop.f32.mrb[0].mxu0
        %v688 = vadd.f32 %v544, %v687
        %v689 = vpop.f32.mrb[0].mxu0
        %690 = vdwg.mxu0
        %vm691 = vcmp.gt.f32.partialorder %v613, 20.0
        %vm692 = vcmp.gt.f32.partialorder %v618, 20.0
        %vm693 = vcmp.gt.f32.partialorder %v623, 20.0
        %vm694 = vcmp.gt.f32.partialorder %v628, 20.0
        %vm695 = vcmp.gt.f32.partialorder %v633, 20.0
        %vm696 = vcmp.gt.f32.partialorder %v638, 20.0
        %vm697 = vcmp.gt.f32.partialorder %v643, 20.0
        %vm698 = vcmp.gt.f32.partialorder %v648, 20.0
        %vm699 = vcmp.gt.f32.partialorder %v653, 20.0
        %vm700 = vcmp.gt.f32.partialorder %v658, 20.0
        %vm701 = vcmp.gt.f32.partialorder %v663, 20.0
        %vm702 = vcmp.gt.f32.partialorder %v668, 20.0
        %vm703 = vcmp.gt.f32.partialorder %v673, 20.0
        %vm704 = vcmp.gt.f32.partialorder %v678, 20.0
        %vm705 = vcmp.gt.f32.partialorder %v683, 20.0
        %vm706 = vcmp.gt.f32.partialorder %v688, 20.0
        %v707 = vmin.f32 %v613, 20.0
        %v708 = vmin.f32 %v618, 20.0
        %v709 = vmin.f32 %v623, 20.0
        %v710 = vmin.f32 %v628, 20.0
        %v711 = vmin.f32 %v633, 20.0
        %v712 = vmin.f32 %v638, 20.0
        %v713 = vmin.f32 %v643, 20.0
        %v714 = vmin.f32 %v648, 20.0
        %v715 = vmin.f32 %v653, 20.0
        %v716 = vmin.f32 %v658, 20.0
        %v717 = vmin.f32 %v663, 20.0
        %v718 = vmin.f32 %v668, 20.0
        %v719 = vmin.f32 %v673, 20.0
        %v720 = vmin.f32 %v678, 20.0
        %v721 = vmin.f32 %v683, 20.0
        %v722 = vmin.f32 %v688, 20.0
        %v723 = vmul.f32 %v707, 1.442695
        %v724 = vpow.pop %v723
        %v725 = vmul.f32 %v708, 1.442695
        %v726 = vpow.pop %v725
        %v727 = vmul.f32 %v709, 1.442695
        %v728 = vpow.pop %v727
        %v729 = vmul.f32 %v710, 1.442695
        %v730 = vpow.pop %v729
        %v731 = vmul.f32 %v711, 1.442695
        %v732 = vpow.pop %v731
        %v733 = vmul.f32 %v712, 1.442695
        %v734 = vpow.pop %v733
        %v735 = vmul.f32 %v713, 1.442695
        %v736 = vpow.pop %v735
        %v737 = vmul.f32 %v714, 1.442695
        %v738 = vpow.pop %v737
        %v739 = vmul.f32 %v715, 1.442695
        %v740 = vpow.pop %v739
        %v741 = vmul.f32 %v716, 1.442695
        %v742 = vpow.pop %v741
        %v743 = vmul.f32 %v717, 1.442695
        %v744 = vpow.pop %v743
        %v745 = vmul.f32 %v718, 1.442695
        %v746 = vpow.pop %v745
        %v747 = vmul.f32 %v719, 1.442695
        %v748 = vpow.pop %v747
        %v749 = vmul.f32 %v720, 1.442695
        %v750 = vpow.pop %v749
        %v751 = vmul.f32 %v721, 1.442695
        %v752 = vpow.pop %v751
        %v753 = vmul.f32 %v722, 1.442695
        %v754 = vpow.pop %v753
        %v755 = vadd.f32 %v724, 1.0
        %v756 = vlog2.pop %v755
        %v757 = vmul.f32 %v756, 0.6931472
        %v758 = vmul.f32 -0.5, %v724
        %v759 = vadd.f32 %v758, 1.0
        %v760 = vmul.f32 %v759, %v724
        %v761 = vand.u32 2147483647, %v724
        %vm762 = vcmp.lt.f32.partialorder %v761, 0.0004427343
        %v763 = vsel %vm762, %v760, %v757
        %v764 = vadd.f32 %v726, 1.0
        %v765 = vlog2.pop %v764
        %v766 = vmul.f32 %v765, 0.6931472
        %v767 = vmul.f32 -0.5, %v726
        %v768 = vadd.f32 %v767, 1.0
        %v769 = vmul.f32 %v768, %v726
        %v770 = vand.u32 2147483647, %v726
        %vm771 = vcmp.lt.f32.partialorder %v770, 0.0004427343
        %v772 = vsel %vm771, %v769, %v766
        %v773 = vadd.f32 %v728, 1.0
        %v774 = vlog2.pop %v773
        %v775 = vmul.f32 %v774, 0.6931472
        %v776 = vmul.f32 -0.5, %v728
        %v777 = vadd.f32 %v776, 1.0
        %v778 = vmul.f32 %v777, %v728
        %v779 = vand.u32 2147483647, %v728
        %vm780 = vcmp.lt.f32.partialorder %v779, 0.0004427343
        %v781 = vsel %vm780, %v778, %v775
        %v782 = vadd.f32 %v730, 1.0
        %v783 = vlog2.pop %v782
        %v784 = vmul.f32 %v783, 0.6931472
        %v785 = vmul.f32 -0.5, %v730
        %v786 = vadd.f32 %v785, 1.0
        %v787 = vmul.f32 %v786, %v730
        %v788 = vand.u32 2147483647, %v730
        %vm789 = vcmp.lt.f32.partialorder %v788, 0.0004427343
        %v790 = vsel %vm789, %v787, %v784
        %v791 = vadd.f32 %v732, 1.0
        %v792 = vlog2.pop %v791
        %v793 = vmul.f32 %v792, 0.6931472
        %v794 = vmul.f32 -0.5, %v732
        %v795 = vadd.f32 %v794, 1.0
        %v796 = vmul.f32 %v795, %v732
        %v797 = vand.u32 2147483647, %v732
        %vm798 = vcmp.lt.f32.partialorder %v797, 0.0004427343
        %v799 = vsel %vm798, %v796, %v793
        %v800 = vadd.f32 %v734, 1.0
        %v801 = vlog2.pop %v800
        %v802 = vmul.f32 %v801, 0.6931472
        %v803 = vmul.f32 -0.5, %v734
        %v804 = vadd.f32 %v803, 1.0
        %v805 = vmul.f32 %v804, %v734
        %v806 = vand.u32 2147483647, %v734
        %vm807 = vcmp.lt.f32.partialorder %v806, 0.0004427343
        %v808 = vsel %vm807, %v805, %v802
        %v809 = vadd.f32 %v736, 1.0
        %v810 = vlog2.pop %v809
        %v811 = vmul.f32 %v810, 0.6931472
        %v812 = vmul.f32 -0.5, %v736
        %v813 = vadd.f32 %v812, 1.0
        %v814 = vmul.f32 %v813, %v736
        %v815 = vand.u32 2147483647, %v736
        %vm816 = vcmp.lt.f32.partialorder %v815, 0.0004427343
        %v817 = vsel %vm816, %v814, %v811
        %v818 = vadd.f32 %v738, 1.0
        %v819 = vlog2.pop %v818
        %v820 = vmul.f32 %v819, 0.6931472
        %v821 = vmul.f32 -0.5, %v738
        %v822 = vadd.f32 %v821, 1.0
        %v823 = vmul.f32 %v822, %v738
        %v824 = vand.u32 2147483647, %v738
        %vm825 = vcmp.lt.f32.partialorder %v824, 0.0004427343
        %v826 = vsel %vm825, %v823, %v820
        %v827 = vadd.f32 %v740, 1.0
        %v828 = vlog2.pop %v827
        %v829 = vmul.f32 %v828, 0.6931472
        %v830 = vmul.f32 -0.5, %v740
        %v831 = vadd.f32 %v830, 1.0
        %v832 = vmul.f32 %v831, %v740
        %v833 = vand.u32 2147483647, %v740
        %vm834 = vcmp.lt.f32.partialorder %v833, 0.0004427343
        %v835 = vsel %vm834, %v832, %v829
        %v836 = vadd.f32 %v742, 1.0
        %v837 = vlog2.pop %v836
        %v838 = vmul.f32 %v837, 0.6931472
        %v839 = vmul.f32 -0.5, %v742
        %v840 = vadd.f32 %v839, 1.0
        %v841 = vmul.f32 %v840, %v742
        %v842 = vand.u32 2147483647, %v742
        %vm843 = vcmp.lt.f32.partialorder %v842, 0.0004427343
        %v844 = vsel %vm843, %v841, %v838
        %v845 = vadd.f32 %v744, 1.0
        %v846 = vlog2.pop %v845
        %v847 = vmul.f32 %v846, 0.6931472
        %v848 = vmul.f32 -0.5, %v744
        %v849 = vadd.f32 %v848, 1.0
        %v850 = vmul.f32 %v849, %v744
        %v851 = vand.u32 2147483647, %v744
        %vm852 = vcmp.lt.f32.partialorder %v851, 0.0004427343
        %v853 = vsel %vm852, %v850, %v847
        %v854 = vadd.f32 %v746, 1.0
        %v855 = vlog2.pop %v854
        %v856 = vmul.f32 %v855, 0.6931472
        %v857 = vmul.f32 -0.5, %v746
        %v858 = vadd.f32 %v857, 1.0
        %v859 = vmul.f32 %v858, %v746
        %v860 = vand.u32 2147483647, %v746
        %vm861 = vcmp.lt.f32.partialorder %v860, 0.0004427343
        %v862 = vsel %vm861, %v859, %v856
        %v863 = vadd.f32 %v748, 1.0
        %v864 = vlog2.pop %v863
        %v865 = vmul.f32 %v864, 0.6931472
        %v866 = vmul.f32 -0.5, %v748
        %v867 = vadd.f32 %v866, 1.0
        %v868 = vmul.f32 %v867, %v748
        %v869 = vand.u32 2147483647, %v748
        %vm870 = vcmp.lt.f32.partialorder %v869, 0.0004427343
        %v871 = vsel %vm870, %v868, %v865
        %v872 = vadd.f32 %v750, 1.0
        %v873 = vlog2.pop %v872
        %v874 = vmul.f32 %v873, 0.6931472
        %v875 = vmul.f32 -0.5, %v750
        %v876 = vadd.f32 %v875, 1.0
        %v877 = vmul.f32 %v876, %v750
        %v878 = vand.u32 2147483647, %v750
        %vm879 = vcmp.lt.f32.partialorder %v878, 0.0004427343
        %v880 = vsel %vm879, %v877, %v874
        %v881 = vadd.f32 %v752, 1.0
        %v882 = vlog2.pop %v881
        %v883 = vmul.f32 %v882, 0.6931472
        %v884 = vmul.f32 -0.5, %v752
        %v885 = vadd.f32 %v884, 1.0
        %v886 = vmul.f32 %v885, %v752
        %v887 = vand.u32 2147483647, %v752
        %vm888 = vcmp.lt.f32.partialorder %v887, 0.0004427343
        %v889 = vsel %vm888, %v886, %v883
        %v890 = vadd.f32 %v754, 1.0
        %v891 = vlog2.pop %v890
        %v892 = vmul.f32 %v891, 0.6931472
        %v893 = vmul.f32 -0.5, %v754
        %v894 = vadd.f32 %v893, 1.0
        %v895 = vmul.f32 %v894, %v754
        %v896 = vand.u32 2147483647, %v754
        %vm897 = vcmp.lt.f32.partialorder %v896, 0.0004427343
        %v898 = vsel %vm897, %v895, %v892
        %v899 = vsel %vm691, %v613, %v763
        %v900 = vsel %vm692, %v618, %v772
        %v901 = vsel %vm693, %v623, %v781
        %v902 = vsel %vm694, %v628, %v790
        %v903 = vsel %vm695, %v633, %v799
        %v904 = vsel %vm696, %v638, %v808
        %v905 = vsel %vm697, %v643, %v817
        %v906 = vsel %vm698, %v648, %v826
        %v907 = vsel %vm699, %v653, %v835
        %v908 = vsel %vm700, %v658, %v844
        %v909 = vsel %vm701, %v663, %v853
        %v910 = vsel %vm702, %v668, %v862
        %v911 = vsel %vm703, %v673, %v871
        %v912 = vsel %vm704, %v678, %v880
        %v913 = vsel %vm705, %v683, %v889
        %v914 = vsel %vm706, %v688, %v898
        %v915 = vld [vmem:[%s2] sm:$0xff]
        %v916 = vld [vmem:[%s2 + $0x8] sm:$0xff]
        %v917 = vld [vmem:[%s2 + $0x10] sm:$0xff]
        %v918 = vld [vmem:[%s2 + $0x18] sm:$0xff]
        %v919 = vld [vmem:[%s2 + $0x20] sm:$0xff]
        %v920 = vld [vmem:[%s2 + $0x28] sm:$0xff]
        %v921 = vld [vmem:[%s2 + $0x30] sm:$0xff]
        %v922 = vld [vmem:[%s2 + $0x38] sm:$0xff]
        %v923 = vld [vmem:[%s8] sm:$0x1]
        %v925 = vlaneseq
        %v926 = vshrl.u32 %v925, 7
        %v927 = vsub.s32 0, %v926
        %v928 = vrot.slane %v923, %v927
        %vm930 = vcmask 523264
        %v932 = vsel %vm930, %v899, 0
        %v935 = vsel %vm930, %v900, 0
        %v938 = vsel %vm930, %v901, 0
        %v941 = vsel %vm930, %v902, 0
        %v944 = vsel %vm930, %v903, 0
        %v947 = vsel %vm930, %v904, 0
        %v950 = vsel %vm930, %v905, 0
        %v953 = vsel %vm930, %v906, 0
        %v956 = vsel %vm930, %v907, 0
        %v959 = vsel %vm930, %v908, 0
        %v962 = vsel %vm930, %v909, 0
        %v965 = vsel %vm930, %v910, 0
        %v968 = vsel %vm930, %v911, 0
        %v971 = vsel %vm930, %v912, 0
        %v974 = vsel %vm930, %v913, 0
        %v977 = vsel %vm930, %v914, 0
        %979 = vmatprep.subr.mxu0 0.0
        %980 = vmatpush1.msra.mxu0 %v915
        %981 = vmatprep.subr.mxu0 0.0
        %982 = vmatpush1.msra.mxu0 %v916
        %983 = vmatprep.subr.mxu0 0.0
        %984 = vmatpush1.msra.mxu0 %v917
        %985 = vmatprep.subr.mxu0 0.0
        %986 = vmatpush1.msra.mxu0 %v918
        %987 = vmatprep.subr.mxu0 0.0
        %988 = vmatpush1.msra.mxu0 %v919
        %989 = vmatprep.subr.mxu0 0.0
        %990 = vmatpush1.msra.mxu0 %v920
        %991 = vmatprep.subr.mxu0 0.0
        %992 = vmatpush1.msra.mxu0 %v921
        %993 = vmatprep.subr.mxu0 0.0
        %994 = vmatpush1.msra.mxu0 %v922
        %995 = vmatprep.subr.mxu0 0.0
        %996 = vmatpush1.msra.mxu0 0.0
        %997 = vmatprep.subr.mxu0 0.0
        %998 = vmatpush1.msra.mxu0 0.0
        %999 = vmatprep.subr.mxu0 0.0
        %1000 = vmatpush1.msra.mxu0 0.0
        %1001 = vmatprep.subr.mxu0 0.0
        %1002 = vmatpush1.msra.mxu0 0.0
        %1003 = vmatprep.subr.mxu0 0.0
        %1004 = vmatpush1.msra.mxu0 0.0
        %1005 = vmatprep.subr.mxu0 0.0
        %1006 = vmatpush1.msra.mxu0 0.0
        %1007 = vmatprep.subr.mxu0 0.0
        %1008 = vmatpush1.msra.mxu0 0.0
        %1009 = vmatprep.subr.mxu0 0.0
        %1010 = vmatpush1.msra.mxu0 0.0
        %1011 = vmatprep.subr.mxu0 0.0
        %1012 = vmatpush1.msra.mxu0 0.0
        %1013 = vmatprep.subr.mxu0 0.0
        %1014 = vmatpush1.msra.mxu0 0.0
        %1015 = vmatprep.subr.mxu0 0.0
        %1016 = vmatpush1.msra.mxu0 0.0
        %1017 = vmatprep.subr.mxu0 0.0
        %1018 = vmatpush1.msra.mxu0 0.0
        %1019 = vmatprep.subr.mxu0 0.0
        %1020 = vmatpush1.msra.mxu0 0.0
        %1021 = vmatprep.subr.mxu0 0.0
        %1022 = vmatpush1.msra.mxu0 0.0
        %1023 = vmatprep.subr.mxu0 0.0
        %1024 = vmatpush1.msra.mxu0 0.0
        %1025 = vmatprep.subr.mxu0 0.0
        %1026 = vmatpush1.msra.mxu0 0.0
        %1027 = vmatprep.subr.mxu0 0.0
        %1028 = vmatpush1.msra.mxu0 0.0
        %1029 = vmatprep.subr.mxu0 0.0
        %1030 = vmatpush1.msra.mxu0 0.0
        %1031 = vmatprep.subr.mxu0 0.0
        %1032 = vmatpush1.msra.mxu0 0.0
        %1033 = vmatprep.subr.mxu0 0.0
        %1034 = vmatpush1.msra.mxu0 0.0
        %1035 = vmatprep.subr.mxu0 0.0
        %1036 = vmatpush1.msra.mxu0 0.0
        %1037 = vmatprep.subr.mxu0 0.0
        %1038 = vmatpush1.msra.mxu0 0.0
        %1039 = vmatprep.subr.mxu0 0.0
        %1040 = vmatpush1.msra.mxu0 0.0
        %1041 = vmatprep.subr.mxu0 0.0
        %1042 = vmatpush1.msra.mxu0 0.0
        %1043 = vmatprep.mubr.f32.mxu0 0.0
        %1044 = vmatmul.mubr.f32.gmra.mrb[0].mxu0 %v932
        %v1045 = vpop.f32.mrb[0].mxu0
        %v1046 = vadd.f32 %v928, %v1045
        %v1047 = vpop.f32.mrb[0].mxu0
        %1048 = vmatprep.mubr.f32.mxu0 0.0
        %1049 = vmatmul.mubr.f32.gmra.mrb[0].mxu0 %v935
        %v1050 = vpop.f32.mrb[0].mxu0
        %v1051 = vadd.f32 %v928, %v1050
        %v1052 = vpop.f32.mrb[0].mxu0
        %1053 = vmatprep.mubr.f32.mxu0 0.0
        %1054 = vmatmul.mubr.f32.gmra.mrb[0].mxu0 %v938
        %v1055 = vpop.f32.mrb[0].mxu0
        %v1056 = vadd.f32 %v928, %v1055
        %v1057 = vpop.f32.mrb[0].mxu0
        %1058 = vmatprep.mubr.f32.mxu0 0.0
        %1059 = vmatmul.mubr.f32.gmra.mrb[0].mxu0 %v941
        %v1060 = vpop.f32.mrb[0].mxu0
        %v1061 = vadd.f32 %v928, %v1060
        %v1062 = vpop.f32.mrb[0].mxu0
        %1063 = vmatprep.mubr.f32.mxu0 0.0
        %1064 = vmatmul.mubr.f32.gmra.mrb[0].mxu0 %v944
        %v1065 = vpop.f32.mrb[0].mxu0
        %v1066 = vadd.f32 %v928, %v1065
        %v1067 = vpop.f32.mrb[0].mxu0
        %1068 = vmatprep.mubr.f32.mxu0 0.0
        %1069 = vmatmul.mubr.f32.gmra.mrb[0].mxu0 %v947
        %v1070 = vpop.f32.mrb[0].mxu0
        %v1071 = vadd.f32 %v928, %v1070
        %v1072 = vpop.f32.mrb[0].mxu0
        %1073 = vmatprep.mubr.f32.mxu0 0.0
        %1074 = vmatmul.mubr.f32.gmra.mrb[0].mxu0 %v950
        %v1075 = vpop.f32.mrb[0].mxu0
        %v1076 = vadd.f32 %v928, %v1075
        %v1077 = vpop.f32.mrb[0].mxu0
        %1078 = vmatprep.mubr.f32.mxu0 0.0
        %1079 = vmatmul.mubr.f32.gmra.mrb[0].mxu0 %v953
        %v1080 = vpop.f32.mrb[0].mxu0
        %v1081 = vadd.f32 %v928, %v1080
        %v1082 = vpop.f32.mrb[0].mxu0
        %1083 = vmatprep.mubr.f32.mxu0 0.0
        %1084 = vmatmul.mubr.f32.gmra.mrb[0].mxu0 %v956
        %v1085 = vpop.f32.mrb[0].mxu0
        %v1086 = vadd.f32 %v928, %v1085
        %v1087 = vpop.f32.mrb[0].mxu0
        %1088 = vmatprep.mubr.f32.mxu0 0.0
        %1089 = vmatmul.mubr.f32.gmra.mrb[0].mxu0 %v959
        %v1090 = vpop.f32.mrb[0].mxu0
        %v1091 = vadd.f32 %v928, %v1090
        %v1092 = vpop.f32.mrb[0].mxu0
        %1093 = vmatprep.mubr.f32.mxu0 0.0
        %1094 = vmatmul.mubr.f32.gmra.mrb[0].mxu0 %v962
        %v1095 = vpop.f32.mrb[0].mxu0
        %v1096 = vadd.f32 %v928, %v1095
        %v1097 = vpop.f32.mrb[0].mxu0
        %1098 = vmatprep.mubr.f32.mxu0 0.0
        %1099 = vmatmul.mubr.f32.gmra.mrb[0].mxu0 %v965
        %v1100 = vpop.f32.mrb[0].mxu0
        %v1101 = vadd.f32 %v928, %v1100
        %v1102 = vpop.f32.mrb[0].mxu0
        %1103 = vmatprep.mubr.f32.mxu0 0.0
        %1104 = vmatmul.mubr.f32.gmra.mrb[0].mxu0 %v968
        %v1105 = vpop.f32.mrb[0].mxu0
        %v1106 = vadd.f32 %v928, %v1105
        %v1107 = vpop.f32.mrb[0].mxu0
        %1108 = vmatprep.mubr.f32.mxu0 0.0
        %1109 = vmatmul.mubr.f32.gmra.mrb[0].mxu0 %v971
        %v1110 = vpop.f32.mrb[0].mxu0
        %v1111 = vadd.f32 %v928, %v1110
        %v1112 = vpop.f32.mrb[0].mxu0
        %1113 = vmatprep.mubr.f32.mxu0 0.0
        %1114 = vmatmul.mubr.f32.gmra.mrb[0].mxu0 %v974
        %v1115 = vpop.f32.mrb[0].mxu0
        %v1116 = vadd.f32 %v928, %v1115
        %v1117 = vpop.f32.mrb[0].mxu0
        %1118 = vmatprep.mubr.f32.mxu0 0.0
        %1119 = vmatmul.mubr.f32.gmra.mrb[0].mxu0 %v977
        %v1120 = vpop.f32.mrb[0].mxu0
        %v1121 = vadd.f32 %v928, %v1120
        %v1122 = vpop.f32.mrb[0].mxu0
        %1123 = vdwg.mxu0
        %vm1124 = vcmp.gt.f32.partialorder %v1046, 20.0
        %vm1125 = vcmp.gt.f32.partialorder %v1051, 20.0
        %vm1126 = vcmp.gt.f32.partialorder %v1056, 20.0
        %vm1127 = vcmp.gt.f32.partialorder %v1061, 20.0
        %vm1128 = vcmp.gt.f32.partialorder %v1066, 20.0
        %vm1129 = vcmp.gt.f32.partialorder %v1071, 20.0
        %vm1130 = vcmp.gt.f32.partialorder %v1076, 20.0
        %vm1131 = vcmp.gt.f32.partialorder %v1081, 20.0
        %vm1132 = vcmp.gt.f32.partialorder %v1086, 20.0
        %vm1133 = vcmp.gt.f32.partialorder %v1091, 20.0
        %vm1134 = vcmp.gt.f32.partialorder %v1096, 20.0
        %vm1135 = vcmp.gt.f32.partialorder %v1101, 20.0
        %vm1136 = vcmp.gt.f32.partialorder %v1106, 20.0
        %vm1137 = vcmp.gt.f32.partialorder %v1111, 20.0
        %vm1138 = vcmp.gt.f32.partialorder %v1116, 20.0
        %vm1139 = vcmp.gt.f32.partialorder %v1121, 20.0
        %v1140 = vmin.f32 %v1046, 20.0
        %v1141 = vmin.f32 %v1051, 20.0
        %v1142 = vmin.f32 %v1056, 20.0
        %v1143 = vmin.f32 %v1061, 20.0
        %v1144 = vmin.f32 %v1066, 20.0
        %v1145 = vmin.f32 %v1071, 20.0
        %v1146 = vmin.f32 %v1076, 20.0
        %v1147 = vmin.f32 %v1081, 20.0
        %v1148 = vmin.f32 %v1086, 20.0
        %v1149 = vmin.f32 %v1091, 20.0
        %v1150 = vmin.f32 %v1096, 20.0
        %v1151 = vmin.f32 %v1101, 20.0
        %v1152 = vmin.f32 %v1106, 20.0
        %v1153 = vmin.f32 %v1111, 20.0
        %v1154 = vmin.f32 %v1116, 20.0
        %v1155 = vmin.f32 %v1121, 20.0
        %v1156 = vmul.f32 %v1140, 1.442695
        %v1157 = vpow.pop %v1156
        %v1158 = vmul.f32 %v1141, 1.442695
        %v1159 = vpow.pop %v1158
        %v1160 = vmul.f32 %v1142, 1.442695
        %v1161 = vpow.pop %v1160
        %v1162 = vmul.f32 %v1143, 1.442695
        %v1163 = vpow.pop %v1162
        %v1164 = vmul.f32 %v1144, 1.442695
        %v1165 = vpow.pop %v1164
        %v1166 = vmul.f32 %v1145, 1.442695
        %v1167 = vpow.pop %v1166
        %v1168 = vmul.f32 %v1146, 1.442695
        %v1169 = vpow.pop %v1168
        %v1170 = vmul.f32 %v1147, 1.442695
        %v1171 = vpow.pop %v1170
        %v1172 = vmul.f32 %v1148, 1.442695
        %v1173 = vpow.pop %v1172
        %v1174 = vmul.f32 %v1149, 1.442695
        %v1175 = vpow.pop %v1174
        %v1176 = vmul.f32 %v1150, 1.442695
        %v1177 = vpow.pop %v1176
        %v1178 = vmul.f32 %v1151, 1.442695
        %v1179 = vpow.pop %v1178
        %v1180 = vmul.f32 %v1152, 1.442695
        %v1181 = vpow.pop %v1180
        %v1182 = vmul.f32 %v1153, 1.442695
        %v1183 = vpow.pop %v1182
        %v1184 = vmul.f32 %v1154, 1.442695
        %v1185 = vpow.pop %v1184
        %v1186 = vmul.f32 %v1155, 1.442695
        %v1187 = vpow.pop %v1186
        %v1188 = vadd.f32 %v1157, 1.0
        %v1189 = vlog2.pop %v1188
        %v1190 = vmul.f32 %v1189, 0.6931472
        %v1191 = vmul.f32 -0.5, %v1157
        %v1192 = vadd.f32 %v1191, 1.0
        %v1193 = vmul.f32 %v1192, %v1157
        %v1194 = vand.u32 2147483647, %v1157
        %vm1195 = vcmp.lt.f32.partialorder %v1194, 0.0004427343
        %v1196 = vsel %vm1195, %v1193, %v1190
        %v1197 = vadd.f32 %v1159, 1.0
        %v1198 = vlog2.pop %v1197
        %v1199 = vmul.f32 %v1198, 0.6931472
        %v1200 = vmul.f32 -0.5, %v1159
        %v1201 = vadd.f32 %v1200, 1.0
        %v1202 = vmul.f32 %v1201, %v1159
        %v1203 = vand.u32 2147483647, %v1159
        %vm1204 = vcmp.lt.f32.partialorder %v1203, 0.0004427343
        %v1205 = vsel %vm1204, %v1202, %v1199
        %v1206 = vadd.f32 %v1161, 1.0
        %v1207 = vlog2.pop %v1206
        %v1208 = vmul.f32 %v1207, 0.6931472
        %v1209 = vmul.f32 -0.5, %v1161
        %v1210 = vadd.f32 %v1209, 1.0
        %v1211 = vmul.f32 %v1210, %v1161
        %v1212 = vand.u32 2147483647, %v1161
        %vm1213 = vcmp.lt.f32.partialorder %v1212, 0.0004427343
        %v1214 = vsel %vm1213, %v1211, %v1208
        %v1215 = vadd.f32 %v1163, 1.0
        %v1216 = vlog2.pop %v1215
        %v1217 = vmul.f32 %v1216, 0.6931472
        %v1218 = vmul.f32 -0.5, %v1163
        %v1219 = vadd.f32 %v1218, 1.0
        %v1220 = vmul.f32 %v1219, %v1163
        %v1221 = vand.u32 2147483647, %v1163
        %vm1222 = vcmp.lt.f32.partialorder %v1221, 0.0004427343
        %v1223 = vsel %vm1222, %v1220, %v1217
        %v1224 = vadd.f32 %v1165, 1.0
        %v1225 = vlog2.pop %v1224
        %v1226 = vmul.f32 %v1225, 0.6931472
        %v1227 = vmul.f32 -0.5, %v1165
        %v1228 = vadd.f32 %v1227, 1.0
        %v1229 = vmul.f32 %v1228, %v1165
        %v1230 = vand.u32 2147483647, %v1165
        %vm1231 = vcmp.lt.f32.partialorder %v1230, 0.0004427343
        %v1232 = vsel %vm1231, %v1229, %v1226
        %v1233 = vadd.f32 %v1167, 1.0
        %v1234 = vlog2.pop %v1233
        %v1235 = vmul.f32 %v1234, 0.6931472
        %v1236 = vmul.f32 -0.5, %v1167
        %v1237 = vadd.f32 %v1236, 1.0
        %v1238 = vmul.f32 %v1237, %v1167
        %v1239 = vand.u32 2147483647, %v1167
        %vm1240 = vcmp.lt.f32.partialorder %v1239, 0.0004427343
        %v1241 = vsel %vm1240, %v1238, %v1235
        %v1242 = vadd.f32 %v1169, 1.0
        %v1243 = vlog2.pop %v1242
        %v1244 = vmul.f32 %v1243, 0.6931472
        %v1245 = vmul.f32 -0.5, %v1169
        %v1246 = vadd.f32 %v1245, 1.0
        %v1247 = vmul.f32 %v1246, %v1169
        %v1248 = vand.u32 2147483647, %v1169
        %vm1249 = vcmp.lt.f32.partialorder %v1248, 0.0004427343
        %v1250 = vsel %vm1249, %v1247, %v1244
        %v1251 = vadd.f32 %v1171, 1.0
        %v1252 = vlog2.pop %v1251
        %v1253 = vmul.f32 %v1252, 0.6931472
        %v1254 = vmul.f32 -0.5, %v1171
        %v1255 = vadd.f32 %v1254, 1.0
        %v1256 = vmul.f32 %v1255, %v1171
        %v1257 = vand.u32 2147483647, %v1171
        %vm1258 = vcmp.lt.f32.partialorder %v1257, 0.0004427343
        %v1259 = vsel %vm1258, %v1256, %v1253
        %v1260 = vadd.f32 %v1173, 1.0
        %v1261 = vlog2.pop %v1260
        %v1262 = vmul.f32 %v1261, 0.6931472
        %v1263 = vmul.f32 -0.5, %v1173
        %v1264 = vadd.f32 %v1263, 1.0
        %v1265 = vmul.f32 %v1264, %v1173
        %v1266 = vand.u32 2147483647, %v1173
        %vm1267 = vcmp.lt.f32.partialorder %v1266, 0.0004427343
        %v1268 = vsel %vm1267, %v1265, %v1262
        %v1269 = vadd.f32 %v1175, 1.0
        %v1270 = vlog2.pop %v1269
        %v1271 = vmul.f32 %v1270, 0.6931472
        %v1272 = vmul.f32 -0.5, %v1175
        %v1273 = vadd.f32 %v1272, 1.0
        %v1274 = vmul.f32 %v1273, %v1175
        %v1275 = vand.u32 2147483647, %v1175
        %vm1276 = vcmp.lt.f32.partialorder %v1275, 0.0004427343
        %v1277 = vsel %vm1276, %v1274, %v1271
        %v1278 = vadd.f32 %v1177, 1.0
        %v1279 = vlog2.pop %v1278
        %v1280 = vmul.f32 %v1279, 0.6931472
        %v1281 = vmul.f32 -0.5, %v1177
        %v1282 = vadd.f32 %v1281, 1.0
        %v1283 = vmul.f32 %v1282, %v1177
        %v1284 = vand.u32 2147483647, %v1177
        %vm1285 = vcmp.lt.f32.partialorder %v1284, 0.0004427343
        %v1286 = vsel %vm1285, %v1283, %v1280
        %v1287 = vadd.f32 %v1179, 1.0
        %v1288 = vlog2.pop %v1287
        %v1289 = vmul.f32 %v1288, 0.6931472
        %v1290 = vmul.f32 -0.5, %v1179
        %v1291 = vadd.f32 %v1290, 1.0
        %v1292 = vmul.f32 %v1291, %v1179
        %v1293 = vand.u32 2147483647, %v1179
        %vm1294 = vcmp.lt.f32.partialorder %v1293, 0.0004427343
        %v1295 = vsel %vm1294, %v1292, %v1289
        %v1296 = vadd.f32 %v1181, 1.0
        %v1297 = vlog2.pop %v1296
        %v1298 = vmul.f32 %v1297, 0.6931472
        %v1299 = vmul.f32 -0.5, %v1181
        %v1300 = vadd.f32 %v1299, 1.0
        %v1301 = vmul.f32 %v1300, %v1181
        %v1302 = vand.u32 2147483647, %v1181
        %vm1303 = vcmp.lt.f32.partialorder %v1302, 0.0004427343
        %v1304 = vsel %vm1303, %v1301, %v1298
        %v1305 = vadd.f32 %v1183, 1.0
        %v1306 = vlog2.pop %v1305
        %v1307 = vmul.f32 %v1306, 0.6931472
        %v1308 = vmul.f32 -0.5, %v1183
        %v1309 = vadd.f32 %v1308, 1.0
        %v1310 = vmul.f32 %v1309, %v1183
        %v1311 = vand.u32 2147483647, %v1183
        %vm1312 = vcmp.lt.f32.partialorder %v1311, 0.0004427343
        %v1313 = vsel %vm1312, %v1310, %v1307
        %v1314 = vadd.f32 %v1185, 1.0
        %v1315 = vlog2.pop %v1314
        %v1316 = vmul.f32 %v1315, 0.6931472
        %v1317 = vmul.f32 -0.5, %v1185
        %v1318 = vadd.f32 %v1317, 1.0
        %v1319 = vmul.f32 %v1318, %v1185
        %v1320 = vand.u32 2147483647, %v1185
        %vm1321 = vcmp.lt.f32.partialorder %v1320, 0.0004427343
        %v1322 = vsel %vm1321, %v1319, %v1316
        %v1323 = vadd.f32 %v1187, 1.0
        %v1324 = vlog2.pop %v1323
        %v1325 = vmul.f32 %v1324, 0.6931472
        %v1326 = vmul.f32 -0.5, %v1187
        %v1327 = vadd.f32 %v1326, 1.0
        %v1328 = vmul.f32 %v1327, %v1187
        %v1329 = vand.u32 2147483647, %v1187
        %vm1330 = vcmp.lt.f32.partialorder %v1329, 0.0004427343
        %v1331 = vsel %vm1330, %v1328, %v1325
        %v1332 = vsel %vm1124, %v1046, %v1196
        %v1333 = vsel %vm1125, %v1051, %v1205
        %v1334 = vsel %vm1126, %v1056, %v1214
        %v1335 = vsel %vm1127, %v1061, %v1223
        %v1336 = vsel %vm1128, %v1066, %v1232
        %v1337 = vsel %vm1129, %v1071, %v1241
        %v1338 = vsel %vm1130, %v1076, %v1250
        %v1339 = vsel %vm1131, %v1081, %v1259
        %v1340 = vsel %vm1132, %v1086, %v1268
        %v1341 = vsel %vm1133, %v1091, %v1277
        %v1342 = vsel %vm1134, %v1096, %v1286
        %v1343 = vsel %vm1135, %v1101, %v1295
        %v1344 = vsel %vm1136, %v1106, %v1304
        %v1345 = vsel %vm1137, %v1111, %v1313
        %v1346 = vsel %vm1138, %v1116, %v1322
        %v1347 = vsel %vm1139, %v1121, %v1331
        %v1348 = vld [vmem:[%s3] sm:$0xff]
        %v1349 = vld [vmem:[%s3 + $0x8] sm:$0xff]
        %v1350 = vld [vmem:[%s3 + $0x10] sm:$0xff]
        %v1351 = vld [vmem:[%s3 + $0x18] sm:$0xff]
        %v1352 = vld [vmem:[%s9] sm:$0x1]
        %v1354 = vlaneseq
        %v1355 = vshrl.u32 %v1354, 7
        %v1356 = vsub.s32 0, %v1355
        %v1357 = vrot.slane %v1352, %v1356
        %vm1359 = vcmask 261120
        %v1361 = vsel %vm1359, %v1332, 0
        %v1364 = vsel %vm1359, %v1333, 0
        %v1367 = vsel %vm1359, %v1334, 0
        %v1370 = vsel %vm1359, %v1335, 0
        %v1373 = vsel %vm1359, %v1336, 0
        %v1376 = vsel %vm1359, %v1337, 0
        %v1379 = vsel %vm1359, %v1338, 0
        %v1382 = vsel %vm1359, %v1339, 0
        %v1385 = vsel %vm1359, %v1340, 0
        %v1388 = vsel %vm1359, %v1341, 0
        %v1391 = vsel %vm1359, %v1342, 0
        %v1394 = vsel %vm1359, %v1343, 0
        %v1397 = vsel %vm1359, %v1344, 0
        %v1400 = vsel %vm1359, %v1345, 0
        %v1403 = vsel %vm1359, %v1346, 0
        %v1406 = vsel %vm1359, %v1347, 0
        %1408 = vmatprep.subr.mxu0 0.0
        %1409 = vmatpush1.msra.mxu0 %v1348
        %1410 = vmatprep.subr.mxu0 0.0
        %1411 = vmatpush1.msra.mxu0 %v1349
        %1412 = vmatprep.subr.mxu0 0.0
        %1413 = vmatpush1.msra.mxu0 %v1350
        %1414 = vmatprep.subr.mxu0 0.0
        %1415 = vmatpush1.msra.mxu0 %v1351
        %1416 = vmatprep.subr.mxu0 0.0
        %1417 = vmatpush1.msra.mxu0 0.0
        %1418 = vmatprep.subr.mxu0 0.0
        %1419 = vmatpush1.msra.mxu0 0.0
        %1420 = vmatprep.subr.mxu0 0.0
        %1421 = vmatpush1.msra.mxu0 0.0
        %1422 = vmatprep.subr.mxu0 0.0
        %1423 = vmatpush1.msra.mxu0 0.0
        %1424 = vmatprep.subr.mxu0 0.0
        %1425 = vmatpush1.msra.mxu0 0.0
        %1426 = vmatprep.subr.mxu0 0.0
        %1427 = vmatpush1.msra.mxu0 0.0
        %1428 = vmatprep.subr.mxu0 0.0
        %1429 = vmatpush1.msra.mxu0 0.0
        %1430 = vmatprep.subr.mxu0 0.0
        %1431 = vmatpush1.msra.mxu0 0.0
        %1432 = vmatprep.subr.mxu0 0.0
        %1433 = vmatpush1.msra.mxu0 0.0
        %1434 = vmatprep.subr.mxu0 0.0
        %1435 = vmatpush1.msra.mxu0 0.0
        %1436 = vmatprep.subr.mxu0 0.0
        %1437 = vmatpush1.msra.mxu0 0.0
        %1438 = vmatprep.subr.mxu0 0.0
        %1439 = vmatpush1.msra.mxu0 0.0
        %1440 = vmatprep.subr.mxu0 0.0
        %1441 = vmatpush1.msra.mxu0 0.0
        %1442 = vmatprep.subr.mxu0 0.0
        %1443 = vmatpush1.msra.mxu0 0.0
        %1444 = vmatprep.subr.mxu0 0.0
        %1445 = vmatpush1.msra.mxu0 0.0
        %1446 = vmatprep.subr.mxu0 0.0
        %1447 = vmatpush1.msra.mxu0 0.0
        %1448 = vmatprep.subr.mxu0 0.0
        %1449 = vmatpush1.msra.mxu0 0.0
        %1450 = vmatprep.subr.mxu0 0.0
        %1451 = vmatpush1.msra.mxu0 0.0
        %1452 = vmatprep.subr.mxu0 0.0
        %1453 = vmatpush1.msra.mxu0 0.0
        %1454 = vmatprep.subr.mxu0 0.0
        %1455 = vmatpush1.msra.mxu0 0.0
        %1456 = vmatprep.subr.mxu0 0.0
        %1457 = vmatpush1.msra.mxu0 0.0
        %1458 = vmatprep.subr.mxu0 0.0
        %1459 = vmatpush1.msra.mxu0 0.0
        %1460 = vmatprep.subr.mxu0 0.0
        %1461 = vmatpush1.msra.mxu0 0.0
        %1462 = vmatprep.subr.mxu0 0.0
        %1463 = vmatpush1.msra.mxu0 0.0
        %1464 = vmatprep.subr.mxu0 0.0
        %1465 = vmatpush1.msra.mxu0 0.0
        %1466 = vmatprep.subr.mxu0 0.0
        %1467 = vmatpush1.msra.mxu0 0.0
        %1468 = vmatprep.subr.mxu0 0.0
        %1469 = vmatpush1.msra.mxu0 0.0
        %1470 = vmatprep.subr.mxu0 0.0
        %1471 = vmatpush1.msra.mxu0 0.0
        %1472 = vmatprep.mubr.f32.mxu0 0.0
        %1473 = vmatmul.mubr.f32.gmra.mrb[0].mxu0 %v1361
        %v1474 = vpop.f32.mrb[0].mxu0
        %v1475 = vadd.f32 %v1357, %v1474
        %v1476 = vpop.f32.mrb[0].mxu0
        %1477 = vmatprep.mubr.f32.mxu0 0.0
        %1478 = vmatmul.mubr.f32.gmra.mrb[0].mxu0 %v1364
        %v1479 = vpop.f32.mrb[0].mxu0
        %v1480 = vadd.f32 %v1357, %v1479
        %v1481 = vpop.f32.mrb[0].mxu0
        %1482 = vmatprep.mubr.f32.mxu0 0.0
        %1483 = vmatmul.mubr.f32.gmra.mrb[0].mxu0 %v1367
        %v1484 = vpop.f32.mrb[0].mxu0
        %v1485 = vadd.f32 %v1357, %v1484
        %v1486 = vpop.f32.mrb[0].mxu0
        %1487 = vmatprep.mubr.f32.mxu0 0.0
        %1488 = vmatmul.mubr.f32.gmra.mrb[0].mxu0 %v1370
        %v1489 = vpop.f32.mrb[0].mxu0
        %v1490 = vadd.f32 %v1357, %v1489
        %v1491 = vpop.f32.mrb[0].mxu0
        %1492 = vmatprep.mubr.f32.mxu0 0.0
        %1493 = vmatmul.mubr.f32.gmra.mrb[0].mxu0 %v1373
        %v1494 = vpop.f32.mrb[0].mxu0
        %v1495 = vadd.f32 %v1357, %v1494
        %v1496 = vpop.f32.mrb[0].mxu0
        %1497 = vmatprep.mubr.f32.mxu0 0.0
        %1498 = vmatmul.mubr.f32.gmra.mrb[0].mxu0 %v1376
        %v1499 = vpop.f32.mrb[0].mxu0
        %v1500 = vadd.f32 %v1357, %v1499
        %v1501 = vpop.f32.mrb[0].mxu0
        %1502 = vmatprep.mubr.f32.mxu0 0.0
        %1503 = vmatmul.mubr.f32.gmra.mrb[0].mxu0 %v1379
        %v1504 = vpop.f32.mrb[0].mxu0
        %v1505 = vadd.f32 %v1357, %v1504
        %v1506 = vpop.f32.mrb[0].mxu0
        %1507 = vmatprep.mubr.f32.mxu0 0.0
        %1508 = vmatmul.mubr.f32.gmra.mrb[0].mxu0 %v1382
        %v1509 = vpop.f32.mrb[0].mxu0
        %v1510 = vadd.f32 %v1357, %v1509
        %v1511 = vpop.f32.mrb[0].mxu0
        %1512 = vmatprep.mubr.f32.mxu0 0.0
        %1513 = vmatmul.mubr.f32.gmra.mrb[0].mxu0 %v1385
        %v1514 = vpop.f32.mrb[0].mxu0
        %v1515 = vadd.f32 %v1357, %v1514
        %v1516 = vpop.f32.mrb[0].mxu0
        %1517 = vmatprep.mubr.f32.mxu0 0.0
        %1518 = vmatmul.mubr.f32.gmra.mrb[0].mxu0 %v1388
        %v1519 = vpop.f32.mrb[0].mxu0
        %v1520 = vadd.f32 %v1357, %v1519
        %v1521 = vpop.f32.mrb[0].mxu0
        %1522 = vmatprep.mubr.f32.mxu0 0.0
        %1523 = vmatmul.mubr.f32.gmra.mrb[0].mxu0 %v1391
        %v1524 = vpop.f32.mrb[0].mxu0
        %v1525 = vadd.f32 %v1357, %v1524
        %v1526 = vpop.f32.mrb[0].mxu0
        %1527 = vmatprep.mubr.f32.mxu0 0.0
        %1528 = vmatmul.mubr.f32.gmra.mrb[0].mxu0 %v1394
        %v1529 = vpop.f32.mrb[0].mxu0
        %v1530 = vadd.f32 %v1357, %v1529
        %v1531 = vpop.f32.mrb[0].mxu0
        %1532 = vmatprep.mubr.f32.mxu0 0.0
        %1533 = vmatmul.mubr.f32.gmra.mrb[0].mxu0 %v1397
        %v1534 = vpop.f32.mrb[0].mxu0
        %v1535 = vadd.f32 %v1357, %v1534
        %v1536 = vpop.f32.mrb[0].mxu0
        %1537 = vmatprep.mubr.f32.mxu0 0.0
        %1538 = vmatmul.mubr.f32.gmra.mrb[0].mxu0 %v1400
        %v1539 = vpop.f32.mrb[0].mxu0
        %v1540 = vadd.f32 %v1357, %v1539
        %v1541 = vpop.f32.mrb[0].mxu0
        %1542 = vmatprep.mubr.f32.mxu0 0.0
        %1543 = vmatmul.mubr.f32.gmra.mrb[0].mxu0 %v1403
        %v1544 = vpop.f32.mrb[0].mxu0
        %v1545 = vadd.f32 %v1357, %v1544
        %v1546 = vpop.f32.mrb[0].mxu0
        %1547 = vmatprep.mubr.f32.mxu0 0.0
        %1548 = vmatmul.mubr.f32.gmra.mrb[0].mxu0 %v1406
        %v1549 = vpop.f32.mrb[0].mxu0
        %v1550 = vadd.f32 %v1357, %v1549
        %v1551 = vpop.f32.mrb[0].mxu0
        %1552 = vdwg.mxu0
        %v1553 = vld [vmem:[%s4] sm:$0xff]
        %v1554 = vld [vmem:[%s10] sm:$0x1]
        %v1556 = vlaneseq
        %v1557 = vshrl.u32 %v1556, 7
        %v1558 = vsub.s32 0, %v1557
        %v1559 = vrot.slane %v1554, %v1558
        %vm1561 = vcmask 64512
        %v1563 = vsel %vm1561, %v1475, 0
        %v1566 = vsel %vm1561, %v1480, 0
        %v1569 = vsel %vm1561, %v1485, 0
        %v1572 = vsel %vm1561, %v1490, 0
        %v1575 = vsel %vm1561, %v1495, 0
        %v1578 = vsel %vm1561, %v1500, 0
        %v1581 = vsel %vm1561, %v1505, 0
        %v1584 = vsel %vm1561, %v1510, 0
        %v1587 = vsel %vm1561, %v1515, 0
        %v1590 = vsel %vm1561, %v1520, 0
        %v1593 = vsel %vm1561, %v1525, 0
        %v1596 = vsel %vm1561, %v1530, 0
        %v1599 = vsel %vm1561, %v1535, 0
        %v1602 = vsel %vm1561, %v1540, 0
        %v1605 = vsel %vm1561, %v1545, 0
        %v1608 = vsel %vm1561, %v1550, 0
        %1610 = vmatprep.subr.mxu0 0.0
        %1611 = vmatpush1.msra.mxu0 %v1553
        %1612 = vmatprep.subr.mxu0 0.0
        %1613 = vmatpush1.msra.mxu0 0.0
        %1614 = vmatprep.subr.mxu0 0.0
        %1615 = vmatpush1.msra.mxu0 0.0
        %1616 = vmatprep.subr.mxu0 0.0
        %1617 = vmatpush1.msra.mxu0 0.0
        %1618 = vmatprep.subr.mxu0 0.0
        %1619 = vmatpush1.msra.mxu0 0.0
        %1620 = vmatprep.subr.mxu0 0.0
        %1621 = vmatpush1.msra.mxu0 0.0
        %1622 = vmatprep.subr.mxu0 0.0
        %1623 = vmatpush1.msra.mxu0 0.0
        %1624 = vmatprep.subr.mxu0 0.0
        %1625 = vmatpush1.msra.mxu0 0.0
        %1626 = vmatprep.subr.mxu0 0.0
        %1627 = vmatpush1.msra.mxu0 0.0
        %1628 = vmatprep.subr.mxu0 0.0
        %1629 = vmatpush1.msra.mxu0 0.0
        %1630 = vmatprep.subr.mxu0 0.0
        %1631 = vmatpush1.msra.mxu0 0.0
        %1632 = vmatprep.subr.mxu0 0.0
        %1633 = vmatpush1.msra.mxu0 0.0
        %1634 = vmatprep.subr.mxu0 0.0
        %1635 = vmatpush1.msra.mxu0 0.0
        %1636 = vmatprep.subr.mxu0 0.0
        %1637 = vmatpush1.msra.mxu0 0.0
        %1638 = vmatprep.subr.mxu0 0.0
        %1639 = vmatpush1.msra.mxu0 0.0
        %1640 = vmatprep.subr.mxu0 0.0
        %1641 = vmatpush1.msra.mxu0 0.0
        %1642 = vmatprep.subr.mxu0 0.0
        %1643 = vmatpush1.msra.mxu0 0.0
        %1644 = vmatprep.subr.mxu0 0.0
        %1645 = vmatpush1.msra.mxu0 0.0
        %1646 = vmatprep.subr.mxu0 0.0
        %1647 = vmatpush1.msra.mxu0 0.0
        %1648 = vmatprep.subr.mxu0 0.0
        %1649 = vmatpush1.msra.mxu0 0.0
        %1650 = vmatprep.subr.mxu0 0.0
        %1651 = vmatpush1.msra.mxu0 0.0
        %1652 = vmatprep.subr.mxu0 0.0
        %1653 = vmatpush1.msra.mxu0 0.0
        %1654 = vmatprep.subr.mxu0 0.0
        %1655 = vmatpush1.msra.mxu0 0.0
        %1656 = vmatprep.subr.mxu0 0.0
        %1657 = vmatpush1.msra.mxu0 0.0
        %1658 = vmatprep.subr.mxu0 0.0
        %1659 = vmatpush1.msra.mxu0 0.0
        %1660 = vmatprep.subr.mxu0 0.0
        %1661 = vmatpush1.msra.mxu0 0.0
        %1662 = vmatprep.subr.mxu0 0.0
        %1663 = vmatpush1.msra.mxu0 0.0
        %1664 = vmatprep.subr.mxu0 0.0
        %1665 = vmatpush1.msra.mxu0 0.0
        %1666 = vmatprep.subr.mxu0 0.0
        %1667 = vmatpush1.msra.mxu0 0.0
        %1668 = vmatprep.subr.mxu0 0.0
        %1669 = vmatpush1.msra.mxu0 0.0
        %1670 = vmatprep.subr.mxu0 0.0
        %1671 = vmatpush1.msra.mxu0 0.0
        %1672 = vmatprep.subr.mxu0 0.0
        %1673 = vmatpush1.msra.mxu0 0.0
        %1674 = vmatprep.mubr.f32.mxu0 0.0
        %1675 = vmatmul.mubr.f32.gmra.mrb[0].mxu0 %v1563
        %v1676 = vpop.f32.mrb[0].mxu0
        %v1677 = vadd.f32 %v1559, %v1676
        %v1678 = vpop.f32.mrb[0].mxu0
        %1679 = vmatprep.mubr.f32.mxu0 0.0
        %1680 = vmatmul.mubr.f32.gmra.mrb[0].mxu0 %v1566
        %v1681 = vpop.f32.mrb[0].mxu0
        %v1682 = vadd.f32 %v1559, %v1681
        %v1683 = vpop.f32.mrb[0].mxu0
        %1684 = vmatprep.mubr.f32.mxu0 0.0
        %1685 = vmatmul.mubr.f32.gmra.mrb[0].mxu0 %v1569
        %v1686 = vpop.f32.mrb[0].mxu0
        %v1687 = vadd.f32 %v1559, %v1686
        %v1688 = vpop.f32.mrb[0].mxu0
        %1689 = vmatprep.mubr.f32.mxu0 0.0
        %1690 = vmatmul.mubr.f32.gmra.mrb[0].mxu0 %v1572
        %v1691 = vpop.f32.mrb[0].mxu0
        %v1692 = vadd.f32 %v1559, %v1691
        %v1693 = vpop.f32.mrb[0].mxu0
        %1694 = vmatprep.mubr.f32.mxu0 0.0
        %1695 = vmatmul.mubr.f32.gmra.mrb[0].mxu0 %v1575
        %v1696 = vpop.f32.mrb[0].mxu0
        %v1697 = vadd.f32 %v1559, %v1696
        %v1698 = vpop.f32.mrb[0].mxu0
        %1699 = vmatprep.mubr.f32.mxu0 0.0
        %1700 = vmatmul.mubr.f32.gmra.mrb[0].mxu0 %v1578
        %v1701 = vpop.f32.mrb[0].mxu0
        %v1702 = vadd.f32 %v1559, %v1701
        %v1703 = vpop.f32.mrb[0].mxu0
        %1704 = vmatprep.mubr.f32.mxu0 0.0
        %1705 = vmatmul.mubr.f32.gmra.mrb[0].mxu0 %v1581
        %v1706 = vpop.f32.mrb[0].mxu0
        %v1707 = vadd.f32 %v1559, %v1706
        %v1708 = vpop.f32.mrb[0].mxu0
        %1709 = vmatprep.mubr.f32.mxu0 0.0
        %1710 = vmatmul.mubr.f32.gmra.mrb[0].mxu0 %v1584
        %v1711 = vpop.f32.mrb[0].mxu0
        %v1712 = vadd.f32 %v1559, %v1711
        %v1713 = vpop.f32.mrb[0].mxu0
        %1714 = vmatprep.mubr.f32.mxu0 0.0
        %1715 = vmatmul.mubr.f32.gmra.mrb[0].mxu0 %v1587
        %v1716 = vpop.f32.mrb[0].mxu0
        %v1717 = vadd.f32 %v1559, %v1716
        %v1718 = vpop.f32.mrb[0].mxu0
        %1719 = vmatprep.mubr.f32.mxu0 0.0
        %1720 = vmatmul.mubr.f32.gmra.mrb[0].mxu0 %v1590
        %v1721 = vpop.f32.mrb[0].mxu0
        %v1722 = vadd.f32 %v1559, %v1721
        %v1723 = vpop.f32.mrb[0].mxu0
        %1724 = vmatprep.mubr.f32.mxu0 0.0
        %1725 = vmatmul.mubr.f32.gmra.mrb[0].mxu0 %v1593
        %v1726 = vpop.f32.mrb[0].mxu0
        %v1727 = vadd.f32 %v1559, %v1726
        %v1728 = vpop.f32.mrb[0].mxu0
        %1729 = vmatprep.mubr.f32.mxu0 0.0
        %1730 = vmatmul.mubr.f32.gmra.mrb[0].mxu0 %v1596
        %v1731 = vpop.f32.mrb[0].mxu0
        %v1732 = vadd.f32 %v1559, %v1731
        %v1733 = vpop.f32.mrb[0].mxu0
        %1734 = vmatprep.mubr.f32.mxu0 0.0
        %1735 = vmatmul.mubr.f32.gmra.mrb[0].mxu0 %v1599
        %v1736 = vpop.f32.mrb[0].mxu0
        %v1737 = vadd.f32 %v1559, %v1736
        %v1738 = vpop.f32.mrb[0].mxu0
        %1739 = vmatprep.mubr.f32.mxu0 0.0
        %1740 = vmatmul.mubr.f32.gmra.mrb[0].mxu0 %v1602
        %v1741 = vpop.f32.mrb[0].mxu0
        %v1742 = vadd.f32 %v1559, %v1741
        %v1743 = vpop.f32.mrb[0].mxu0
        %1744 = vmatprep.mubr.f32.mxu0 0.0
        %1745 = vmatmul.mubr.f32.gmra.mrb[0].mxu0 %v1605
        %v1746 = vpop.f32.mrb[0].mxu0
        %v1747 = vadd.f32 %v1559, %v1746
        %v1748 = vpop.f32.mrb[0].mxu0
        %1749 = vmatprep.mubr.f32.mxu0 0.0
        %1750 = vmatmul.mubr.f32.gmra.mrb[0].mxu0 %v1608
        %v1751 = vpop.f32.mrb[0].mxu0
        %v1752 = vadd.f32 %v1559, %v1751
        %v1753 = vpop.f32.mrb[0].mxu0
        %1754 = vdwg.mxu0
        %vm1755 = vcmp.gt.f32.partialorder %v1677, 20.0
        %vm1756 = vcmp.gt.f32.partialorder %v1682, 20.0
        %vm1757 = vcmp.gt.f32.partialorder %v1687, 20.0
        %vm1758 = vcmp.gt.f32.partialorder %v1692, 20.0
        %vm1759 = vcmp.gt.f32.partialorder %v1697, 20.0
        %vm1760 = vcmp.gt.f32.partialorder %v1702, 20.0
        %vm1761 = vcmp.gt.f32.partialorder %v1707, 20.0
        %vm1762 = vcmp.gt.f32.partialorder %v1712, 20.0
        %vm1763 = vcmp.gt.f32.partialorder %v1717, 20.0
        %vm1764 = vcmp.gt.f32.partialorder %v1722, 20.0
        %vm1765 = vcmp.gt.f32.partialorder %v1727, 20.0
        %vm1766 = vcmp.gt.f32.partialorder %v1732, 20.0
        %vm1767 = vcmp.gt.f32.partialorder %v1737, 20.0
        %vm1768 = vcmp.gt.f32.partialorder %v1742, 20.0
        %vm1769 = vcmp.gt.f32.partialorder %v1747, 20.0
        %vm1770 = vcmp.gt.f32.partialorder %v1752, 20.0
        %v1771 = vmin.f32 %v1677, 20.0
        %v1772 = vmin.f32 %v1682, 20.0
        %v1773 = vmin.f32 %v1687, 20.0
        %v1774 = vmin.f32 %v1692, 20.0
        %v1775 = vmin.f32 %v1697, 20.0
        %v1776 = vmin.f32 %v1702, 20.0
        %v1777 = vmin.f32 %v1707, 20.0
        %v1778 = vmin.f32 %v1712, 20.0
        %v1779 = vmin.f32 %v1717, 20.0
        %v1780 = vmin.f32 %v1722, 20.0
        %v1781 = vmin.f32 %v1727, 20.0
        %v1782 = vmin.f32 %v1732, 20.0
        %v1783 = vmin.f32 %v1737, 20.0
        %v1784 = vmin.f32 %v1742, 20.0
        %v1785 = vmin.f32 %v1747, 20.0
        %v1786 = vmin.f32 %v1752, 20.0
        %v1787 = vmul.f32 %v1771, 1.442695
        %v1788 = vpow.pop %v1787
        %v1789 = vmul.f32 %v1772, 1.442695
        %v1790 = vpow.pop %v1789
        %v1791 = vmul.f32 %v1773, 1.442695
        %v1792 = vpow.pop %v1791
        %v1793 = vmul.f32 %v1774, 1.442695
        %v1794 = vpow.pop %v1793
        %v1795 = vmul.f32 %v1775, 1.442695
        %v1796 = vpow.pop %v1795
        %v1797 = vmul.f32 %v1776, 1.442695
        %v1798 = vpow.pop %v1797
        %v1799 = vmul.f32 %v1777, 1.442695
        %v1800 = vpow.pop %v1799
        %v1801 = vmul.f32 %v1778, 1.442695
        %v1802 = vpow.pop %v1801
        %v1803 = vmul.f32 %v1779, 1.442695
        %v1804 = vpow.pop %v1803
        %v1805 = vmul.f32 %v1780, 1.442695
        %v1806 = vpow.pop %v1805
        %v1807 = vmul.f32 %v1781, 1.442695
        %v1808 = vpow.pop %v1807
        %v1809 = vmul.f32 %v1782, 1.442695
        %v1810 = vpow.pop %v1809
        %v1811 = vmul.f32 %v1783, 1.442695
        %v1812 = vpow.pop %v1811
        %v1813 = vmul.f32 %v1784, 1.442695
        %v1814 = vpow.pop %v1813
        %v1815 = vmul.f32 %v1785, 1.442695
        %v1816 = vpow.pop %v1815
        %v1817 = vmul.f32 %v1786, 1.442695
        %v1818 = vpow.pop %v1817
        %v1819 = vadd.f32 %v1788, 1.0
        %v1820 = vlog2.pop %v1819
        %v1821 = vmul.f32 %v1820, 0.6931472
        %v1822 = vmul.f32 -0.5, %v1788
        %v1823 = vadd.f32 %v1822, 1.0
        %v1824 = vmul.f32 %v1823, %v1788
        %v1825 = vand.u32 2147483647, %v1788
        %vm1826 = vcmp.lt.f32.partialorder %v1825, 0.0004427343
        %v1827 = vsel %vm1826, %v1824, %v1821
        %v1828 = vadd.f32 %v1790, 1.0
        %v1829 = vlog2.pop %v1828
        %v1830 = vmul.f32 %v1829, 0.6931472
        %v1831 = vmul.f32 -0.5, %v1790
        %v1832 = vadd.f32 %v1831, 1.0
        %v1833 = vmul.f32 %v1832, %v1790
        %v1834 = vand.u32 2147483647, %v1790
        %vm1835 = vcmp.lt.f32.partialorder %v1834, 0.0004427343
        %v1836 = vsel %vm1835, %v1833, %v1830
        %v1837 = vadd.f32 %v1792, 1.0
        %v1838 = vlog2.pop %v1837
        %v1839 = vmul.f32 %v1838, 0.6931472
        %v1840 = vmul.f32 -0.5, %v1792
        %v1841 = vadd.f32 %v1840, 1.0
        %v1842 = vmul.f32 %v1841, %v1792
        %v1843 = vand.u32 2147483647, %v1792
        %vm1844 = vcmp.lt.f32.partialorder %v1843, 0.0004427343
        %v1845 = vsel %vm1844, %v1842, %v1839
        %v1846 = vadd.f32 %v1794, 1.0
        %v1847 = vlog2.pop %v1846
        %v1848 = vmul.f32 %v1847, 0.6931472
        %v1849 = vmul.f32 -0.5, %v1794
        %v1850 = vadd.f32 %v1849, 1.0
        %v1851 = vmul.f32 %v1850, %v1794
        %v1852 = vand.u32 2147483647, %v1794
        %vm1853 = vcmp.lt.f32.partialorder %v1852, 0.0004427343
        %v1854 = vsel %vm1853, %v1851, %v1848
        %v1855 = vadd.f32 %v1796, 1.0
        %v1856 = vlog2.pop %v1855
        %v1857 = vmul.f32 %v1856, 0.6931472
        %v1858 = vmul.f32 -0.5, %v1796
        %v1859 = vadd.f32 %v1858, 1.0
        %v1860 = vmul.f32 %v1859, %v1796
        %v1861 = vand.u32 2147483647, %v1796
        %vm1862 = vcmp.lt.f32.partialorder %v1861, 0.0004427343
        %v1863 = vsel %vm1862, %v1860, %v1857
        %v1864 = vadd.f32 %v1798, 1.0
        %v1865 = vlog2.pop %v1864
        %v1866 = vmul.f32 %v1865, 0.6931472
        %v1867 = vmul.f32 -0.5, %v1798
        %v1868 = vadd.f32 %v1867, 1.0
        %v1869 = vmul.f32 %v1868, %v1798
        %v1870 = vand.u32 2147483647, %v1798
        %vm1871 = vcmp.lt.f32.partialorder %v1870, 0.0004427343
        %v1872 = vsel %vm1871, %v1869, %v1866
        %v1873 = vadd.f32 %v1800, 1.0
        %v1874 = vlog2.pop %v1873
        %v1875 = vmul.f32 %v1874, 0.6931472
        %v1876 = vmul.f32 -0.5, %v1800
        %v1877 = vadd.f32 %v1876, 1.0
        %v1878 = vmul.f32 %v1877, %v1800
        %v1879 = vand.u32 2147483647, %v1800
        %vm1880 = vcmp.lt.f32.partialorder %v1879, 0.0004427343
        %v1881 = vsel %vm1880, %v1878, %v1875
        %v1882 = vadd.f32 %v1802, 1.0
        %v1883 = vlog2.pop %v1882
        %v1884 = vmul.f32 %v1883, 0.6931472
        %v1885 = vmul.f32 -0.5, %v1802
        %v1886 = vadd.f32 %v1885, 1.0
        %v1887 = vmul.f32 %v1886, %v1802
        %v1888 = vand.u32 2147483647, %v1802
        %vm1889 = vcmp.lt.f32.partialorder %v1888, 0.0004427343
        %v1890 = vsel %vm1889, %v1887, %v1884
        %v1891 = vadd.f32 %v1804, 1.0
        %v1892 = vlog2.pop %v1891
        %v1893 = vmul.f32 %v1892, 0.6931472
        %v1894 = vmul.f32 -0.5, %v1804
        %v1895 = vadd.f32 %v1894, 1.0
        %v1896 = vmul.f32 %v1895, %v1804
        %v1897 = vand.u32 2147483647, %v1804
        %vm1898 = vcmp.lt.f32.partialorder %v1897, 0.0004427343
        %v1899 = vsel %vm1898, %v1896, %v1893
        %v1900 = vadd.f32 %v1806, 1.0
        %v1901 = vlog2.pop %v1900
        %v1902 = vmul.f32 %v1901, 0.6931472
        %v1903 = vmul.f32 -0.5, %v1806
        %v1904 = vadd.f32 %v1903, 1.0
        %v1905 = vmul.f32 %v1904, %v1806
        %v1906 = vand.u32 2147483647, %v1806
        %vm1907 = vcmp.lt.f32.partialorder %v1906, 0.0004427343
        %v1908 = vsel %vm1907, %v1905, %v1902
        %v1909 = vadd.f32 %v1808, 1.0
        %v1910 = vlog2.pop %v1909
        %v1911 = vmul.f32 %v1910, 0.6931472
        %v1912 = vmul.f32 -0.5, %v1808
        %v1913 = vadd.f32 %v1912, 1.0
        %v1914 = vmul.f32 %v1913, %v1808
        %v1915 = vand.u32 2147483647, %v1808
        %vm1916 = vcmp.lt.f32.partialorder %v1915, 0.0004427343
        %v1917 = vsel %vm1916, %v1914, %v1911
        %v1918 = vadd.f32 %v1810, 1.0
        %v1919 = vlog2.pop %v1918
        %v1920 = vmul.f32 %v1919, 0.6931472
        %v1921 = vmul.f32 -0.5, %v1810
        %v1922 = vadd.f32 %v1921, 1.0
        %v1923 = vmul.f32 %v1922, %v1810
        %v1924 = vand.u32 2147483647, %v1810
        %vm1925 = vcmp.lt.f32.partialorder %v1924, 0.0004427343
        %v1926 = vsel %vm1925, %v1923, %v1920
        %v1927 = vadd.f32 %v1812, 1.0
        %v1928 = vlog2.pop %v1927
        %v1929 = vmul.f32 %v1928, 0.6931472
        %v1930 = vmul.f32 -0.5, %v1812
        %v1931 = vadd.f32 %v1930, 1.0
        %v1932 = vmul.f32 %v1931, %v1812
        %v1933 = vand.u32 2147483647, %v1812
        %vm1934 = vcmp.lt.f32.partialorder %v1933, 0.0004427343
        %v1935 = vsel %vm1934, %v1932, %v1929
        %v1936 = vadd.f32 %v1814, 1.0
        %v1937 = vlog2.pop %v1936
        %v1938 = vmul.f32 %v1937, 0.6931472
        %v1939 = vmul.f32 -0.5, %v1814
        %v1940 = vadd.f32 %v1939, 1.0
        %v1941 = vmul.f32 %v1940, %v1814
        %v1942 = vand.u32 2147483647, %v1814
        %vm1943 = vcmp.lt.f32.partialorder %v1942, 0.0004427343
        %v1944 = vsel %vm1943, %v1941, %v1938
        %v1945 = vadd.f32 %v1816, 1.0
        %v1946 = vlog2.pop %v1945
        %v1947 = vmul.f32 %v1946, 0.6931472
        %v1948 = vmul.f32 -0.5, %v1816
        %v1949 = vadd.f32 %v1948, 1.0
        %v1950 = vmul.f32 %v1949, %v1816
        %v1951 = vand.u32 2147483647, %v1816
        %vm1952 = vcmp.lt.f32.partialorder %v1951, 0.0004427343
        %v1953 = vsel %vm1952, %v1950, %v1947
        %v1954 = vadd.f32 %v1818, 1.0
        %v1955 = vlog2.pop %v1954
        %v1956 = vmul.f32 %v1955, 0.6931472
        %v1957 = vmul.f32 -0.5, %v1818
        %v1958 = vadd.f32 %v1957, 1.0
        %v1959 = vmul.f32 %v1958, %v1818
        %v1960 = vand.u32 2147483647, %v1818
        %vm1961 = vcmp.lt.f32.partialorder %v1960, 0.0004427343
        %v1962 = vsel %vm1961, %v1959, %v1956
        %v1963 = vsel %vm1755, %v1677, %v1827
        %v1964 = vsel %vm1756, %v1682, %v1836
        %v1965 = vsel %vm1757, %v1687, %v1845
        %v1966 = vsel %vm1758, %v1692, %v1854
        %v1967 = vsel %vm1759, %v1697, %v1863
        %v1968 = vsel %vm1760, %v1702, %v1872
        %v1969 = vsel %vm1761, %v1707, %v1881
        %v1970 = vsel %vm1762, %v1712, %v1890
        %v1971 = vsel %vm1763, %v1717, %v1899
        %v1972 = vsel %vm1764, %v1722, %v1908
        %v1973 = vsel %vm1765, %v1727, %v1917
        %v1974 = vsel %vm1766, %v1732, %v1926
        %v1975 = vsel %vm1767, %v1737, %v1935
        %v1976 = vsel %vm1768, %v1742, %v1944
        %v1977 = vsel %vm1769, %v1747, %v1953
        %v1978 = vsel %vm1770, %v1752, %v1962
        %v1979 = vld [vmem:[#allocation2] sm:$0xff]
        %v1980 = vld [vmem:[#allocation2 + $0x8] sm:$0xff]
        %v1981 = vld [vmem:[#allocation2 + $0x10] sm:$0xff]
        %v1982 = vld [vmem:[#allocation2 + $0x18] sm:$0xff]
        %v1983 = vld [vmem:[%s11] sm:$0x1]
        %v1985 = vlaneseq
        %v1986 = vshrl.u32 %v1985, 7
        %v1987 = vsub.s32 0, %v1986
        %v1988 = vrot.slane %v1983, %v1987
        %v1991 = vsel %vm1359, %v1963, 0
        %v1994 = vsel %vm1359, %v1964, 0
        %v1997 = vsel %vm1359, %v1965, 0
        %v2000 = vsel %vm1359, %v1966, 0
        %v2003 = vsel %vm1359, %v1967, 0
        %v2006 = vsel %vm1359, %v1968, 0
        %v2009 = vsel %vm1359, %v1969, 0
        %v2012 = vsel %vm1359, %v1970, 0
        %v2015 = vsel %vm1359, %v1971, 0
        %v2018 = vsel %vm1359, %v1972, 0
        %v2021 = vsel %vm1359, %v1973, 0
        %v2024 = vsel %vm1359, %v1974, 0
        %v2027 = vsel %vm1359, %v1975, 0
        %v2030 = vsel %vm1359, %v1976, 0
        %v2033 = vsel %vm1359, %v1977, 0
        %v2036 = vsel %vm1359, %v1978, 0
        %2038 = vmatprep.subr.mxu0 0.0
        %2039 = vmatpush1.msra.mxu0 %v1979
        %2040 = vmatprep.subr.mxu0 0.0
        %2041 = vmatpush1.msra.mxu0 %v1980
        %2042 = vmatprep.subr.mxu0 0.0
        %2043 = vmatpush1.msra.mxu0 %v1981
        %2044 = vmatprep.subr.mxu0 0.0
        %2045 = vmatpush1.msra.mxu0 %v1982
        %2046 = vmatprep.subr.mxu0 0.0
        %2047 = vmatpush1.msra.mxu0 0.0
        %2048 = vmatprep.subr.mxu0 0.0
        %2049 = vmatpush1.msra.mxu0 0.0
        %2050 = vmatprep.subr.mxu0 0.0
        %2051 = vmatpush1.msra.mxu0 0.0
        %2052 = vmatprep.subr.mxu0 0.0
        %2053 = vmatpush1.msra.mxu0 0.0
        %2054 = vmatprep.subr.mxu0 0.0
        %2055 = vmatpush1.msra.mxu0 0.0
        %2056 = vmatprep.subr.mxu0 0.0
        %2057 = vmatpush1.msra.mxu0 0.0
        %2058 = vmatprep.subr.mxu0 0.0
        %2059 = vmatpush1.msra.mxu0 0.0
        %2060 = vmatprep.subr.mxu0 0.0
        %2061 = vmatpush1.msra.mxu0 0.0
        %2062 = vmatprep.subr.mxu0 0.0
        %2063 = vmatpush1.msra.mxu0 0.0
        %2064 = vmatprep.subr.mxu0 0.0
        %2065 = vmatpush1.msra.mxu0 0.0
        %2066 = vmatprep.subr.mxu0 0.0
        %2067 = vmatpush1.msra.mxu0 0.0
        %2068 = vmatprep.subr.mxu0 0.0
        %2069 = vmatpush1.msra.mxu0 0.0
        %2070 = vmatprep.subr.mxu0 0.0
        %2071 = vmatpush1.msra.mxu0 0.0
        %2072 = vmatprep.subr.mxu0 0.0
        %2073 = vmatpush1.msra.mxu0 0.0
        %2074 = vmatprep.subr.mxu0 0.0
        %2075 = vmatpush1.msra.mxu0 0.0
        %2076 = vmatprep.subr.mxu0 0.0
        %2077 = vmatpush1.msra.mxu0 0.0
        %2078 = vmatprep.subr.mxu0 0.0
        %2079 = vmatpush1.msra.mxu0 0.0
        %2080 = vmatprep.subr.mxu0 0.0
        %2081 = vmatpush1.msra.mxu0 0.0
        %2082 = vmatprep.subr.mxu0 0.0
        %2083 = vmatpush1.msra.mxu0 0.0
        %2084 = vmatprep.subr.mxu0 0.0
        %2085 = vmatpush1.msra.mxu0 0.0
        %2086 = vmatprep.subr.mxu0 0.0
        %2087 = vmatpush1.msra.mxu0 0.0
        %2088 = vmatprep.subr.mxu0 0.0
        %2089 = vmatpush1.msra.mxu0 0.0
        %2090 = vmatprep.subr.mxu0 0.0
        %2091 = vmatpush1.msra.mxu0 0.0
        %2092 = vmatprep.subr.mxu0 0.0
        %2093 = vmatpush1.msra.mxu0 0.0
        %2094 = vmatprep.subr.mxu0 0.0
        %2095 = vmatpush1.msra.mxu0 0.0
        %2096 = vmatprep.subr.mxu0 0.0
        %2097 = vmatpush1.msra.mxu0 0.0
        %2098 = vmatprep.subr.mxu0 0.0
        %2099 = vmatpush1.msra.mxu0 0.0
        %2100 = vmatprep.subr.mxu0 0.0
        %2101 = vmatpush1.msra.mxu0 0.0
        %2102 = vmatprep.mubr.f32.mxu0 0.0
        %2103 = vmatmul.mubr.f32.gmra.mrb[0].mxu0 %v1991
        %v2104 = vpop.f32.mrb[0].mxu0
        %v2105 = vadd.f32 %v1988, %v2104
        %v2106 = vpop.f32.mrb[0].mxu0
        %2107 = vmatprep.mubr.f32.mxu0 0.0
        %2108 = vmatmul.mubr.f32.gmra.mrb[0].mxu0 %v1994
        %v2109 = vpop.f32.mrb[0].mxu0
        %v2110 = vadd.f32 %v1988, %v2109
        %v2111 = vpop.f32.mrb[0].mxu0
        %2112 = vmatprep.mubr.f32.mxu0 0.0
        %2113 = vmatmul.mubr.f32.gmra.mrb[0].mxu0 %v1997
        %v2114 = vpop.f32.mrb[0].mxu0
        %v2115 = vadd.f32 %v1988, %v2114
        %v2116 = vpop.f32.mrb[0].mxu0
        %2117 = vmatprep.mubr.f32.mxu0 0.0
        %2118 = vmatmul.mubr.f32.gmra.mrb[0].mxu0 %v2000
        %v2119 = vpop.f32.mrb[0].mxu0
        %v2120 = vadd.f32 %v1988, %v2119
        %v2121 = vpop.f32.mrb[0].mxu0
        %2122 = vmatprep.mubr.f32.mxu0 0.0
        %2123 = vmatmul.mubr.f32.gmra.mrb[0].mxu0 %v2003
        %v2124 = vpop.f32.mrb[0].mxu0
        %v2125 = vadd.f32 %v1988, %v2124
        %v2126 = vpop.f32.mrb[0].mxu0
        %2127 = vmatprep.mubr.f32.mxu0 0.0
        %2128 = vmatmul.mubr.f32.gmra.mrb[0].mxu0 %v2006
        %v2129 = vpop.f32.mrb[0].mxu0
        %v2130 = vadd.f32 %v1988, %v2129
        %v2131 = vpop.f32.mrb[0].mxu0
        %2132 = vmatprep.mubr.f32.mxu0 0.0
        %2133 = vmatmul.mubr.f32.gmra.mrb[0].mxu0 %v2009
        %v2134 = vpop.f32.mrb[0].mxu0
        %v2135 = vadd.f32 %v1988, %v2134
        %v2136 = vpop.f32.mrb[0].mxu0
        %2137 = vmatprep.mubr.f32.mxu0 0.0
        %2138 = vmatmul.mubr.f32.gmra.mrb[0].mxu0 %v2012
        %v2139 = vpop.f32.mrb[0].mxu0
        %v2140 = vadd.f32 %v1988, %v2139
        %v2141 = vpop.f32.mrb[0].mxu0
        %2142 = vmatprep.mubr.f32.mxu0 0.0
        %2143 = vmatmul.mubr.f32.gmra.mrb[0].mxu0 %v2015
        %v2144 = vpop.f32.mrb[0].mxu0
        %v2145 = vadd.f32 %v1988, %v2144
        %v2146 = vpop.f32.mrb[0].mxu0
        %2147 = vmatprep.mubr.f32.mxu0 0.0
        %2148 = vmatmul.mubr.f32.gmra.mrb[0].mxu0 %v2018
        %v2149 = vpop.f32.mrb[0].mxu0
        %v2150 = vadd.f32 %v1988, %v2149
        %v2151 = vpop.f32.mrb[0].mxu0
        %2152 = vmatprep.mubr.f32.mxu0 0.0
        %2153 = vmatmul.mubr.f32.gmra.mrb[0].mxu0 %v2021
        %v2154 = vpop.f32.mrb[0].mxu0
        %v2155 = vadd.f32 %v1988, %v2154
        %v2156 = vpop.f32.mrb[0].mxu0
        %2157 = vmatprep.mubr.f32.mxu0 0.0
        %2158 = vmatmul.mubr.f32.gmra.mrb[0].mxu0 %v2024
        %v2159 = vpop.f32.mrb[0].mxu0
        %v2160 = vadd.f32 %v1988, %v2159
        %v2161 = vpop.f32.mrb[0].mxu0
        %2162 = vmatprep.mubr.f32.mxu0 0.0
        %2163 = vmatmul.mubr.f32.gmra.mrb[0].mxu0 %v2027
        %v2164 = vpop.f32.mrb[0].mxu0
        %v2165 = vadd.f32 %v1988, %v2164
        %v2166 = vpop.f32.mrb[0].mxu0
        %2167 = vmatprep.mubr.f32.mxu0 0.0
        %2168 = vmatmul.mubr.f32.gmra.mrb[0].mxu0 %v2030
        %v2169 = vpop.f32.mrb[0].mxu0
        %v2170 = vadd.f32 %v1988, %v2169
        %v2171 = vpop.f32.mrb[0].mxu0
        %2172 = vmatprep.mubr.f32.mxu0 0.0
        %2173 = vmatmul.mubr.f32.gmra.mrb[0].mxu0 %v2033
        %v2174 = vpop.f32.mrb[0].mxu0
        %v2175 = vadd.f32 %v1988, %v2174
        %v2176 = vpop.f32.mrb[0].mxu0
        %2177 = vmatprep.mubr.f32.mxu0 0.0
        %2178 = vmatmul.mubr.f32.gmra.mrb[0].mxu0 %v2036
        %v2179 = vpop.f32.mrb[0].mxu0
        %v2180 = vadd.f32 %v1988, %v2179
        %v2181 = vpop.f32.mrb[0].mxu0
        %2182 = vdwg.mxu0
        %vm2183 = vcmp.gt.f32.partialorder %v2105, 20.0
        %vm2184 = vcmp.gt.f32.partialorder %v2110, 20.0
        %vm2185 = vcmp.gt.f32.partialorder %v2115, 20.0
        %vm2186 = vcmp.gt.f32.partialorder %v2120, 20.0
        %vm2187 = vcmp.gt.f32.partialorder %v2125, 20.0
        %vm2188 = vcmp.gt.f32.partialorder %v2130, 20.0
        %vm2189 = vcmp.gt.f32.partialorder %v2135, 20.0
        %vm2190 = vcmp.gt.f32.partialorder %v2140, 20.0
        %vm2191 = vcmp.gt.f32.partialorder %v2145, 20.0
        %vm2192 = vcmp.gt.f32.partialorder %v2150, 20.0
        %vm2193 = vcmp.gt.f32.partialorder %v2155, 20.0
        %vm2194 = vcmp.gt.f32.partialorder %v2160, 20.0
        %vm2195 = vcmp.gt.f32.partialorder %v2165, 20.0
        %vm2196 = vcmp.gt.f32.partialorder %v2170, 20.0
        %vm2197 = vcmp.gt.f32.partialorder %v2175, 20.0
        %vm2198 = vcmp.gt.f32.partialorder %v2180, 20.0
        %v2199 = vmin.f32 %v2105, 20.0
        %v2200 = vmin.f32 %v2110, 20.0
        %v2201 = vmin.f32 %v2115, 20.0
        %v2202 = vmin.f32 %v2120, 20.0
        %v2203 = vmin.f32 %v2125, 20.0
        %v2204 = vmin.f32 %v2130, 20.0
        %v2205 = vmin.f32 %v2135, 20.0
        %v2206 = vmin.f32 %v2140, 20.0
        %v2207 = vmin.f32 %v2145, 20.0
        %v2208 = vmin.f32 %v2150, 20.0
        %v2209 = vmin.f32 %v2155, 20.0
        %v2210 = vmin.f32 %v2160, 20.0
        %v2211 = vmin.f32 %v2165, 20.0
        %v2212 = vmin.f32 %v2170, 20.0
        %v2213 = vmin.f32 %v2175, 20.0
        %v2214 = vmin.f32 %v2180, 20.0
        %v2215 = vmul.f32 %v2199, 1.442695
        %v2216 = vpow.pop %v2215
        %v2217 = vmul.f32 %v2200, 1.442695
        %v2218 = vpow.pop %v2217
        %v2219 = vmul.f32 %v2201, 1.442695
        %v2220 = vpow.pop %v2219
        %v2221 = vmul.f32 %v2202, 1.442695
        %v2222 = vpow.pop %v2221
        %v2223 = vmul.f32 %v2203, 1.442695
        %v2224 = vpow.pop %v2223
        %v2225 = vmul.f32 %v2204, 1.442695
        %v2226 = vpow.pop %v2225
        %v2227 = vmul.f32 %v2205, 1.442695
        %v2228 = vpow.pop %v2227
        %v2229 = vmul.f32 %v2206, 1.442695
        %v2230 = vpow.pop %v2229
        %v2231 = vmul.f32 %v2207, 1.442695
        %v2232 = vpow.pop %v2231
        %v2233 = vmul.f32 %v2208, 1.442695
        %v2234 = vpow.pop %v2233
        %v2235 = vmul.f32 %v2209, 1.442695
        %v2236 = vpow.pop %v2235
        %v2237 = vmul.f32 %v2210, 1.442695
        %v2238 = vpow.pop %v2237
        %v2239 = vmul.f32 %v2211, 1.442695
        %v2240 = vpow.pop %v2239
        %v2241 = vmul.f32 %v2212, 1.442695
        %v2242 = vpow.pop %v2241
        %v2243 = vmul.f32 %v2213, 1.442695
        %v2244 = vpow.pop %v2243
        %v2245 = vmul.f32 %v2214, 1.442695
        %v2246 = vpow.pop %v2245
        %v2247 = vadd.f32 %v2216, 1.0
        %v2248 = vlog2.pop %v2247
        %v2249 = vmul.f32 %v2248, 0.6931472
        %v2250 = vmul.f32 -0.5, %v2216
        %v2251 = vadd.f32 %v2250, 1.0
        %v2252 = vmul.f32 %v2251, %v2216
        %v2253 = vand.u32 2147483647, %v2216
        %vm2254 = vcmp.lt.f32.partialorder %v2253, 0.0004427343
        %v2255 = vsel %vm2254, %v2252, %v2249
        %v2256 = vadd.f32 %v2218, 1.0
        %v2257 = vlog2.pop %v2256
        %v2258 = vmul.f32 %v2257, 0.6931472
        %v2259 = vmul.f32 -0.5, %v2218
        %v2260 = vadd.f32 %v2259, 1.0
        %v2261 = vmul.f32 %v2260, %v2218
        %v2262 = vand.u32 2147483647, %v2218
        %vm2263 = vcmp.lt.f32.partialorder %v2262, 0.0004427343
        %v2264 = vsel %vm2263, %v2261, %v2258
        %v2265 = vadd.f32 %v2220, 1.0
        %v2266 = vlog2.pop %v2265
        %v2267 = vmul.f32 %v2266, 0.6931472
        %v2268 = vmul.f32 -0.5, %v2220
        %v2269 = vadd.f32 %v2268, 1.0
        %v2270 = vmul.f32 %v2269, %v2220
        %v2271 = vand.u32 2147483647, %v2220
        %vm2272 = vcmp.lt.f32.partialorder %v2271, 0.0004427343
        %v2273 = vsel %vm2272, %v2270, %v2267
        %v2274 = vadd.f32 %v2222, 1.0
        %v2275 = vlog2.pop %v2274
        %v2276 = vmul.f32 %v2275, 0.6931472
        %v2277 = vmul.f32 -0.5, %v2222
        %v2278 = vadd.f32 %v2277, 1.0
        %v2279 = vmul.f32 %v2278, %v2222
        %v2280 = vand.u32 2147483647, %v2222
        %vm2281 = vcmp.lt.f32.partialorder %v2280, 0.0004427343
        %v2282 = vsel %vm2281, %v2279, %v2276
        %v2283 = vadd.f32 %v2224, 1.0
        %v2284 = vlog2.pop %v2283
        %v2285 = vmul.f32 %v2284, 0.6931472
        %v2286 = vmul.f32 -0.5, %v2224
        %v2287 = vadd.f32 %v2286, 1.0
        %v2288 = vmul.f32 %v2287, %v2224
        %v2289 = vand.u32 2147483647, %v2224
        %vm2290 = vcmp.lt.f32.partialorder %v2289, 0.0004427343
        %v2291 = vsel %vm2290, %v2288, %v2285
        %v2292 = vadd.f32 %v2226, 1.0
        %v2293 = vlog2.pop %v2292
        %v2294 = vmul.f32 %v2293, 0.6931472
        %v2295 = vmul.f32 -0.5, %v2226
        %v2296 = vadd.f32 %v2295, 1.0
        %v2297 = vmul.f32 %v2296, %v2226
        %v2298 = vand.u32 2147483647, %v2226
        %vm2299 = vcmp.lt.f32.partialorder %v2298, 0.0004427343
        %v2300 = vsel %vm2299, %v2297, %v2294
        %v2301 = vadd.f32 %v2228, 1.0
        %v2302 = vlog2.pop %v2301
        %v2303 = vmul.f32 %v2302, 0.6931472
        %v2304 = vmul.f32 -0.5, %v2228
        %v2305 = vadd.f32 %v2304, 1.0
        %v2306 = vmul.f32 %v2305, %v2228
        %v2307 = vand.u32 2147483647, %v2228
        %vm2308 = vcmp.lt.f32.partialorder %v2307, 0.0004427343
        %v2309 = vsel %vm2308, %v2306, %v2303
        %v2310 = vadd.f32 %v2230, 1.0
        %v2311 = vlog2.pop %v2310
        %v2312 = vmul.f32 %v2311, 0.6931472
        %v2313 = vmul.f32 -0.5, %v2230
        %v2314 = vadd.f32 %v2313, 1.0
        %v2315 = vmul.f32 %v2314, %v2230
        %v2316 = vand.u32 2147483647, %v2230
        %vm2317 = vcmp.lt.f32.partialorder %v2316, 0.0004427343
        %v2318 = vsel %vm2317, %v2315, %v2312
        %v2319 = vadd.f32 %v2232, 1.0
        %v2320 = vlog2.pop %v2319
        %v2321 = vmul.f32 %v2320, 0.6931472
        %v2322 = vmul.f32 -0.5, %v2232
        %v2323 = vadd.f32 %v2322, 1.0
        %v2324 = vmul.f32 %v2323, %v2232
        %v2325 = vand.u32 2147483647, %v2232
        %vm2326 = vcmp.lt.f32.partialorder %v2325, 0.0004427343
        %v2327 = vsel %vm2326, %v2324, %v2321
        %v2328 = vadd.f32 %v2234, 1.0
        %v2329 = vlog2.pop %v2328
        %v2330 = vmul.f32 %v2329, 0.6931472
        %v2331 = vmul.f32 -0.5, %v2234
        %v2332 = vadd.f32 %v2331, 1.0
        %v2333 = vmul.f32 %v2332, %v2234
        %v2334 = vand.u32 2147483647, %v2234
        %vm2335 = vcmp.lt.f32.partialorder %v2334, 0.0004427343
        %v2336 = vsel %vm2335, %v2333, %v2330
        %v2337 = vadd.f32 %v2236, 1.0
        %v2338 = vlog2.pop %v2337
        %v2339 = vmul.f32 %v2338, 0.6931472
        %v2340 = vmul.f32 -0.5, %v2236
        %v2341 = vadd.f32 %v2340, 1.0
        %v2342 = vmul.f32 %v2341, %v2236
        %v2343 = vand.u32 2147483647, %v2236
        %vm2344 = vcmp.lt.f32.partialorder %v2343, 0.0004427343
        %v2345 = vsel %vm2344, %v2342, %v2339
        %v2346 = vadd.f32 %v2238, 1.0
        %v2347 = vlog2.pop %v2346
        %v2348 = vmul.f32 %v2347, 0.6931472
        %v2349 = vmul.f32 -0.5, %v2238
        %v2350 = vadd.f32 %v2349, 1.0
        %v2351 = vmul.f32 %v2350, %v2238
        %v2352 = vand.u32 2147483647, %v2238
        %vm2353 = vcmp.lt.f32.partialorder %v2352, 0.0004427343
        %v2354 = vsel %vm2353, %v2351, %v2348
        %v2355 = vadd.f32 %v2240, 1.0
        %v2356 = vlog2.pop %v2355
        %v2357 = vmul.f32 %v2356, 0.6931472
        %v2358 = vmul.f32 -0.5, %v2240
        %v2359 = vadd.f32 %v2358, 1.0
        %v2360 = vmul.f32 %v2359, %v2240
        %v2361 = vand.u32 2147483647, %v2240
        %vm2362 = vcmp.lt.f32.partialorder %v2361, 0.0004427343
        %v2363 = vsel %vm2362, %v2360, %v2357
        %v2364 = vadd.f32 %v2242, 1.0
        %v2365 = vlog2.pop %v2364
        %v2366 = vmul.f32 %v2365, 0.6931472
        %v2367 = vmul.f32 -0.5, %v2242
        %v2368 = vadd.f32 %v2367, 1.0
        %v2369 = vmul.f32 %v2368, %v2242
        %v2370 = vand.u32 2147483647, %v2242
        %vm2371 = vcmp.lt.f32.partialorder %v2370, 0.0004427343
        %v2372 = vsel %vm2371, %v2369, %v2366
        %v2373 = vadd.f32 %v2244, 1.0
        %v2374 = vlog2.pop %v2373
        %v2375 = vmul.f32 %v2374, 0.6931472
        %v2376 = vmul.f32 -0.5, %v2244
        %v2377 = vadd.f32 %v2376, 1.0
        %v2378 = vmul.f32 %v2377, %v2244
        %v2379 = vand.u32 2147483647, %v2244
        %vm2380 = vcmp.lt.f32.partialorder %v2379, 0.0004427343
        %v2381 = vsel %vm2380, %v2378, %v2375
        %v2382 = vadd.f32 %v2246, 1.0
        %v2383 = vlog2.pop %v2382
        %v2384 = vmul.f32 %v2383, 0.6931472
        %v2385 = vmul.f32 -0.5, %v2246
        %v2386 = vadd.f32 %v2385, 1.0
        %v2387 = vmul.f32 %v2386, %v2246
        %v2388 = vand.u32 2147483647, %v2246
        %vm2389 = vcmp.lt.f32.partialorder %v2388, 0.0004427343
        %v2390 = vsel %vm2389, %v2387, %v2384
        %v2391 = vsel %vm2183, %v2105, %v2255
        %v2392 = vsel %vm2184, %v2110, %v2264
        %v2393 = vsel %vm2185, %v2115, %v2273
        %v2394 = vsel %vm2186, %v2120, %v2282
        %v2395 = vsel %vm2187, %v2125, %v2291
        %v2396 = vsel %vm2188, %v2130, %v2300
        %v2397 = vsel %vm2189, %v2135, %v2309
        %v2398 = vsel %vm2190, %v2140, %v2318
        %v2399 = vsel %vm2191, %v2145, %v2327
        %v2400 = vsel %vm2192, %v2150, %v2336
        %v2401 = vsel %vm2193, %v2155, %v2345
        %v2402 = vsel %vm2194, %v2160, %v2354
        %v2403 = vsel %vm2195, %v2165, %v2363
        %v2404 = vsel %vm2196, %v2170, %v2372
        %v2405 = vsel %vm2197, %v2175, %v2381
        %v2406 = vsel %vm2198, %v2180, %v2390
        %v2407 = vld [vmem:[#allocation5] sm:$0xff]
        %v2408 = vld [vmem:[#allocation5 + $0x8] sm:$0xff]
        %v2409 = vld [vmem:[#allocation5 + $0x10] sm:$0xff]
        %v2410 = vld [vmem:[#allocation5 + $0x18] sm:$0xff]
        %v2411 = vld [vmem:[#allocation5 + $0x20] sm:$0xff]
        %v2412 = vld [vmem:[#allocation5 + $0x28] sm:$0xff]
        %v2413 = vld [vmem:[#allocation5 + $0x30] sm:$0xff]
        %v2414 = vld [vmem:[#allocation5 + $0x38] sm:$0xff]
        %v2415 = vld [vmem:[#allocation5 + $0x40] sm:$0xff]
        %v2416 = vld [vmem:[#allocation5 + $0x48] sm:$0xff]
        %v2417 = vld [vmem:[#allocation5 + $0x50] sm:$0xff]
        %v2418 = vld [vmem:[#allocation5 + $0x58] sm:$0xff]
        %v2419 = vld [vmem:[#allocation5 + $0x60] sm:$0xff]
        %v2420 = vld [vmem:[#allocation5 + $0x68] sm:$0xff]
        %v2421 = vld [vmem:[#allocation5 + $0x70] sm:$0xff]
        %v2422 = vld [vmem:[#allocation5 + $0x78] sm:$0xff]
        %v2423 = vld [vmem:[%s12] sm:$0x3]
        %v2425 = vlaneseq
        %v2426 = vshrl.u32 %v2425, 7
        %v2427 = vsub.s32 0, %v2426
        %v2428 = vrot.slane %v2423, %v2427
        %v2429 = vlaneseq
        %v2430 = vshrl.u32 %v2429, 7
        %v2431 = vsub.s32 1, %v2430
        %v2432 = vrot.slane %v2423, %v2431
        %v2436 = vsel %vm930, %v2391, 0
        %v2439 = vsel %vm930, %v2392, 0
        %v2442 = vsel %vm930, %v2393, 0
        %v2445 = vsel %vm930, %v2394, 0
        %v2448 = vsel %vm930, %v2395, 0
        %v2451 = vsel %vm930, %v2396, 0
        %v2454 = vsel %vm930, %v2397, 0
        %v2457 = vsel %vm930, %v2398, 0
        %v2460 = vsel %vm930, %v2399, 0
        %v2463 = vsel %vm930, %v2400, 0
        %v2466 = vsel %vm930, %v2401, 0
        %v2469 = vsel %vm930, %v2402, 0
        %v2472 = vsel %vm930, %v2403, 0
        %v2475 = vsel %vm930, %v2404, 0
        %v2478 = vsel %vm930, %v2405, 0
        %v2481 = vsel %vm930, %v2406, 0
        %2483 = vmatprep.subr.mxu0 %v2408
        %2484 = vmatpush1.msra.mxu0 %v2407
        %2485 = vmatprep.subr.mxu0 %v2410
        %2486 = vmatpush1.msra.mxu0 %v2409
        %2487 = vmatprep.subr.mxu0 %v2412
        %2488 = vmatpush1.msra.mxu0 %v2411
        %2489 = vmatprep.subr.mxu0 %v2414
        %2490 = vmatpush1.msra.mxu0 %v2413
        %2491 = vmatprep.subr.mxu0 %v2416
        %2492 = vmatpush1.msra.mxu0 %v2415
        %2493 = vmatprep.subr.mxu0 %v2418
        %2494 = vmatpush1.msra.mxu0 %v2417
        %2495 = vmatprep.subr.mxu0 %v2420
        %2496 = vmatpush1.msra.mxu0 %v2419
        %2497 = vmatprep.subr.mxu0 %v2422
        %2498 = vmatpush1.msra.mxu0 %v2421
        %2499 = vmatprep.subr.mxu0 0.0
        %2500 = vmatpush1.msra.mxu0 0.0
        %2501 = vmatprep.subr.mxu0 0.0
        %2502 = vmatpush1.msra.mxu0 0.0
        %2503 = vmatprep.subr.mxu0 0.0
        %2504 = vmatpush1.msra.mxu0 0.0
        %2505 = vmatprep.subr.mxu0 0.0
        %2506 = vmatpush1.msra.mxu0 0.0
        %2507 = vmatprep.subr.mxu0 0.0
        %2508 = vmatpush1.msra.mxu0 0.0
        %2509 = vmatprep.subr.mxu0 0.0
        %2510 = vmatpush1.msra.mxu0 0.0
        %2511 = vmatprep.subr.mxu0 0.0
        %2512 = vmatpush1.msra.mxu0 0.0
        %2513 = vmatprep.subr.mxu0 0.0
        %2514 = vmatpush1.msra.mxu0 0.0
        %2515 = vmatprep.subr.mxu0 0.0
        %2516 = vmatpush1.msra.mxu0 0.0
        %2517 = vmatprep.subr.mxu0 0.0
        %2518 = vmatpush1.msra.mxu0 0.0
        %2519 = vmatprep.subr.mxu0 0.0
        %2520 = vmatpush1.msra.mxu0 0.0
        %2521 = vmatprep.subr.mxu0 0.0
        %2522 = vmatpush1.msra.mxu0 0.0
        %2523 = vmatprep.subr.mxu0 0.0
        %2524 = vmatpush1.msra.mxu0 0.0
        %2525 = vmatprep.subr.mxu0 0.0
        %2526 = vmatpush1.msra.mxu0 0.0
        %2527 = vmatprep.subr.mxu0 0.0
        %2528 = vmatpush1.msra.mxu0 0.0
        %2529 = vmatprep.subr.mxu0 0.0
        %2530 = vmatpush1.msra.mxu0 0.0
        %2531 = vmatprep.subr.mxu0 0.0
        %2532 = vmatpush1.msra.mxu0 0.0
        %2533 = vmatprep.subr.mxu0 0.0
        %2534 = vmatpush1.msra.mxu0 0.0
        %2535 = vmatprep.subr.mxu0 0.0
        %2536 = vmatpush1.msra.mxu0 0.0
        %2537 = vmatprep.subr.mxu0 0.0
        %2538 = vmatpush1.msra.mxu0 0.0
        %2539 = vmatprep.subr.mxu0 0.0
        %2540 = vmatpush1.msra.mxu0 0.0
        %2541 = vmatprep.subr.mxu0 0.0
        %2542 = vmatpush1.msra.mxu0 0.0
        %2543 = vmatprep.subr.mxu0 0.0
        %2544 = vmatpush1.msra.mxu0 0.0
        %2545 = vmatprep.subr.mxu0 0.0
        %2546 = vmatpush1.msra.mxu0 0.0
        %2547 = vmatprep.mubr.f32.mxu0 0.0
        %2548 = vmatmul.mubr.f32.gmra.mrb[0].mxu0 %v2436
        %v2549 = vpop.f32.mrb[0].mxu0
        %v2550 = vadd.f32 %v2428, %v2549
        %v2551 = vpop.f32.mrb[0].mxu0
        %v2552 = vadd.f32 %v2432, %v2551
        %2553 = vmatprep.mubr.f32.mxu0 0.0
        %2554 = vmatmul.mubr.f32.gmra.mrb[0].mxu0 %v2439
        %v2555 = vpop.f32.mrb[0].mxu0
        %v2556 = vadd.f32 %v2428, %v2555
        %v2557 = vpop.f32.mrb[0].mxu0
        %v2558 = vadd.f32 %v2432, %v2557
        %2559 = vmatprep.mubr.f32.mxu0 0.0
        %2560 = vmatmul.mubr.f32.gmra.mrb[0].mxu0 %v2442
        %v2561 = vpop.f32.mrb[0].mxu0
        %v2562 = vadd.f32 %v2428, %v2561
        %v2563 = vpop.f32.mrb[0].mxu0
        %v2564 = vadd.f32 %v2432, %v2563
        %2565 = vmatprep.mubr.f32.mxu0 0.0
        %2566 = vmatmul.mubr.f32.gmra.mrb[0].mxu0 %v2445
        %v2567 = vpop.f32.mrb[0].mxu0
        %v2568 = vadd.f32 %v2428, %v2567
        %v2569 = vpop.f32.mrb[0].mxu0
        %v2570 = vadd.f32 %v2432, %v2569
        %2571 = vmatprep.mubr.f32.mxu0 0.0
        %2572 = vmatmul.mubr.f32.gmra.mrb[0].mxu0 %v2448
        %v2573 = vpop.f32.mrb[0].mxu0
        %v2574 = vadd.f32 %v2428, %v2573
        %v2575 = vpop.f32.mrb[0].mxu0
        %v2576 = vadd.f32 %v2432, %v2575
        %2577 = vmatprep.mubr.f32.mxu0 0.0
        %2578 = vmatmul.mubr.f32.gmra.mrb[0].mxu0 %v2451
        %v2579 = vpop.f32.mrb[0].mxu0
        %v2580 = vadd.f32 %v2428, %v2579
        %v2581 = vpop.f32.mrb[0].mxu0
        %v2582 = vadd.f32 %v2432, %v2581
        %2583 = vmatprep.mubr.f32.mxu0 0.0
        %2584 = vmatmul.mubr.f32.gmra.mrb[0].mxu0 %v2454
        %v2585 = vpop.f32.mrb[0].mxu0
        %v2586 = vadd.f32 %v2428, %v2585
        %v2587 = vpop.f32.mrb[0].mxu0
        %v2588 = vadd.f32 %v2432, %v2587
        %2589 = vmatprep.mubr.f32.mxu0 0.0
        %2590 = vmatmul.mubr.f32.gmra.mrb[0].mxu0 %v2457
        %v2591 = vpop.f32.mrb[0].mxu0
        %v2592 = vadd.f32 %v2428, %v2591
        %v2593 = vpop.f32.mrb[0].mxu0
        %v2594 = vadd.f32 %v2432, %v2593
        %2595 = vmatprep.mubr.f32.mxu0 0.0
        %2596 = vmatmul.mubr.f32.gmra.mrb[0].mxu0 %v2460
        %v2597 = vpop.f32.mrb[0].mxu0
        %v2598 = vadd.f32 %v2428, %v2597
        %v2599 = vpop.f32.mrb[0].mxu0
        %v2600 = vadd.f32 %v2432, %v2599
        %2601 = vmatprep.mubr.f32.mxu0 0.0
        %2602 = vmatmul.mubr.f32.gmra.mrb[0].mxu0 %v2463
        %v2603 = vpop.f32.mrb[0].mxu0
        %v2604 = vadd.f32 %v2428, %v2603
        %v2605 = vpop.f32.mrb[0].mxu0
        %v2606 = vadd.f32 %v2432, %v2605
        %2607 = vmatprep.mubr.f32.mxu0 0.0
        %2608 = vmatmul.mubr.f32.gmra.mrb[0].mxu0 %v2466
        %v2609 = vpop.f32.mrb[0].mxu0
        %v2610 = vadd.f32 %v2428, %v2609
        %v2611 = vpop.f32.mrb[0].mxu0
        %v2612 = vadd.f32 %v2432, %v2611
        %2613 = vmatprep.mubr.f32.mxu0 0.0
        %2614 = vmatmul.mubr.f32.gmra.mrb[0].mxu0 %v2469
        %v2615 = vpop.f32.mrb[0].mxu0
        %v2616 = vadd.f32 %v2428, %v2615
        %v2617 = vpop.f32.mrb[0].mxu0
        %v2618 = vadd.f32 %v2432, %v2617
        %2619 = vmatprep.mubr.f32.mxu0 0.0
        %2620 = vmatmul.mubr.f32.gmra.mrb[0].mxu0 %v2472
        %v2621 = vpop.f32.mrb[0].mxu0
        %v2622 = vadd.f32 %v2428, %v2621
        %v2623 = vpop.f32.mrb[0].mxu0
        %v2624 = vadd.f32 %v2432, %v2623
        %2625 = vmatprep.mubr.f32.mxu0 0.0
        %2626 = vmatmul.mubr.f32.gmra.mrb[0].mxu0 %v2475
        %v2627 = vpop.f32.mrb[0].mxu0
        %v2628 = vadd.f32 %v2428, %v2627
        %v2629 = vpop.f32.mrb[0].mxu0
        %v2630 = vadd.f32 %v2432, %v2629
        %2631 = vmatprep.mubr.f32.mxu0 0.0
        %2632 = vmatmul.mubr.f32.gmra.mrb[0].mxu0 %v2478
        %v2633 = vpop.f32.mrb[0].mxu0
        %v2634 = vadd.f32 %v2428, %v2633
        %v2635 = vpop.f32.mrb[0].mxu0
        %v2636 = vadd.f32 %v2432, %v2635
        %2637 = vmatprep.mubr.f32.mxu0 0.0
        %2638 = vmatmul.mubr.f32.gmra.mrb[0].mxu0 %v2481
        %v2639 = vpop.f32.mrb[0].mxu0
        %v2640 = vadd.f32 %v2428, %v2639
        %v2641 = vpop.f32.mrb[0].mxu0
        %v2642 = vadd.f32 %v2432, %v2641
        %2643 = vdwg.mxu0
        %2644 = vst [vmem:[%s466] sm:$0xff] %v2550
        %2645 = vst [vmem:[%s466 + $0x8] sm:$0xff] %v2552
        %2646 = vst [vmem:[%s466 + $0x10] sm:$0xff] %v2556
        %2647 = vst [vmem:[%s466 + $0x18] sm:$0xff] %v2558
        %2648 = vst [vmem:[%s466 + $0x20] sm:$0xff] %v2562
        %2649 = vst [vmem:[%s466 + $0x28] sm:$0xff] %v2564
        %2650 = vst [vmem:[%s466 + $0x30] sm:$0xff] %v2568
        %2651 = vst [vmem:[%s466 + $0x38] sm:$0xff] %v2570
        %2652 = vst [vmem:[%s466 + $0x40] sm:$0xff] %v2574
        %2653 = vst [vmem:[%s466 + $0x48] sm:$0xff] %v2576
        %2654 = vst [vmem:[%s466 + $0x50] sm:$0xff] %v2580
        %2655 = vst [vmem:[%s466 + $0x58] sm:$0xff] %v2582
        %2656 = vst [vmem:[%s466 + $0x60] sm:$0xff] %v2586
        %2657 = vst [vmem:[%s466 + $0x68] sm:$0xff] %v2588
        %2658 = vst [vmem:[%s466 + $0x70] sm:$0xff] %v2592
        %2659 = vst [vmem:[%s466 + $0x78] sm:$0xff] %v2594
        %2660 = vst [vmem:[%s466 + $0x80] sm:$0xff] %v2598
        %2661 = vst [vmem:[%s466 + $0x88] sm:$0xff] %v2600
        %2662 = vst [vmem:[%s466 + $0x90] sm:$0xff] %v2604
        %2663 = vst [vmem:[%s466 + $0x98] sm:$0xff] %v2606
        %2664 = vst [vmem:[%s466 + $0xa0] sm:$0xff] %v2610
        %2665 = vst [vmem:[%s466 + $0xa8] sm:$0xff] %v2612
        %2666 = vst [vmem:[%s466 + $0xb0] sm:$0xff] %v2616
        %2667 = vst [vmem:[%s466 + $0xb8] sm:$0xff] %v2618
        %2668 = vst [vmem:[%s466 + $0xc0] sm:$0xff] %v2622
        %2669 = vst [vmem:[%s466 + $0xc8] sm:$0xff] %v2624
        %2670 = vst [vmem:[%s466 + $0xd0] sm:$0xff] %v2628
        %2671 = vst [vmem:[%s466 + $0xd8] sm:$0xff] %v2630
        %2672 = vst [vmem:[%s466 + $0xe0] sm:$0xff] %v2634
        %2673 = vst [vmem:[%s466 + $0xe8] sm:$0xff] %v2636
        %2674 = vst [vmem:[%s466 + $0xf0] sm:$0xff] %v2640
        %2675 = vst [vmem:[%s466 + $0xf8] sm:$0xff] %v2642
        %s2676 = sand.u32 %s315, 1
        %s2677 = scalar_lea.sflag [#allocation4], %s2676
        %s2678 = sand.u32 %s315, 1
        %s2679 = smul.addr %s2678, 256
        %s2680 = scalar_lea.vmem [#allocation7], %s2679
        // Predicated region
        $region81: #{tpu_custom_call.1} parent=71 // pred_check
          %p2681 = pneg %p325
        $region82: #{tpu_custom_call.1} parent=71 // pred_check_branch
          %2683 = sbr.rel (%p2681) target = $region84
        $region83: #{tpu_custom_call.1} parent=71 // pred_region
          %s2684 = smul.u32 16, %s29
          %s2686 = ssub.s32 4096, 4096
          %2687 = vsyncadd %s2677, %s2686
          %s2688 = smul.addr %s2684, 2
          %s2689 = smul.addr %s2688, 128
          %s2690 = scalar_lea.hbm %s13, %s2689
          %s2691 = sshll.u32 %s2680, 4
          %s2692 = int_to_ptr.vmem [resolvable:$true] %s2691
          %2697 = dma.vmem_to_hbm [thread:$0]  %s2692, 4096, %s2690, %s2677, 256, 256, 16
        $region84: #{tpu_custom_call.1} parent=71 // pred_fallthru
          _
      $region72: #{tpu_custom_call.1} parent=5 // pred_fallthru
        _
      %p2698 = scmp.le.s32.totalorder 2, %s24
      // Predicated region
      $region85: #{tpu_custom_call.1} parent=5 // pred_check
        %p2699 = pneg %p2698
      $region86: #{tpu_custom_call.1} parent=5 // pred_check_branch
        %2701 = sbr.rel (%p2699) target = $region88
      $region87: #{tpu_custom_call.1} parent=5 // pred_region
        %s2702 = ssub.s32 %s24, 2
        // Predicated region
        $region89: #{tpu_custom_call.1} parent=87 // pred_check
          %p2703 = pneg %p331
        $region90: #{tpu_custom_call.1} parent=87 // pred_check_branch
          %2705 = sbr.rel (%p2703) target = $region92
        $region91: #{tpu_custom_call.1} parent=87 // pred_region
          %s2706 = sand.u32 %s316, 1
          %s2707 = scalar_lea.sflag [#allocation4], %s2706
          %s2708 = sand.u32 %s316, 1
          %s2709 = smul.addr %s2708, 256
          %s2710 = scalar_lea.vmem [#allocation7], %s2709
          %2711 = dma.done %s2707, 4096
        $region92: #{tpu_custom_call.1} parent=87 // pred_fallthru
          _
      $region88: #{tpu_custom_call.1} parent=5 // pred_fallthru
        _
    $region6: #{tpu_custom_call.1} parent=1 // loop_footer
      %s28 = sadd.s32 1, %s24
    $region7: #{tpu_custom_call.1} parent=1 // loop_footer_branch
      %23 = sbr.rel target = $region3
    $region8: #{tpu_custom_call.1} parent=1 // loop_exit
      _
    %2712 = vsyncpa [#allocation3], 1
    %s2713 = scalar_lea.sflag [#allocation3], 1
    %2714 = vsyncpa %s2713, 1
    %2715 = vsyncpa [#allocation6], 1
    %2716 = vsyncpa [#allocation4], 1
    %s2717 = scalar_lea.sflag [#allocation4], 1
    %2718 = vsyncpa %s2717, 1

// kernel: tpu_custom_call.1
$region0: #{tpu_custom_call.1}
  #allocation0 [shape = 'u32[]', space=smem, size = 0x4, offset = 0x4, fixed_abs, tag = 'smem constant byte address 0x4 - core index']
  #allocation1 [shape = 'u32[144,128]{1,0:T(1,128)}', space=vmem, size = 0x12000, scoped, tag = 'internal scratch']
  %s0 = inlined_call_operand.vmem [shape: f32[256,256], index: 0, kind: input, shape index: {}]
  %s1 = inlined_call_operand.vmem [shape: f32[256,64], index: 1, kind: input, shape index: {}]
  %s2 = inlined_call_operand.vmem [shape: f32[64,32], index: 2, kind: input, shape index: {}]
  %s3 = inlined_call_operand.vmem [shape: f32[32,8], index: 3, kind: input, shape index: {}]
  %s4 = inlined_call_operand.vmem [shape: f32[8,32], index: 4, kind: input, shape index: {}]
  %s5 = inlined_call_operand.hbm [shape: f32[32,64], index: 5, kind: input, shape index: {}]
  %s6 = inlined_call_operand.hbm [shape: f32[64,256], index: 6, kind: input, shape index: {}]
  %s7 = inlined_call_operand.vmem [shape: f32[1,64], index: 7, kind: input, shape index: {}]
  %s8 = inlined_call_operand.vmem [shape: f32[1,32], index: 8, kind: input, shape index: {}]
  %s9 = inlined_call_operand.vmem [shape: f32[1,8], index: 9, kind: input, shape index: {}]
  %s10 = inlined_call_operand.vmem [shape: f32[1,32], index: 10, kind: input, shape index: {}]
  %s11 = inlined_call_operand.vmem [shape: f32[1,64], index: 11, kind: input, shape index: {}]
  %s12 = inlined_call_operand.vmem [shape: f32[1,256], index: 12, kind: input, shape index: {}]
  %s13 = inlined_call_operand.hbm [shape: f32[256,256], index: 13, kind: output, shape index: {}]
  %s14 = sld [smem:[#allocation0]]
  $region93: #{tpu_custom_call.1} parent=0
    _
  %s16 = ssub.s32 1, %s14
  %s17 = scalar_select 0, %s16, %s14
  $region1: #{tpu_custom_call.1} parent=0
    #allocation2 [shape = 'u8[16384]{0}', space=vmem, size = 0x4000, scoped, tag = 'input window, operand 5, single buffered']
    #allocation3 [shape = 's32[2]{0}', space=sflag, size = 0x8, scoped, tag = 'scoped memory for tpu_custom_call.1']
    #allocation4 [shape = 's32[2]{0}', space=sflag, size = 0x8, scoped, tag = 'scoped memory for tpu_custom_call.1']
    #allocation5 [shape = 'u8[65536]{0}', space=vmem, size = 0x10000, scoped, tag = 'input window, operand 6, single buffered']
    #allocation6 [shape = 's32[1]{0}', space=sflag, size = 0x4, scoped, tag = 'scoped memory for tpu_custom_call.1']
    #allocation7 [shape = 'u8[262144]{0}', space=vmem, size = 0x40000, scoped, tag = 'output window, operand 0']
    %18 = vsyncpa [#allocation3], 0
    %19 = vsyncpa [#allocation6], 0
    %20 = vsyncpa [#allocation4], 0
    %s21 = scalar_lea.sflag [#allocation4], 1
    %22 = vsyncpa %s21, 0
    loop: start=0, step=1, limit=4
    $region2: #{tpu_custom_call.1} parent=1 // loop_pre_header
      _
    $region3: #{tpu_custom_call.1} parent=1 // loop_header
      %s24 = sphi 0, %s28
      %p25 = scmp.ge.s32.totalorder %s24, 4
      %s34 = sphi 0, %s36
      %s37 = sphi 0, %s34
      %s38 = sphi 0, %s37
      %s54 = sphi 0, %s38
      %s58 = sphi 0, %s58
      %s60 = sphi 0, %s58
      %s61 = sphi 0, %s60
      %s75 = sphi 0, %s61
      %s79 = sphi 0, %s79
      %s81 = sphi 0, %s79
      %s82 = sphi 0, %s81
      %s96 = sphi 0, %s82
      %s100 = sphi 0, %s100
      %s102 = sphi 0, %s100
      %s103 = sphi 0, %s102
      %s117 = sphi 0, %s103
      %s121 = sphi 0, %s121
      %s123 = sphi 0, %s121
      %s124 = sphi 0, %s123
      %s138 = sphi 0, %s124
      %s142 = sphi 0, %s142
      %s144 = sphi 0, %s142
      %s145 = sphi 0, %s144
      %s159 = sphi 0, %s145
      %s163 = sphi 0, %s163
      %s165 = sphi 0, %s163
      %s166 = sphi 0, %s165
      %s180 = sphi 0, %s166
      %s184 = sphi 0, %s184
      %s186 = sphi 0, %s184
      %s187 = sphi 0, %s186
      %s201 = sphi 0, %s187
      %s205 = sphi 0, %s205
      %s207 = sphi 0, %s205
      %s208 = sphi 0, %s207
      %s222 = sphi 0, %s208
      %s226 = sphi 0, %s226
      %s228 = sphi 0, %s226
      %s229 = sphi 0, %s228
      %s243 = sphi 0, %s229
      %s247 = sphi 0, %s247
      %s249 = sphi 0, %s247
      %s250 = sphi 0, %s249
      %s264 = sphi 0, %s250
      %s268 = sphi 0, %s268
      %s270 = sphi 0, %s268
      %s271 = sphi 0, %s270
      %s285 = sphi 0, %s271
      %s289 = sphi 0, %s289
      %s291 = sphi 0, %s289
      %s292 = sphi 0, %s291
      %s306 = sphi 0, %s292
      %s312 = sphi 0, %s314
      %s315 = sphi 0, %s312
      %s316 = sphi 0, %s315
      %s332 = sphi 0, %s316
    $region4: #{tpu_custom_call.1} parent=1 // loop_header_branch
      %27 = sbr.rel (%p25) target = $region8
    $region5: #{tpu_custom_call.1} parent=1 // loop_body
      %s29 = ssub.s32 %s24, 1
      %s30 = ssub.s32 %s24, 2
      %s31 = sadd.s32 %s24, 1
      %s32 = ssub.s32 %s24, %s31
      %p33 = scmp.eq.s32.totalorder %s32, 0
      %s35 = sadd.s32 %s34, 1
      %s36 = scalar_select %p33, %s34, %s35
      %p39 = pneg %p33
      %p40 = scmp.eq.s32.totalorder %s24, 1
      %p41 = por %p39, %p40
      %p42 = scmp.ne.s32.totalorder %s34, %s37
      %p43 = scmp.eq.s32.totalorder %s24, 0
      %p44 = por %p42, %p43
      %p45 = scmp.ne.s32.totalorder %s34, %s37
      %p46 = scmp.eq.s32.totalorder %s29, 1
      %p47 = por %p45, %p46
      %p48 = scmp.ne.s32.totalorder %s37, %s38
      %p49 = scmp.eq.s32.totalorder %s29, 0
      %p50 = por %p48, %p49
      %p51 = scmp.ne.s32.totalorder %s37, %s38
      %p52 = scmp.eq.s32.totalorder %s30, 1
      %p53 = por %p51, %p52
      %p55 = scmp.ne.s32.totalorder %s38, %s54
      %p56 = scmp.eq.s32.totalorder %s30, 0
      %p57 = por %p55, %p56
      %s59 = sadd.s32 %s58, 1
      %p62 = scmp.eq.s32.totalorder %s24, 1
      %p63 = scmp.ne.s32.totalorder %s58, %s60
      %p64 = scmp.eq.s32.totalorder %s24, 0
      %p65 = por %p63, %p64
      %p66 = scmp.ne.s32.totalorder %s58, %s60
      %p67 = scmp.eq.s32.totalorder %s29, 1
      %p68 = por %p66, %p67
      %p69 = scmp.ne.s32.totalorder %s60, %s61
      %p70 = scmp.eq.s32.totalorder %s29, 0
      %p71 = por %p69, %p70
      %p72 = scmp.ne.s32.totalorder %s60, %s61
      %p73 = scmp.eq.s32.totalorder %s30, 1
      %p74 = por %p72, %p73
      %p76 = scmp.ne.s32.totalorder %s61, %s75
      %p77 = scmp.eq.s32.totalorder %s30, 0
      %p78 = por %p76, %p77
      %s80 = sadd.s32 %s79, 1
      %p83 = scmp.eq.s32.totalorder %s24, 1
      %p84 = scmp.ne.s32.totalorder %s79, %s81
      %p85 = scmp.eq.s32.totalorder %s24, 0
      %p86 = por %p84, %p85
      %p87 = scmp.ne.s32.totalorder %s79, %s81
      %p88 = scmp.eq.s32.totalorder %s29, 1
      %p89 = por %p87, %p88
      %p90 = scmp.ne.s32.totalorder %s81, %s82
      %p91 = scmp.eq.s32.totalorder %s29, 0
      %p92 = por %p90, %p91
      %p93 = scmp.ne.s32.totalorder %s81, %s82
      %p94 = scmp.eq.s32.totalorder %s30, 1
      %p95 = por %p93, %p94
      %p97 = scmp.ne.s32.totalorder %s82, %s96
      %p98 = scmp.eq.s32.totalorder %s30, 0
      %p99 = por %p97, %p98
      %s101 = sadd.s32 %s100, 1
      %p104 = scmp.eq.s32.totalorder %s24, 1
      %p105 = scmp.ne.s32.totalorder %s100, %s102
      %p106 = scmp.eq.s32.totalorder %s24, 0
      %p107 = por %p105, %p106
      %p108 = scmp.ne.s32.totalorder %s100, %s102
      %p109 = scmp.eq.s32.totalorder %s29, 1
      %p110 = por %p108, %p109
      %p111 = scmp.ne.s32.totalorder %s102, %s103
      %p112 = scmp.eq.s32.totalorder %s29, 0
      %p113 = por %p111, %p112
      %p114 = scmp.ne.s32.totalorder %s102, %s103
      %p115 = scmp.eq.s32.totalorder %s30, 1
      %p116 = por %p114, %p115
      %p118 = scmp.ne.s32.totalorder %s103, %s117
      %p119 = scmp.eq.s32.totalorder %s30, 0
      %p120 = por %p118, %p119
      %s122 = sadd.s32 %s121, 1
      %p125 = scmp.eq.s32.totalorder %s24, 1
      %p126 = scmp.ne.s32.totalorder %s121, %s123
      %p127 = scmp.eq.s32.totalorder %s24, 0
      %p128 = por %p126, %p127
      %p129 = scmp.ne.s32.totalorder %s121, %s123
      %p130 = scmp.eq.s32.totalorder %s29, 1
      %p131 = por %p129, %p130
      %p132 = scmp.ne.s32.totalorder %s123, %s124
      %p133 = scmp.eq.s32.totalorder %s29, 0
      %p134 = por %p132, %p133
      %p135 = scmp.ne.s32.totalorder %s123, %s124
      %p136 = scmp.eq.s32.totalorder %s30, 1
      %p137 = por %p135, %p136
      %p139 = scmp.ne.s32.totalorder %s124, %s138
      %p140 = scmp.eq.s32.totalorder %s30, 0
      %p141 = por %p139, %p140
      %s143 = sadd.s32 %s142, 1
      %p146 = scmp.eq.s32.totalorder %s24, 1
      %p147 = scmp.ne.s32.totalorder %s142, %s144
      %p148 = scmp.eq.s32.totalorder %s24, 0
      %p149 = por %p147, %p148
      %p150 = scmp.ne.s32.totalorder %s142, %s144
      %p151 = scmp.eq.s32.totalorder %s29, 1
      %p152 = por %p150, %p151
      %p153 = scmp.ne.s32.totalorder %s144, %s145
      %p154 = scmp.eq.s32.totalorder %s29, 0
      %p155 = por %p153, %p154
      %p156 = scmp.ne.s32.totalorder %s144, %s145
      %p157 = scmp.eq.s32.totalorder %s30, 1
      %p158 = por %p156, %p157
      %p160 = scmp.ne.s32.totalorder %s145, %s159
      %p161 = scmp.eq.s32.totalorder %s30, 0
      %p162 = por %p160, %p161
      %s164 = sadd.s32 %s163, 1
      %p167 = scmp.eq.s32.totalorder %s24, 1
      %p168 = scmp.ne.s32.totalorder %s163, %s165
      %p169 = scmp.eq.s32.totalorder %s24, 0
      %p170 = por %p168, %p169
      %p171 = scmp.ne.s32.totalorder %s163, %s165
      %p172 = scmp.eq.s32.totalorder %s29, 1
      %p173 = por %p171, %p172
      %p174 = scmp.ne.s32.totalorder %s165, %s166
      %p175 = scmp.eq.s32.totalorder %s29, 0
      %p176 = por %p174, %p175
      %p177 = scmp.ne.s32.totalorder %s165, %s166
      %p178 = scmp.eq.s32.totalorder %s30, 1
      %p179 = por %p177, %p178
      %p181 = scmp.ne.s32.totalorder %s166, %s180
      %p182 = scmp.eq.s32.totalorder %s30, 0
      %p183 = por %p181, %p182
      %s185 = sadd.s32 %s184, 1
      %p188 = scmp.eq.s32.totalorder %s24, 1
      %p189 = scmp.ne.s32.totalorder %s184, %s186
      %p190 = scmp.eq.s32.totalorder %s24, 0
      %p191 = por %p189, %p190
      %p192 = scmp.ne.s32.totalorder %s184, %s186
      %p193 = scmp.eq.s32.totalorder %s29, 1
      %p194 = por %p192, %p193
      %p195 = scmp.ne.s32.totalorder %s186, %s187
      %p196 = scmp.eq.s32.totalorder %s29, 0
      %p197 = por %p195, %p196
      %p198 = scmp.ne.s32.totalorder %s186, %s187
      %p199 = scmp.eq.s32.totalorder %s30, 1
      %p200 = por %p198, %p199
      %p202 = scmp.ne.s32.totalorder %s187, %s201
      %p203 = scmp.eq.s32.totalorder %s30, 0
      %p204 = por %p202, %p203
      %s206 = sadd.s32 %s205, 1
      %p209 = scmp.eq.s32.totalorder %s24, 1
      %p210 = scmp.ne.s32.totalorder %s205, %s207
      %p211 = scmp.eq.s32.totalorder %s24, 0
      %p212 = por %p210, %p211
      %p213 = scmp.ne.s32.totalorder %s205, %s207
      %p214 = scmp.eq.s32.totalorder %s29, 1
      %p215 = por %p213, %p214
      %p216 = scmp.ne.s32.totalorder %s207, %s208
      %p217 = scmp.eq.s32.totalorder %s29, 0
      %p218 = por %p216, %p217
      %p219 = scmp.ne.s32.totalorder %s207, %s208
      %p220 = scmp.eq.s32.totalorder %s30, 1
      %p221 = por %p219, %p220
      %p223 = scmp.ne.s32.totalorder %s208, %s222
      %p224 = scmp.eq.s32.totalorder %s30, 0
      %p225 = por %p223, %p224
      %s227 = sadd.s32 %s226, 1
      %p230 = scmp.eq.s32.totalorder %s24, 1
      %p231 = scmp.ne.s32.totalorder %s226, %s228
      %p232 = scmp.eq.s32.totalorder %s24, 0
      %p233 = por %p231, %p232
      %p234 = scmp.ne.s32.totalorder %s226, %s228
      %p235 = scmp.eq.s32.totalorder %s29, 1
      %p236 = por %p234, %p235
      %p237 = scmp.ne.s32.totalorder %s228, %s229
      %p238 = scmp.eq.s32.totalorder %s29, 0
      %p239 = por %p237, %p238
      %p240 = scmp.ne.s32.totalorder %s228, %s229
      %p241 = scmp.eq.s32.totalorder %s30, 1
      %p242 = por %p240, %p241
      %p244 = scmp.ne.s32.totalorder %s229, %s243
      %p245 = scmp.eq.s32.totalorder %s30, 0
      %p246 = por %p244, %p245
      %s248 = sadd.s32 %s247, 1
      %p251 = scmp.eq.s32.totalorder %s24, 1
      %p252 = scmp.ne.s32.totalorder %s247, %s249
      %p253 = scmp.eq.s32.totalorder %s24, 0
      %p254 = por %p252, %p253
      %p255 = scmp.ne.s32.totalorder %s247, %s249
      %p256 = scmp.eq.s32.totalorder %s29, 1
      %p257 = por %p255, %p256
      %p258 = scmp.ne.s32.totalorder %s249, %s250
      %p259 = scmp.eq.s32.totalorder %s29, 0
      %p260 = por %p258, %p259
      %p261 = scmp.ne.s32.totalorder %s249, %s250
      %p262 = scmp.eq.s32.totalorder %s30, 1
      %p263 = por %p261, %p262
      %p265 = scmp.ne.s32.totalorder %s250, %s264
      %p266 = scmp.eq.s32.totalorder %s30, 0
      %p267 = por %p265, %p266
      %s269 = sadd.s32 %s268, 1
      %p272 = scmp.eq.s32.totalorder %s24, 1
      %p273 = scmp.ne.s32.totalorder %s268, %s270
      %p274 = scmp.eq.s32.totalorder %s24, 0
      %p275 = por %p273, %p274
      %p276 = scmp.ne.s32.totalorder %s268, %s270
      %p277 = scmp.eq.s32.totalorder %s29, 1
      %p278 = por %p276, %p277
      %p279 = scmp.ne.s32.totalorder %s270, %s271
      %p280 = scmp.eq.s32.totalorder %s29, 0
      %p281 = por %p279, %p280
      %p282 = scmp.ne.s32.totalorder %s270, %s271
      %p283 = scmp.eq.s32.totalorder %s30, 1
      %p284 = por %p282, %p283
      %p286 = scmp.ne.s32.totalorder %s271, %s285
      %p287 = scmp.eq.s32.totalorder %s30, 0
      %p288 = por %p286, %p287
      %s290 = sadd.s32 %s289, 1
      %p293 = scmp.eq.s32.totalorder %s24, 1
      %p294 = scmp.ne.s32.totalorder %s289, %s291
      %p295 = scmp.eq.s32.totalorder %s24, 0
      %p296 = por %p294, %p295
      %p297 = scmp.ne.s32.totalorder %s289, %s291
      %p298 = scmp.eq.s32.totalorder %s29, 1
      %p299 = por %p297, %p298
      %p300 = scmp.ne.s32.totalorder %s291, %s292
      %p301 = scmp.eq.s32.totalorder %s29, 0
      %p302 = por %p300, %p301
      %p303 = scmp.ne.s32.totalorder %s291, %s292
      %p304 = scmp.eq.s32.totalorder %s30, 1
      %p305 = por %p303, %p304
      %p307 = scmp.ne.s32.totalorder %s292, %s306
      %p308 = scmp.eq.s32.totalorder %s30, 0
      %p309 = por %p307, %p308
      %s310 = ssub.s32 %s24, %s31
      %p311 = scmp.eq.s32.totalorder %s310, 0
      %s313 = sadd.s32 %s312, 1
      %s314 = scalar_select %p311, %s312, %s313
      %p317 = pneg %p311
      %p318 = scmp.eq.s32.totalorder %s24, 1
      %p319 = por %p317, %p318
      %p320 = scmp.ne.s32.totalorder %s312, %s315
      %p321 = scmp.eq.s32.totalorder %s24, 0
      %p322 = por %p320, %p321
      %p323 = scmp.ne.s32.totalorder %s312, %s315
      %p324 = scmp.eq.s32.totalorder %s29, 1
      %p325 = por %p323, %p324
      %p326 = scmp.ne.s32.totalorder %s315, %s316
      %p327 = scmp.eq.s32.totalorder %s29, 0
      %p328 = por %p326, %p327
      %p329 = scmp.ne.s32.totalorder %s315, %s316
      %p330 = scmp.eq.s32.totalorder %s30, 1
      %p331 = por %p329, %p330
      %p333 = scmp.ne.s32.totalorder %s316, %s332
      %p334 = scmp.eq.s32.totalorder %s30, 0
      %p335 = por %p333, %p334
      %p336 = scmp.le.s32.totalorder 1, %s24
      %p337 = scmp.lt.s32.totalorder %s24, 3
      %p338 = pnand %p336, %p337
      %p339 = pneg %p338
      // Predicated region
      $region9: #{tpu_custom_call.1} parent=5 // pred_check
        _
      $region10: #{tpu_custom_call.1} parent=5 // pred_check_branch
        %341 = sbr.rel (%p338) target = $region12
      $region11: #{tpu_custom_call.1} parent=5 // pred_region
        %s342 = ssub.s32 %s24, 1
        // Predicated region
        $region13: #{tpu_custom_call.1} parent=11 // pred_check
          %p343 = pneg %p71
        $region14: #{tpu_custom_call.1} parent=11 // pred_check_branch
          %345 = sbr.rel (%p343) target = $region16
        $region15: #{tpu_custom_call.1} parent=11 // pred_region
          _
        $region16: #{tpu_custom_call.1} parent=11 // pred_fallthru
          _
        // Predicated region
        $region17: #{tpu_custom_call.1} parent=11 // pred_check
          %p346 = pneg %p92
        $region18: #{tpu_custom_call.1} parent=11 // pred_check_branch
          %348 = sbr.rel (%p346) target = $region20
        $region19: #{tpu_custom_call.1} parent=11 // pred_region
          _
        $region20: #{tpu_custom_call.1} parent=11 // pred_fallthru
          _
        // Predicated region
        $region21: #{tpu_custom_call.1} parent=11 // pred_check
          %p349 = pneg %p113
        $region22: #{tpu_custom_call.1} parent=11 // pred_check_branch
          %351 = sbr.rel (%p349) target = $region24
        $region23: #{tpu_custom_call.1} parent=11 // pred_region
          _
        $region24: #{tpu_custom_call.1} parent=11 // pred_fallthru
          _
        // Predicated region
        $region25: #{tpu_custom_call.1} parent=11 // pred_check
          %p352 = pneg %p134
        $region26: #{tpu_custom_call.1} parent=11 // pred_check_branch
          %354 = sbr.rel (%p352) target = $region28
        $region27: #{tpu_custom_call.1} parent=11 // pred_region
          _
        $region28: #{tpu_custom_call.1} parent=11 // pred_fallthru
          _
        // Predicated region
        $region29: #{tpu_custom_call.1} parent=11 // pred_check
          %p355 = pneg %p155
        $region30: #{tpu_custom_call.1} parent=11 // pred_check_branch
          %357 = sbr.rel (%p355) target = $region32
        $region31: #{tpu_custom_call.1} parent=11 // pred_region
          %s359 = ssub.s32 512, 512
          %360 = vsyncadd [#allocation3], %s359
          %s361 = sshll.u32 [#allocation2], 4
          %s362 = int_to_ptr.vmem [resolvable:$true] %s361
          %367 = dma.hbm_to_vmem [thread:$0]  %s5, 512, %s362, [#allocation3], 128, 128, 8
        $region32: #{tpu_custom_call.1} parent=11 // pred_fallthru
          _
        // Predicated region
        $region33: #{tpu_custom_call.1} parent=11 // pred_check
          %p368 = pneg %p176
        $region34: #{tpu_custom_call.1} parent=11 // pred_check_branch
          %370 = sbr.rel (%p368) target = $region36
        $region35: #{tpu_custom_call.1} parent=11 // pred_region
          %s372 = ssub.s32 2048, 2048
          %373 = vsyncadd [#allocation6], %s372
          %s374 = sshll.u32 [#allocation5], 4
          %s375 = int_to_ptr.vmem [resolvable:$true] %s374
          %380 = dma.hbm_to_vmem [thread:$0]  %s6, 2048, %s375, [#allocation6], 256, 256, 16
        $region36: #{tpu_custom_call.1} parent=11 // pred_fallthru
          _
        // Predicated region
        $region37: #{tpu_custom_call.1} parent=11 // pred_check
          %p381 = pneg %p197
        $region38: #{tpu_custom_call.1} parent=11 // pred_check_branch
          %383 = sbr.rel (%p381) target = $region40
        $region39: #{tpu_custom_call.1} parent=11 // pred_region
          _
        $region40: #{tpu_custom_call.1} parent=11 // pred_fallthru
          _
        // Predicated region
        $region41: #{tpu_custom_call.1} parent=11 // pred_check
          %p384 = pneg %p218
        $region42: #{tpu_custom_call.1} parent=11 // pred_check_branch
          %386 = sbr.rel (%p384) target = $region44
        $region43: #{tpu_custom_call.1} parent=11 // pred_region
          _
        $region44: #{tpu_custom_call.1} parent=11 // pred_fallthru
          _
        // Predicated region
        $region45: #{tpu_custom_call.1} parent=11 // pred_check
          %p387 = pneg %p239
        $region46: #{tpu_custom_call.1} parent=11 // pred_check_branch
          %389 = sbr.rel (%p387) target = $region48
        $region47: #{tpu_custom_call.1} parent=11 // pred_region
          _
        $region48: #{tpu_custom_call.1} parent=11 // pred_fallthru
          _
        // Predicated region
        $region49: #{tpu_custom_call.1} parent=11 // pred_check
          %p390 = pneg %p260
        $region50: #{tpu_custom_call.1} parent=11 // pred_check_branch
          %392 = sbr.rel (%p390) target = $region52
        $region51: #{tpu_custom_call.1} parent=11 // pred_region
          _
        $region52: #{tpu_custom_call.1} parent=11 // pred_fallthru
          _
        // Predicated region
        $region53: #{tpu_custom_call.1} parent=11 // pred_check
          %p393 = pneg %p281
        $region54: #{tpu_custom_call.1} parent=11 // pred_check_branch
          %395 = sbr.rel (%p393) target = $region56
        $region55: #{tpu_custom_call.1} parent=11 // pred_region
          _
        $region56: #{tpu_custom_call.1} parent=11 // pred_fallthru
          _
        // Predicated region
        $region57: #{tpu_custom_call.1} parent=11 // pred_check
          %p396 = pneg %p302
        $region58: #{tpu_custom_call.1} parent=11 // pred_check_branch
          %398 = sbr.rel (%p396) target = $region60
        $region59: #{tpu_custom_call.1} parent=11 // pred_region
          _
        $region60: #{tpu_custom_call.1} parent=11 // pred_fallthru
          _
      $region12: #{tpu_custom_call.1} parent=5 // pred_fallthru
        _
      %p399 = scmp.lt.s32.totalorder %s24, 2
      // Predicated region
      $region61: #{tpu_custom_call.1} parent=5 // pred_check
        %p400 = pneg %p399
      $region62: #{tpu_custom_call.1} parent=5 // pred_check_branch
        %402 = sbr.rel (%p400) target = $region64
      $region63: #{tpu_custom_call.1} parent=5 // pred_region
        // Predicated region
        $region65: #{tpu_custom_call.1} parent=63 // pred_check
          %p403 = pneg %p44
        $region66: #{tpu_custom_call.1} parent=63 // pred_check_branch
          %405 = sbr.rel (%p403) target = $region68
        $region67: #{tpu_custom_call.1} parent=63 // pred_region
          %s406 = smul.u32 16, %s24
          %p407 = scmp.lt.s32.totalorder %s406, 31
          %s408 = scalar_select %p407, %s406, 31
          %s409 = smul.addr %s408, 2
          %s410 = smul.addr %s409, 8
          %s411 = scalar_lea.vmem %s0, %s410
          %s412 = smul.u32 16, %s24
        $region68: #{tpu_custom_call.1} parent=63 // pred_fallthru
          _
      $region64: #{tpu_custom_call.1} parent=5 // pred_fallthru
        _
      %p413 = scmp.le.s32.totalorder 1, %s24
      %p414 = scmp.lt.s32.totalorder %s24, 3
      %p415 = pnand %p413, %p414
      %p416 = pneg %p415
      // Predicated region
      $region69: #{tpu_custom_call.1} parent=5 // pred_check
        _
      $region70: #{tpu_custom_call.1} parent=5 // pred_check_branch
        %418 = sbr.rel (%p415) target = $region72
      $region71: #{tpu_custom_call.1} parent=5 // pred_region
        %s419 = ssub.s32 %s24, 1
        // Predicated region
        $region73: #{tpu_custom_call.1} parent=71 // pred_check
          %p420 = pneg %p155
        $region74: #{tpu_custom_call.1} parent=71 // pred_check_branch
          %422 = sbr.rel (%p420) target = $region76
        $region75: #{tpu_custom_call.1} parent=71 // pred_region
          %423 = dma.done [#allocation3], 512
        $region76: #{tpu_custom_call.1} parent=71 // pred_fallthru
          _
        // Predicated region
        $region77: #{tpu_custom_call.1} parent=71 // pred_check
          %p424 = pneg %p176
        $region78: #{tpu_custom_call.1} parent=71 // pred_check_branch
          %426 = sbr.rel (%p424) target = $region80
        $region79: #{tpu_custom_call.1} parent=71 // pred_region
          %427 = dma.done [#allocation6], 2048
        $region80: #{tpu_custom_call.1} parent=71 // pred_fallthru
          _
        %s428 = smul.u32 16, %s29
        %p429 = scmp.lt.s32.totalorder %s428, 31
        %s430 = scalar_select %p429, %s428, 31
        %s431 = smul.addr %s430, 2
        %s432 = smul.addr %s431, 8
        %s433 = scalar_lea.vmem %s0, %s432
        %p434 = pneg %p50
        %p435 = pneg %p47
        %p436 = pneg %p71
        %p437 = pneg %p68
        %p438 = pneg %p92
        %p439 = pneg %p89
        %p440 = pneg %p113
        %p441 = pneg %p110
        %p442 = pneg %p134
        %p443 = pneg %p131
        %p444 = pneg %p155
        %p445 = pneg %p152
        %p446 = pneg %p176
        %p447 = pneg %p173
        %p448 = pneg %p197
        %p449 = pneg %p194
        %p450 = pneg %p218
        %p451 = pneg %p215
        %p452 = pneg %p239
        %p453 = pneg %p236
        %p454 = pneg %p260
        %p455 = pneg %p257
        %p456 = pneg %p281
        %p457 = pneg %p278
        %p458 = pneg %p302
        %p459 = pneg %p299
        %p460 = pneg %p328
        %p461 = pneg %p325
        %s462 = sand.u32 %s315, 1
        %s463 = scalar_lea.sflag [#allocation4], %s462
        %s464 = sand.u32 %s315, 1
        %s465 = smul.addr %s464, 256
        %s466 = scalar_lea.vmem [#allocation7], %s465
        %s467 = smul.u32 16, %s29
        %p468 = scmp.lt.s32.totalorder %s467, 31
        %s469 = scalar_select %p468, %s467, 31
        %s470 = smul.addr %s469, 2
        %s471 = smul.addr %s470, 8
        %s472 = scalar_lea.vmem %s0, %s471
        %s473 = smul.u32 16, %s29
        %s474 = smul.u32 16, %s29
        %v475 = vld [vmem:[%s472] sm:$0xff]
        %v476 = vld [vmem:[%s472 + $0x8] sm:$0xff]
        %v477 = vld [vmem:[%s472 + $0x10] sm:$0xff]
        %v478 = vld [vmem:[%s472 + $0x18] sm:$0xff]
        %v479 = vld [vmem:[%s472 + $0x20] sm:$0xff]
        %v480 = vld [vmem:[%s472 + $0x28] sm:$0xff]
        %v481 = vld [vmem:[%s472 + $0x30] sm:$0xff]
        %v482 = vld [vmem:[%s472 + $0x38] sm:$0xff]
        %v483 = vld [vmem:[%s472 + $0x40] sm:$0xff]
        %v484 = vld [vmem:[%s472 + $0x48] sm:$0xff]
        %v485 = vld [vmem:[%s472 + $0x50] sm:$0xff]
        %v486 = vld [vmem:[%s472 + $0x58] sm:$0xff]
        %v487 = vld [vmem:[%s472 + $0x60] sm:$0xff]
        %v488 = vld [vmem:[%s472 + $0x68] sm:$0xff]
        %v489 = vld [vmem:[%s472 + $0x70] sm:$0xff]
        %v490 = vld [vmem:[%s472 + $0x78] sm:$0xff]
        %v491 = vld [vmem:[%s472 + $0x80] sm:$0xff]
        %v492 = vld [vmem:[%s472 + $0x88] sm:$0xff]
        %v493 = vld [vmem:[%s472 + $0x90] sm:$0xff]
        %v494 = vld [vmem:[%s472 + $0x98] sm:$0xff]
        %v495 = vld [vmem:[%s472 + $0xa0] sm:$0xff]
        %v496 = vld [vmem:[%s472 + $0xa8] sm:$0xff]
        %v497 = vld [vmem:[%s472 + $0xb0] sm:$0xff]
        %v498 = vld [vmem:[%s472 + $0xb8] sm:$0xff]
        %v499 = vld [vmem:[%s472 + $0xc0] sm:$0xff]
        %v500 = vld [vmem:[%s472 + $0xc8] sm:$0xff]
        %v501 = vld [vmem:[%s472 + $0xd0] sm:$0xff]
        %v502 = vld [vmem:[%s472 + $0xd8] sm:$0xff]
        %v503 = vld [vmem:[%s472 + $0xe0] sm:$0xff]
        %v504 = vld [vmem:[%s472 + $0xe8] sm:$0xff]
        %v505 = vld [vmem:[%s472 + $0xf0] sm:$0xff]
        %v506 = vld [vmem:[%s472 + $0xf8] sm:$0xff]
        %v507 = vld [vmem:[%s1] sm:$0xff]
        %v508 = vld [vmem:[%s1 + $0x8] sm:$0xff]
        %v509 = vld [vmem:[%s1 + $0x10] sm:$0xff]
        %v510 = vld [vmem:[%s1 + $0x18] sm:$0xff]
        %v511 = vld [vmem:[%s1 + $0x20] sm:$0xff]
        %v512 = vld [vmem:[%s1 + $0x28] sm:$0xff]
        %v513 = vld [vmem:[%s1 + $0x30] sm:$0xff]
        %v514 = vld [vmem:[%s1 + $0x38] sm:$0xff]
        %v515 = vld [vmem:[%s1 + $0x40] sm:$0xff]
        %v516 = vld [vmem:[%s1 + $0x48] sm:$0xff]
        %v517 = vld [vmem:[%s1 + $0x50] sm:$0xff]
        %v518 = vld [vmem:[%s1 + $0x58] sm:$0xff]
        %v519 = vld [vmem:[%s1 + $0x60] sm:$0xff]
        %v520 = vld [vmem:[%s1 + $0x68] sm:$0xff]
        %v521 = vld [vmem:[%s1 + $0x70] sm:$0xff]
        %v522 = vld [vmem:[%s1 + $0x78] sm:$0xff]
        %v523 = vld [vmem:[%s1 + $0x80] sm:$0xff]
        %v524 = vld [vmem:[%s1 + $0x88] sm:$0xff]
        %v525 = vld [vmem:[%s1 + $0x90] sm:$0xff]
        %v526 = vld [vmem:[%s1 + $0x98] sm:$0xff]
        %v527 = vld [vmem:[%s1 + $0xa0] sm:$0xff]
        %v528 = vld [vmem:[%s1 + $0xa8] sm:$0xff]
        %v529 = vld [vmem:[%s1 + $0xb0] sm:$0xff]
        %v530 = vld [vmem:[%s1 + $0xb8] sm:$0xff]
        %v531 = vld [vmem:[%s1 + $0xc0] sm:$0xff]
        %v532 = vld [vmem:[%s1 + $0xc8] sm:$0xff]
        %v533 = vld [vmem:[%s1 + $0xd0] sm:$0xff]
        %v534 = vld [vmem:[%s1 + $0xd8] sm:$0xff]
        %v535 = vld [vmem:[%s1 + $0xe0] sm:$0xff]
        %v536 = vld [vmem:[%s1 + $0xe8] sm:$0xff]
        %v537 = vld [vmem:[%s1 + $0xf0] sm:$0xff]
        %v538 = vld [vmem:[%s1 + $0xf8] sm:$0xff]
        %v539 = vld [vmem:[%s7] sm:$0x1]
        %v541 = vlaneseq
        %v542 = vshrl.u32 %v541, 7
        %v543 = vsub.s32 0, %v542
        %v544 = vrot.slane %v539, %v543
        %546 = vmatprep.subr.mxu0 0.0
        %547 = vmatpush1.msra.mxu0 %v507
        %548 = vmatprep.subr.mxu0 0.0
        %549 = vmatpush1.msra.mxu0 %v508
        %550 = vmatprep.subr.mxu0 0.0
        %551 = vmatpush1.msra.mxu0 %v509
        %552 = vmatprep.subr.mxu0 0.0
        %553 = vmatpush1.msra.mxu0 %v510
        %554 = vmatprep.subr.mxu0 0.0
        %555 = vmatpush1.msra.mxu0 %v511
        %556 = vmatprep.subr.mxu0 0.0
        %557 = vmatpush1.msra.mxu0 %v512
        %558 = vmatprep.subr.mxu0 0.0
        %559 = vmatpush1.msra.mxu0 %v513
        %560 = vmatprep.subr.mxu0 0.0
        %561 = vmatpush1.msra.mxu0 %v514
        %562 = vmatprep.subr.mxu0 0.0
        %563 = vmatpush1.msra.mxu0 %v515
        %564 = vmatprep.subr.mxu0 0.0
        %565 = vmatpush1.msra.mxu0 %v516
        %566 = vmatprep.subr.mxu0 0.0
        %567 = vmatpush1.msra.mxu0 %v517
        %568 = vmatprep.subr.mxu0 0.0
        %569 = vmatpush1.msra.mxu0 %v518
        %570 = vmatprep.subr.mxu0 0.0
        %571 = vmatpush1.msra.mxu0 %v519
        %572 = vmatprep.subr.mxu0 0.0
        %573 = vmatpush1.msra.mxu0 %v520
        %574 = vmatprep.subr.mxu0 0.0
        %575 = vmatpush1.msra.mxu0 %v521
        %576 = vmatprep.subr.mxu0 0.0
        %577 = vmatpush1.msra.mxu0 %v522
        %578 = vmatprep.subr.mxu0 0.0
        %579 = vmatpush1.msra.mxu0 %v523
        %580 = vmatprep.subr.mxu0 0.0
        %581 = vmatpush1.msra.mxu0 %v524
        %582 = vmatprep.subr.mxu0 0.0
        %583 = vmatpush1.msra.mxu0 %v525
        %584 = vmatprep.subr.mxu0 0.0
        %585 = vmatpush1.msra.mxu0 %v526
        %586 = vmatprep.subr.mxu0 0.0
        %587 = vmatpush1.msra.mxu0 %v527
        %588 = vmatprep.subr.mxu0 0.0
        %589 = vmatpush1.msra.mxu0 %v528
        %590 = vmatprep.subr.mxu0 0.0
        %591 = vmatpush1.msra.mxu0 %v529
        %592 = vmatprep.subr.mxu0 0.0
        %593 = vmatpush1.msra.mxu0 %v530
        %594 = vmatprep.subr.mxu0 0.0
        %595 = vmatpush1.msra.mxu0 %v531
        %596 = vmatprep.subr.mxu0 0.0
        %597 = vmatpush1.msra.mxu0 %v532
        %598 = vmatprep.subr.mxu0 0.0
        %599 = vmatpush1.msra.mxu0 %v533
        %600 = vmatprep.subr.mxu0 0.0
        %601 = vmatpush1.msra.mxu0 %v534
        %602 = vmatprep.subr.mxu0 0.0
        %603 = vmatpush1.msra.mxu0 %v535
        %604 = vmatprep.subr.mxu0 0.0
        %605 = vmatpush1.msra.mxu0 %v536
        %606 = vmatprep.subr.mxu0 0.0
        %607 = vmatpush1.msra.mxu0 %v537
        %608 = vmatprep.subr.mxu0 0.0
        %609 = vmatpush1.msra.mxu0 %v538
        %610 = vmatprep.mubr.f32.mxu0 %v476
        %611 = vmatmul.mubr.f32.gmra.mrb[0].mxu0 %v475
        %v612 = vpop.f32.mrb[0].mxu0
        %v613 = vadd.f32 %v544, %v612
        %v614 = vpop.f32.mrb[0].mxu0
        %615 = vmatprep.mubr.f32.mxu0 %v478
        %616 = vmatmul.mubr.f32.gmra.mrb[0].mxu0 %v477
        %v617 = vpop.f32.mrb[0].mxu0
        %v618 = vadd.f32 %v544, %v617
        %v619 = vpop.f32.mrb[0].mxu0
        %620 = vmatprep.mubr.f32.mxu0 %v480
        %621 = vmatmul.mubr.f32.gmra.mrb[0].mxu0 %v479
        %v622 = vpop.f32.mrb[0].mxu0
        %v623 = vadd.f32 %v544, %v622
        %v624 = vpop.f32.mrb[0].mxu0
        %625 = vmatprep.mubr.f32.mxu0 %v482
        %626 = vmatmul.mubr.f32.gmra.mrb[0].mxu0 %v481
        %v627 = vpop.f32.mrb[0].mxu0
        %v628 = vadd.f32 %v544, %v627
        %v629 = vpop.f32.mrb[0].mxu0
        %630 = vmatprep.mubr.f32.mxu0 %v484
        %631 = vmatmul.mubr.f32.gmra.mrb[0].mxu0 %v483
        %v632 = vpop.f32.mrb[0].mxu0
        %v633 = vadd.f32 %v544, %v632
        %v634 = vpop.f32.mrb[0].mxu0
        %635 = vmatprep.mubr.f32.mxu0 %v486
        %636 = vmatmul.mubr.f32.gmra.mrb[0].mxu0 %v485
        %v637 = vpop.f32.mrb[0].mxu0
        %v638 = vadd.f32 %v544, %v637
        %v639 = vpop.f32.mrb[0].mxu0
        %640 = vmatprep.mubr.f32.mxu0 %v488
        %641 = vmatmul.mubr.f32.gmra.mrb[0].mxu0 %v487
        %v642 = vpop.f32.mrb[0].mxu0
        %v643 = vadd.f32 %v544, %v642
        %v644 = vpop.f32.mrb[0].mxu0
        %645 = vmatprep.mubr.f32.mxu0 %v490
        %646 = vmatmul.mubr.f32.gmra.mrb[0].mxu0 %v489
        %v647 = vpop.f32.mrb[0].mxu0
        %v648 = vadd.f32 %v544, %v647
        %v649 = vpop.f32.mrb[0].mxu0
        %650 = vmatprep.mubr.f32.mxu0 %v492
        %651 = vmatmul.mubr.f32.gmra.mrb[0].mxu0 %v491
        %v652 = vpop.f32.mrb[0].mxu0
        %v653 = vadd.f32 %v544, %v652
        %v654 = vpop.f32.mrb[0].mxu0
        %655 = vmatprep.mubr.f32.mxu0 %v494
        %656 = vmatmul.mubr.f32.gmra.mrb[0].mxu0 %v493
        %v657 = vpop.f32.mrb[0].mxu0
        %v658 = vadd.f32 %v544, %v657
        %v659 = vpop.f32.mrb[0].mxu0
        %660 = vmatprep.mubr.f32.mxu0 %v496
        %661 = vmatmul.mubr.f32.gmra.mrb[0].mxu0 %v495
        %v662 = vpop.f32.mrb[0].mxu0
        %v663 = vadd.f32 %v544, %v662
        %v664 = vpop.f32.mrb[0].mxu0
        %665 = vmatprep.mubr.f32.mxu0 %v498
        %666 = vmatmul.mubr.f32.gmra.mrb[0].mxu0 %v497
        %v667 = vpop.f32.mrb[0].mxu0
        %v668 = vadd.f32 %v544, %v667
        %v669 = vpop.f32.mrb[0].mxu0
        %670 = vmatprep.mubr.f32.mxu0 %v500
        %671 = vmatmul.mubr.f32.gmra.mrb[0].mxu0 %v499
        %v672 = vpop.f32.mrb[0].mxu0
        %v673 = vadd.f32 %v544, %v672
        %v674 = vpop.f32.mrb[0].mxu0
        %675 = vmatprep.mubr.f32.mxu0 %v502
        %676 = vmatmul.mubr.f32.gmra.mrb[0].mxu0 %v501
        %v677 = vpop.f32.mrb[0].mxu0
        %v678 = vadd.f32 %v544, %v677
        %v679 = vpop.f32.mrb[0].mxu0
        %680 = vmatprep.mubr.f32.mxu0 %v504
        %681 = vmatmul.mubr.f32.gmra.mrb[0].mxu0 %v503
        %v682 = vpop.f32.mrb[0].mxu0
        %v683 = vadd.f32 %v544, %v682
        %v684 = vpop.f32.mrb[0].mxu0
        %685 = vmatprep.mubr.f32.mxu0 %v506
        %686 = vmatmul.mubr.f32.gmra.mrb[0].mxu0 %v505
        %v687 = vpop.f32.mrb[0].mxu0
        %v688 = vadd.f32 %v544, %v687
        %v689 = vpop.f32.mrb[0].mxu0
        %690 = vdwg.mxu0
        %vm691 = vcmp.gt.f32.partialorder %v613, 20.0
        %vm692 = vcmp.gt.f32.partialorder %v618, 20.0
        %vm693 = vcmp.gt.f32.partialorder %v623, 20.0
        %vm694 = vcmp.gt.f32.partialorder %v628, 20.0
        %vm695 = vcmp.gt.f32.partialorder %v633, 20.0
        %vm696 = vcmp.gt.f32.partialorder %v638, 20.0
        %vm697 = vcmp.gt.f32.partialorder %v643, 20.0
        %vm698 = vcmp.gt.f32.partialorder %v648, 20.0
        %vm699 = vcmp.gt.f32.partialorder %v653, 20.0
        %vm700 = vcmp.gt.f32.partialorder %v658, 20.0
        %vm701 = vcmp.gt.f32.partialorder %v663, 20.0
        %vm702 = vcmp.gt.f32.partialorder %v668, 20.0
        %vm703 = vcmp.gt.f32.partialorder %v673, 20.0
        %vm704 = vcmp.gt.f32.partialorder %v678, 20.0
        %vm705 = vcmp.gt.f32.partialorder %v683, 20.0
        %vm706 = vcmp.gt.f32.partialorder %v688, 20.0
        %v707 = vmin.f32 %v613, 20.0
        %v708 = vmin.f32 %v618, 20.0
        %v709 = vmin.f32 %v623, 20.0
        %v710 = vmin.f32 %v628, 20.0
        %v711 = vmin.f32 %v633, 20.0
        %v712 = vmin.f32 %v638, 20.0
        %v713 = vmin.f32 %v643, 20.0
        %v714 = vmin.f32 %v648, 20.0
        %v715 = vmin.f32 %v653, 20.0
        %v716 = vmin.f32 %v658, 20.0
        %v717 = vmin.f32 %v663, 20.0
        %v718 = vmin.f32 %v668, 20.0
        %v719 = vmin.f32 %v673, 20.0
        %v720 = vmin.f32 %v678, 20.0
        %v721 = vmin.f32 %v683, 20.0
        %v722 = vmin.f32 %v688, 20.0
        %v723 = vmul.f32 %v707, 1.442695
        %v724 = vpow.pop %v723
        %v725 = vmul.f32 %v708, 1.442695
        %v726 = vpow.pop %v725
        %v727 = vmul.f32 %v709, 1.442695
        %v728 = vpow.pop %v727
        %v729 = vmul.f32 %v710, 1.442695
        %v730 = vpow.pop %v729
        %v731 = vmul.f32 %v711, 1.442695
        %v732 = vpow.pop %v731
        %v733 = vmul.f32 %v712, 1.442695
        %v734 = vpow.pop %v733
        %v735 = vmul.f32 %v713, 1.442695
        %v736 = vpow.pop %v735
        %v737 = vmul.f32 %v714, 1.442695
        %v738 = vpow.pop %v737
        %v739 = vmul.f32 %v715, 1.442695
        %v740 = vpow.pop %v739
        %v741 = vmul.f32 %v716, 1.442695
        %v742 = vpow.pop %v741
        %v743 = vmul.f32 %v717, 1.442695
        %v744 = vpow.pop %v743
        %v745 = vmul.f32 %v718, 1.442695
        %v746 = vpow.pop %v745
        %v747 = vmul.f32 %v719, 1.442695
        %v748 = vpow.pop %v747
        %v749 = vmul.f32 %v720, 1.442695
        %v750 = vpow.pop %v749
        %v751 = vmul.f32 %v721, 1.442695
        %v752 = vpow.pop %v751
        %v753 = vmul.f32 %v722, 1.442695
        %v754 = vpow.pop %v753
        %v755 = vadd.f32 %v724, 1.0
        %v756 = vlog2.pop %v755
        %v757 = vmul.f32 %v756, 0.6931472
        %v758 = vmul.f32 -0.5, %v724
        %v759 = vadd.f32 %v758, 1.0
        %v760 = vmul.f32 %v759, %v724
        %v761 = vand.u32 2147483647, %v724
        %vm762 = vcmp.lt.f32.partialorder %v761, 0.0004427343
        %v763 = vsel %vm762, %v760, %v757
        %v764 = vadd.f32 %v726, 1.0
        %v765 = vlog2.pop %v764
        %v766 = vmul.f32 %v765, 0.6931472
        %v767 = vmul.f32 -0.5, %v726
        %v768 = vadd.f32 %v767, 1.0
        %v769 = vmul.f32 %v768, %v726
        %v770 = vand.u32 2147483647, %v726
        %vm771 = vcmp.lt.f32.partialorder %v770, 0.0004427343
        %v772 = vsel %vm771, %v769, %v766
        %v773 = vadd.f32 %v728, 1.0
        %v774 = vlog2.pop %v773
        %v775 = vmul.f32 %v774, 0.6931472
        %v776 = vmul.f32 -0.5, %v728
        %v777 = vadd.f32 %v776, 1.0
        %v778 = vmul.f32 %v777, %v728
        %v779 = vand.u32 2147483647, %v728
        %vm780 = vcmp.lt.f32.partialorder %v779, 0.0004427343
        %v781 = vsel %vm780, %v778, %v775
        %v782 = vadd.f32 %v730, 1.0
        %v783 = vlog2.pop %v782
        %v784 = vmul.f32 %v783, 0.6931472
        %v785 = vmul.f32 -0.5, %v730
        %v786 = vadd.f32 %v785, 1.0
        %v787 = vmul.f32 %v786, %v730
        %v788 = vand.u32 2147483647, %v730
        %vm789 = vcmp.lt.f32.partialorder %v788, 0.0004427343
        %v790 = vsel %vm789, %v787, %v784
        %v791 = vadd.f32 %v732, 1.0
        %v792 = vlog2.pop %v791
        %v793 = vmul.f32 %v792, 0.6931472
        %v794 = vmul.f32 -0.5, %v732
        %v795 = vadd.f32 %v794, 1.0
        %v796 = vmul.f32 %v795, %v732
        %v797 = vand.u32 2147483647, %v732
        %vm798 = vcmp.lt.f32.partialorder %v797, 0.0004427343
        %v799 = vsel %vm798, %v796, %v793
        %v800 = vadd.f32 %v734, 1.0
        %v801 = vlog2.pop %v800
        %v802 = vmul.f32 %v801, 0.6931472
        %v803 = vmul.f32 -0.5, %v734
        %v804 = vadd.f32 %v803, 1.0
        %v805 = vmul.f32 %v804, %v734
        %v806 = vand.u32 2147483647, %v734
        %vm807 = vcmp.lt.f32.partialorder %v806, 0.0004427343
        %v808 = vsel %vm807, %v805, %v802
        %v809 = vadd.f32 %v736, 1.0
        %v810 = vlog2.pop %v809
        %v811 = vmul.f32 %v810, 0.6931472
        %v812 = vmul.f32 -0.5, %v736
        %v813 = vadd.f32 %v812, 1.0
        %v814 = vmul.f32 %v813, %v736
        %v815 = vand.u32 2147483647, %v736
        %vm816 = vcmp.lt.f32.partialorder %v815, 0.0004427343
        %v817 = vsel %vm816, %v814, %v811
        %v818 = vadd.f32 %v738, 1.0
        %v819 = vlog2.pop %v818
        %v820 = vmul.f32 %v819, 0.6931472
        %v821 = vmul.f32 -0.5, %v738
        %v822 = vadd.f32 %v821, 1.0
        %v823 = vmul.f32 %v822, %v738
        %v824 = vand.u32 2147483647, %v738
        %vm825 = vcmp.lt.f32.partialorder %v824, 0.0004427343
        %v826 = vsel %vm825, %v823, %v820
        %v827 = vadd.f32 %v740, 1.0
        %v828 = vlog2.pop %v827
        %v829 = vmul.f32 %v828, 0.6931472
        %v830 = vmul.f32 -0.5, %v740
        %v831 = vadd.f32 %v830, 1.0
        %v832 = vmul.f32 %v831, %v740
        %v833 = vand.u32 2147483647, %v740
        %vm834 = vcmp.lt.f32.partialorder %v833, 0.0004427343
        %v835 = vsel %vm834, %v832, %v829
        %v836 = vadd.f32 %v742, 1.0
        %v837 = vlog2.pop %v836
        %v838 = vmul.f32 %v837, 0.6931472
        %v839 = vmul.f32 -0.5, %v742
        %v840 = vadd.f32 %v839, 1.0
        %v841 = vmul.f32 %v840, %v742
        %v842 = vand.u32 2147483647, %v742
        %vm843 = vcmp.lt.f32.partialorder %v842, 0.0004427343
        %v844 = vsel %vm843, %v841, %v838
        %v845 = vadd.f32 %v744, 1.0
        %v846 = vlog2.pop %v845
        %v847 = vmul.f32 %v846, 0.6931472
        %v848 = vmul.f32 -0.5, %v744
        %v849 = vadd.f32 %v848, 1.0
        %v850 = vmul.f32 %v849, %v744
        %v851 = vand.u32 2147483647, %v744
        %vm852 = vcmp.lt.f32.partialorder %v851, 0.0004427343
        %v853 = vsel %vm852, %v850, %v847
        %v854 = vadd.f32 %v746, 1.0
        %v855 = vlog2.pop %v854
        %v856 = vmul.f32 %v855, 0.6931472
        %v857 = vmul.f32 -0.5, %v746
        %v858 = vadd.f32 %v857, 1.0
        %v859 = vmul.f32 %v858, %v746
        %v860 = vand.u32 2147483647, %v746
        %vm861 = vcmp.lt.f32.partialorder %v860, 0.0004427343
        %v862 = vsel %vm861, %v859, %v856
        %v863 = vadd.f32 %v748, 1.0
        %v864 = vlog2.pop %v863
        %v865 = vmul.f32 %v864, 0.6931472
        %v866 = vmul.f32 -0.5, %v748
        %v867 = vadd.f32 %v866, 1.0
        %v868 = vmul.f32 %v867, %v748
        %v869 = vand.u32 2147483647, %v748
        %vm870 = vcmp.lt.f32.partialorder %v869, 0.0004427343
        %v871 = vsel %vm870, %v868, %v865
        %v872 = vadd.f32 %v750, 1.0
        %v873 = vlog2.pop %v872
        %v874 = vmul.f32 %v873, 0.6931472
        %v875 = vmul.f32 -0.5, %v750
        %v876 = vadd.f32 %v875, 1.0
        %v877 = vmul.f32 %v876, %v750
        %v878 = vand.u32 2147483647, %v750
        %vm879 = vcmp.lt.f32.partialorder %v878, 0.0004427343
        %v880 = vsel %vm879, %v877, %v874
        %v881 = vadd.f32 %v752, 1.0
        %v882 = vlog2.pop %v881
        %v883 = vmul.f32 %v882, 0.6931472
        %v884 = vmul.f32 -0.5, %v752
        %v885 = vadd.f32 %v884, 1.0
        %v886 = vmul.f32 %v885, %v752
        %v887 = vand.u32 2147483647, %v752
        %vm888 = vcmp.lt.f32.partialorder %v887, 0.0004427343
        %v889 = vsel %vm888, %v886, %v883
        %v890 = vadd.f32 %v754, 1.0
        %v891 = vlog2.pop %v890
        %v892 = vmul.f32 %v891, 0.6931472
        %v893 = vmul.f32 -0.5, %v754
        %v894 = vadd.f32 %v893, 1.0
        %v895 = vmul.f32 %v894, %v754
        %v896 = vand.u32 2147483647, %v754
        %vm897 = vcmp.lt.f32.partialorder %v896, 0.0004427343
        %v898 = vsel %vm897, %v895, %v892
        %v899 = vsel %vm691, %v613, %v763
        %v900 = vsel %vm692, %v618, %v772
        %v901 = vsel %vm693, %v623, %v781
        %v902 = vsel %vm694, %v628, %v790
        %v903 = vsel %vm695, %v633, %v799
        %v904 = vsel %vm696, %v638, %v808
        %v905 = vsel %vm697, %v643, %v817
        %v906 = vsel %vm698, %v648, %v826
        %v907 = vsel %vm699, %v653, %v835
        %v908 = vsel %vm700, %v658, %v844
        %v909 = vsel %vm701, %v663, %v853
        %v910 = vsel %vm702, %v668, %v862
        %v911 = vsel %vm703, %v673, %v871
        %v912 = vsel %vm704, %v678, %v880
        %v913 = vsel %vm705, %v683, %v889
        %v914 = vsel %vm706, %v688, %v898
        %v915 = vld [vmem:[%s2] sm:$0xff]
        %v916 = vld [vmem:[%s2 + $0x8] sm:$0xff]
        %v917 = vld [vmem:[%s2 + $0x10] sm:$0xff]
        %v918 = vld [vmem:[%s2 + $0x18] sm:$0xff]
        %v919 = vld [vmem:[%s2 + $0x20] sm:$0xff]
        %v920 = vld [vmem:[%s2 + $0x28] sm:$0xff]
        %v921 = vld [vmem:[%s2 + $0x30] sm:$0xff]
        %v922 = vld [vmem:[%s2 + $0x38] sm:$0xff]
        %v923 = vld [vmem:[%s8] sm:$0x1]
        %v925 = vlaneseq
        %v926 = vshrl.u32 %v925, 7
        %v927 = vsub.s32 0, %v926
        %v928 = vrot.slane %v923, %v927
        %vm930 = vcmask 523264
        %v932 = vsel %vm930, %v899, 0
        %v935 = vsel %vm930, %v900, 0
        %v938 = vsel %vm930, %v901, 0
        %v941 = vsel %vm930, %v902, 0
        %v944 = vsel %vm930, %v903, 0
        %v947 = vsel %vm930, %v904, 0
        %v950 = vsel %vm930, %v905, 0
        %v953 = vsel %vm930, %v906, 0
        %v956 = vsel %vm930, %v907, 0
        %v959 = vsel %vm930, %v908, 0
        %v962 = vsel %vm930, %v909, 0
        %v965 = vsel %vm930, %v910, 0
        %v968 = vsel %vm930, %v911, 0
        %v971 = vsel %vm930, %v912, 0
        %v974 = vsel %vm930, %v913, 0
        %v977 = vsel %vm930, %v914, 0
        %979 = vmatprep.subr.mxu0 0.0
        %980 = vmatpush1.msra.mxu0 %v915
        %981 = vmatprep.subr.mxu0 0.0
        %982 = vmatpush1.msra.mxu0 %v916
        %983 = vmatprep.subr.mxu0 0.0
        %984 = vmatpush1.msra.mxu0 %v917
        %985 = vmatprep.subr.mxu0 0.0
        %986 = vmatpush1.msra.mxu0 %v918
        %987 = vmatprep.subr.mxu0 0.0
        %988 = vmatpush1.msra.mxu0 %v919
        %989 = vmatprep.subr.mxu0 0.0
        %990 = vmatpush1.msra.mxu0 %v920
        %991 = vmatprep.subr.mxu0 0.0
        %992 = vmatpush1.msra.mxu0 %v921
        %993 = vmatprep.subr.mxu0 0.0
        %994 = vmatpush1.msra.mxu0 %v922
        %995 = vmatprep.subr.mxu0 0.0
        %996 = vmatpush1.msra.mxu0 0.0
        %997 = vmatprep.subr.mxu0 0.0
        %998 = vmatpush1.msra.mxu0 0.0
        %999 = vmatprep.subr.mxu0 0.0
        %1000 = vmatpush1.msra.mxu0 0.0
        %1001 = vmatprep.subr.mxu0 0.0
        %1002 = vmatpush1.msra.mxu0 0.0
        %1003 = vmatprep.subr.mxu0 0.0
        %1004 = vmatpush1.msra.mxu0 0.0
        %1005 = vmatprep.subr.mxu0 0.0
        %1006 = vmatpush1.msra.mxu0 0.0
        %1007 = vmatprep.subr.mxu0 0.0
        %1008 = vmatpush1.msra.mxu0 0.0
        %1009 = vmatprep.subr.mxu0 0.0
        %1010 = vmatpush1.msra.mxu0 0.0
        %1011 = vmatprep.subr.mxu0 0.0
        %1012 = vmatpush1.msra.mxu0 0.0
        %1013 = vmatprep.subr.mxu0 0.0
        %1014 = vmatpush1.msra.mxu0 0.0
        %1015 = vmatprep.subr.mxu0 0.0
        %1016 = vmatpush1.msra.mxu0 0.0
        %1017 = vmatprep.subr.mxu0 0.0
        %1018 = vmatpush1.msra.mxu0 0.0
        %1019 = vmatprep.subr.mxu0 0.0
        %1020 = vmatpush1.msra.mxu0 0.0
        %1021 = vmatprep.subr.mxu0 0.0
        %1022 = vmatpush1.msra.mxu0 0.0
        %1023 = vmatprep.subr.mxu0 0.0
        %1024 = vmatpush1.msra.mxu0 0.0
        %1025 = vmatprep.subr.mxu0 0.0
        %1026 = vmatpush1.msra.mxu0 0.0
        %1027 = vmatprep.subr.mxu0 0.0
        %1028 = vmatpush1.msra.mxu0 0.0
        %1029 = vmatprep.subr.mxu0 0.0
        %1030 = vmatpush1.msra.mxu0 0.0
        %1031 = vmatprep.subr.mxu0 0.0
        %1032 = vmatpush1.msra.mxu0 0.0
        %1033 = vmatprep.subr.mxu0 0.0
        %1034 = vmatpush1.msra.mxu0 0.0
        %1035 = vmatprep.subr.mxu0 0.0
        %1036 = vmatpush1.msra.mxu0 0.0
        %1037 = vmatprep.subr.mxu0 0.0
        %1038 = vmatpush1.msra.mxu0 0.0
        %1039 = vmatprep.subr.mxu0 0.0
        %1040 = vmatpush1.msra.mxu0 0.0
        %1041 = vmatprep.subr.mxu0 0.0
        %1042 = vmatpush1.msra.mxu0 0.0
        %1043 = vmatprep.mubr.f32.mxu0 0.0
        %1044 = vmatmul.mubr.f32.gmra.mrb[0].mxu0 %v932
        %v1045 = vpop.f32.mrb[0].mxu0
        %v1046 = vadd.f32 %v928, %v1045
        %v1047 = vpop.f32.mrb[0].mxu0
        %1048 = vmatprep.mubr.f32.mxu0 0.0
        %1049 = vmatmul.mubr.f32.gmra.mrb[0].mxu0 %v935
        %v1050 = vpop.f32.mrb[0].mxu0
        %v1051 = vadd.f32 %v928, %v1050
        %v1052 = vpop.f32.mrb[0].mxu0
        %1053 = vmatprep.mubr.f32.mxu0 0.0
        %1054 = vmatmul.mubr.f32.gmra.mrb[0].mxu0 %v938
        %v1055 = vpop.f32.mrb[0].mxu0
        %v1056 = vadd.f32 %v928, %v1055
        %v1057 = vpop.f32.mrb[0].mxu0
        %1058 = vmatprep.mubr.f32.mxu0 0.0
        %1059 = vmatmul.mubr.f32.gmra.mrb[0].mxu0 %v941
        %v1060 = vpop.f32.mrb[0].mxu0
        %v1061 = vadd.f32 %v928, %v1060
        %v1062 = vpop.f32.mrb[0].mxu0
        %1063 = vmatprep.mubr.f32.mxu0 0.0
        %1064 = vmatmul.mubr.f32.gmra.mrb[0].mxu0 %v944
        %v1065 = vpop.f32.mrb[0].mxu0
        %v1066 = vadd.f32 %v928, %v1065
        %v1067 = vpop.f32.mrb[0].mxu0
        %1068 = vmatprep.mubr.f32.mxu0 0.0
        %1069 = vmatmul.mubr.f32.gmra.mrb[0].mxu0 %v947
        %v1070 = vpop.f32.mrb[0].mxu0
        %v1071 = vadd.f32 %v928, %v1070
        %v1072 = vpop.f32.mrb[0].mxu0
        %1073 = vmatprep.mubr.f32.mxu0 0.0
        %1074 = vmatmul.mubr.f32.gmra.mrb[0].mxu0 %v950
        %v1075 = vpop.f32.mrb[0].mxu0
        %v1076 = vadd.f32 %v928, %v1075
        %v1077 = vpop.f32.mrb[0].mxu0
        %1078 = vmatprep.mubr.f32.mxu0 0.0
        %1079 = vmatmul.mubr.f32.gmra.mrb[0].mxu0 %v953
        %v1080 = vpop.f32.mrb[0].mxu0
        %v1081 = vadd.f32 %v928, %v1080
        %v1082 = vpop.f32.mrb[0].mxu0
        %1083 = vmatprep.mubr.f32.mxu0 0.0
        %1084 = vmatmul.mubr.f32.gmra.mrb[0].mxu0 %v956
        %v1085 = vpop.f32.mrb[0].mxu0
        %v1086 = vadd.f32 %v928, %v1085
        %v1087 = vpop.f32.mrb[0].mxu0
        %1088 = vmatprep.mubr.f32.mxu0 0.0
        %1089 = vmatmul.mubr.f32.gmra.mrb[0].mxu0 %v959
        %v1090 = vpop.f32.mrb[0].mxu0
        %v1091 = vadd.f32 %v928, %v1090
        %v1092 = vpop.f32.mrb[0].mxu0
        %1093 = vmatprep.mubr.f32.mxu0 0.0
        %1094 = vmatmul.mubr.f32.gmra.mrb[0].mxu0 %v962
        %v1095 = vpop.f32.mrb[0].mxu0
        %v1096 = vadd.f32 %v928, %v1095
        %v1097 = vpop.f32.mrb[0].mxu0
        %1098 = vmatprep.mubr.f32.mxu0 0.0
        %1099 = vmatmul.mubr.f32.gmra.mrb[0].mxu0 %v965
        %v1100 = vpop.f32.mrb[0].mxu0
        %v1101 = vadd.f32 %v928, %v1100
        %v1102 = vpop.f32.mrb[0].mxu0
        %1103 = vmatprep.mubr.f32.mxu0 0.0
        %1104 = vmatmul.mubr.f32.gmra.mrb[0].mxu0 %v968
        %v1105 = vpop.f32.mrb[0].mxu0
        %v1106 = vadd.f32 %v928, %v1105
        %v1107 = vpop.f32.mrb[0].mxu0
        %1108 = vmatprep.mubr.f32.mxu0 0.0
        %1109 = vmatmul.mubr.f32.gmra.mrb[0].mxu0 %v971
        %v1110 = vpop.f32.mrb[0].mxu0
        %v1111 = vadd.f32 %v928, %v1110
        %v1112 = vpop.f32.mrb[0].mxu0
        %1113 = vmatprep.mubr.f32.mxu0 0.0
        %1114 = vmatmul.mubr.f32.gmra.mrb[0].mxu0 %v974
        %v1115 = vpop.f32.mrb[0].mxu0
        %v1116 = vadd.f32 %v928, %v1115
        %v1117 = vpop.f32.mrb[0].mxu0
        %1118 = vmatprep.mubr.f32.mxu0 0.0
        %1119 = vmatmul.mubr.f32.gmra.mrb[0].mxu0 %v977
        %v1120 = vpop.f32.mrb[0].mxu0
        %v1121 = vadd.f32 %v928, %v1120
        %v1122 = vpop.f32.mrb[0].mxu0
        %1123 = vdwg.mxu0
        %vm1124 = vcmp.gt.f32.partialorder %v1046, 20.0
        %vm1125 = vcmp.gt.f32.partialorder %v1051, 20.0
        %vm1126 = vcmp.gt.f32.partialorder %v1056, 20.0
        %vm1127 = vcmp.gt.f32.partialorder %v1061, 20.0
        %vm1128 = vcmp.gt.f32.partialorder %v1066, 20.0
        %vm1129 = vcmp.gt.f32.partialorder %v1071, 20.0
        %vm1130 = vcmp.gt.f32.partialorder %v1076, 20.0
        %vm1131 = vcmp.gt.f32.partialorder %v1081, 20.0
        %vm1132 = vcmp.gt.f32.partialorder %v1086, 20.0
        %vm1133 = vcmp.gt.f32.partialorder %v1091, 20.0
        %vm1134 = vcmp.gt.f32.partialorder %v1096, 20.0
        %vm1135 = vcmp.gt.f32.partialorder %v1101, 20.0
        %vm1136 = vcmp.gt.f32.partialorder %v1106, 20.0
        %vm1137 = vcmp.gt.f32.partialorder %v1111, 20.0
        %vm1138 = vcmp.gt.f32.partialorder %v1116, 20.0
        %vm1139 = vcmp.gt.f32.partialorder %v1121, 20.0
        %v1140 = vmin.f32 %v1046, 20.0
        %v1141 = vmin.f32 %v1051, 20.0
        %v1142 = vmin.f32 %v1056, 20.0
        %v1143 = vmin.f32 %v1061, 20.0
        %v1144 = vmin.f32 %v1066, 20.0
        %v1145 = vmin.f32 %v1071, 20.0
        %v1146 = vmin.f32 %v1076, 20.0
        %v1147 = vmin.f32 %v1081, 20.0
        %v1148 = vmin.f32 %v1086, 20.0
        %v1149 = vmin.f32 %v1091, 20.0
        %v1150 = vmin.f32 %v1096, 20.0
        %v1151 = vmin.f32 %v1101, 20.0
        %v1152 = vmin.f32 %v1106, 20.0
        %v1153 = vmin.f32 %v1111, 20.0
        %v1154 = vmin.f32 %v1116, 20.0
        %v1155 = vmin.f32 %v1121, 20.0
        %v1156 = vmul.f32 %v1140, 1.442695
        %v1157 = vpow.pop %v1156
        %v1158 = vmul.f32 %v1141, 1.442695
        %v1159 = vpow.pop %v1158
        %v1160 = vmul.f32 %v1142, 1.442695
        %v1161 = vpow.pop %v1160
        %v1162 = vmul.f32 %v1143, 1.442695
        %v1163 = vpow.pop %v1162
        %v1164 = vmul.f32 %v1144, 1.442695
        %v1165 = vpow.pop %v1164
        %v1166 = vmul.f32 %v1145, 1.442695
        %v1167 = vpow.pop %v1166
        %v1168 = vmul.f32 %v1146, 1.442695
        %v1169 = vpow.pop %v1168
        %v1170 = vmul.f32 %v1147, 1.442695
        %v1171 = vpow.pop %v1170
        %v1172 = vmul.f32 %v1148, 1.442695
        %v1173 = vpow.pop %v1172
        %v1174 = vmul.f32 %v1149, 1.442695
        %v1175 = vpow.pop %v1174
        %v1176 = vmul.f32 %v1150, 1.442695
        %v1177 = vpow.pop %v1176
        %v1178 = vmul.f32 %v1151, 1.442695
        %v1179 = vpow.pop %v1178
        %v1180 = vmul.f32 %v1152, 1.442695
        %v1181 = vpow.pop %v1180
        %v1182 = vmul.f32 %v1153, 1.442695
        %v1183 = vpow.pop %v1182
        %v1184 = vmul.f32 %v1154, 1.442695
        %v1185 = vpow.pop %v1184
        %v1186 = vmul.f32 %v1155, 1.442695
        %v1187 = vpow.pop %v1186
        %v1188 = vadd.f32 %v1157, 1.0
        %v1189 = vlog2.pop %v1188
        %v1190 = vmul.f32 %v1189, 0.6931472
        %v1191 = vmul.f32 -0.5, %v1157
        %v1192 = vadd.f32 %v1191, 1.0
        %v1193 = vmul.f32 %v1192, %v1157
        %v1194 = vand.u32 2147483647, %v1157
        %vm1195 = vcmp.lt.f32.partialorder %v1194, 0.0004427343
        %v1196 = vsel %vm1195, %v1193, %v1190
        %v1197 = vadd.f32 %v1159, 1.0
        %v1198 = vlog2.pop %v1197
        %v1199 = vmul.f32 %v1198, 0.6931472
        %v1200 = vmul.f32 -0.5, %v1159
        %v1201 = vadd.f32 %v1200, 1.0
        %v1202 = vmul.f32 %v1201, %v1159
        %v1203 = vand.u32 2147483647, %v1159
        %vm1204 = vcmp.lt.f32.partialorder %v1203, 0.0004427343
        %v1205 = vsel %vm1204, %v1202, %v1199
        %v1206 = vadd.f32 %v1161, 1.0
        %v1207 = vlog2.pop %v1206
        %v1208 = vmul.f32 %v1207, 0.6931472
        %v1209 = vmul.f32 -0.5, %v1161
        %v1210 = vadd.f32 %v1209, 1.0
        %v1211 = vmul.f32 %v1210, %v1161
        %v1212 = vand.u32 2147483647, %v1161
        %vm1213 = vcmp.lt.f32.partialorder %v1212, 0.0004427343
        %v1214 = vsel %vm1213, %v1211, %v1208
        %v1215 = vadd.f32 %v1163, 1.0
        %v1216 = vlog2.pop %v1215
        %v1217 = vmul.f32 %v1216, 0.6931472
        %v1218 = vmul.f32 -0.5, %v1163
        %v1219 = vadd.f32 %v1218, 1.0
        %v1220 = vmul.f32 %v1219, %v1163
        %v1221 = vand.u32 2147483647, %v1163
        %vm1222 = vcmp.lt.f32.partialorder %v1221, 0.0004427343
        %v1223 = vsel %vm1222, %v1220, %v1217
        %v1224 = vadd.f32 %v1165, 1.0
        %v1225 = vlog2.pop %v1224
        %v1226 = vmul.f32 %v1225, 0.6931472
        %v1227 = vmul.f32 -0.5, %v1165
        %v1228 = vadd.f32 %v1227, 1.0
        %v1229 = vmul.f32 %v1228, %v1165
        %v1230 = vand.u32 2147483647, %v1165
        %vm1231 = vcmp.lt.f32.partialorder %v1230, 0.0004427343
        %v1232 = vsel %vm1231, %v1229, %v1226
        %v1233 = vadd.f32 %v1167, 1.0
        %v1234 = vlog2.pop %v1233
        %v1235 = vmul.f32 %v1234, 0.6931472
        %v1236 = vmul.f32 -0.5, %v1167
        %v1237 = vadd.f32 %v1236, 1.0
        %v1238 = vmul.f32 %v1237, %v1167
        %v1239 = vand.u32 2147483647, %v1167
        %vm1240 = vcmp.lt.f32.partialorder %v1239, 0.0004427343
        %v1241 = vsel %vm1240, %v1238, %v1235
        %v1242 = vadd.f32 %v1169, 1.0
        %v1243 = vlog2.pop %v1242
        %v1244 = vmul.f32 %v1243, 0.6931472
        %v1245 = vmul.f32 -0.5, %v1169
        %v1246 = vadd.f32 %v1245, 1.0
        %v1247 = vmul.f32 %v1246, %v1169
        %v1248 = vand.u32 2147483647, %v1169
        %vm1249 = vcmp.lt.f32.partialorder %v1248, 0.0004427343
        %v1250 = vsel %vm1249, %v1247, %v1244
        %v1251 = vadd.f32 %v1171, 1.0
        %v1252 = vlog2.pop %v1251
        %v1253 = vmul.f32 %v1252, 0.6931472
        %v1254 = vmul.f32 -0.5, %v1171
        %v1255 = vadd.f32 %v1254, 1.0
        %v1256 = vmul.f32 %v1255, %v1171
        %v1257 = vand.u32 2147483647, %v1171
        %vm1258 = vcmp.lt.f32.partialorder %v1257, 0.0004427343
        %v1259 = vsel %vm1258, %v1256, %v1253
        %v1260 = vadd.f32 %v1173, 1.0
        %v1261 = vlog2.pop %v1260
        %v1262 = vmul.f32 %v1261, 0.6931472
        %v1263 = vmul.f32 -0.5, %v1173
        %v1264 = vadd.f32 %v1263, 1.0
        %v1265 = vmul.f32 %v1264, %v1173
        %v1266 = vand.u32 2147483647, %v1173
        %vm1267 = vcmp.lt.f32.partialorder %v1266, 0.0004427343
        %v1268 = vsel %vm1267, %v1265, %v1262
        %v1269 = vadd.f32 %v1175, 1.0
        %v1270 = vlog2.pop %v1269
        %v1271 = vmul.f32 %v1270, 0.6931472
        %v1272 = vmul.f32 -0.5, %v1175
        %v1273 = vadd.f32 %v1272, 1.0
        %v1274 = vmul.f32 %v1273, %v1175
        %v1275 = vand.u32 2147483647, %v1175
        %vm1276 = vcmp.lt.f32.partialorder %v1275, 0.0004427343
        %v1277 = vsel %vm1276, %v1274, %v1271
        %v1278 = vadd.f32 %v1177, 1.0
        %v1279 = vlog2.pop %v1278
        %v1280 = vmul.f32 %v1279, 0.6931472
        %v1281 = vmul.f32 -0.5, %v1177
        %v1282 = vadd.f32 %v1281, 1.0
        %v1283 = vmul.f32 %v1282, %v1177
        %v1284 = vand.u32 2147483647, %v1177
        %vm1285 = vcmp.lt.f32.partialorder %v1284, 0.0004427343
        %v1286 = vsel %vm1285, %v1283, %v1280
        %v1287 = vadd.f32 %v1179, 1.0
        %v1288 = vlog2.pop %v1287
        %v1289 = vmul.f32 %v1288, 0.6931472
        %v1290 = vmul.f32 -0.5, %v1179
        %v1291 = vadd.f32 %v1290, 1.0
        %v1292 = vmul.f32 %v1291, %v1179
        %v1293 = vand.u32 2147483647, %v1179
        %vm1294 = vcmp.lt.f32.partialorder %v1293, 0.0004427343
        %v1295 = vsel %vm1294, %v1292, %v1289
        %v1296 = vadd.f32 %v1181, 1.0
        %v1297 = vlog2.pop %v1296
        %v1298 = vmul.f32 %v1297, 0.6931472
        %v1299 = vmul.f32 -0.5, %v1181
        %v1300 = vadd.f32 %v1299, 1.0
        %v1301 = vmul.f32 %v1300, %v1181
        %v1302 = vand.u32 2147483647, %v1181
        %vm1303 = vcmp.lt.f32.partialorder %v1302, 0.0004427343
        %v1304 = vsel %vm1303, %v1301, %v1298
        %v1305 = vadd.f32 %v1183, 1.0
        %v1306 = vlog2.pop %v1305
        %v1307 = vmul.f32 %v1306, 0.6931472
        %v1308 = vmul.f32 -0.5, %v1183
        %v1309 = vadd.f32 %v1308, 1.0
        %v1310 = vmul.f32 %v1309, %v1183
        %v1311 = vand.u32 2147483647, %v1183
        %vm1312 = vcmp.lt.f32.partialorder %v1311, 0.0004427343
        %v1313 = vsel %vm1312, %v1310, %v1307
        %v1314 = vadd.f32 %v1185, 1.0
        %v1315 = vlog2.pop %v1314
        %v1316 = vmul.f32 %v1315, 0.6931472
        %v1317 = vmul.f32 -0.5, %v1185
        %v1318 = vadd.f32 %v1317, 1.0
        %v1319 = vmul.f32 %v1318, %v1185
        %v1320 = vand.u32 2147483647, %v1185
        %vm1321 = vcmp.lt.f32.partialorder %v1320, 0.0004427343
        %v1322 = vsel %vm1321, %v1319, %v1316
        %v1323 = vadd.f32 %v1187, 1.0
        %v1324 = vlog2.pop %v1323
        %v1325 = vmul.f32 %v1324, 0.6931472
        %v1326 = vmul.f32 -0.5, %v1187
        %v1327 = vadd.f32 %v1326, 1.0
        %v1328 = vmul.f32 %v1327, %v1187
        %v1329 = vand.u32 2147483647, %v1187
        %vm1330 = vcmp.lt.f32.partialorder %v1329, 0.0004427343
        %v1331 = vsel %vm1330, %v1328, %v1325
        %v1332 = vsel %vm1124, %v1046, %v1196
        %v1333 = vsel %vm1125, %v1051, %v1205
        %v1334 = vsel %vm1126, %v1056, %v1214
        %v1335 = vsel %vm1127, %v1061, %v1223
        %v1336 = vsel %vm1128, %v1066, %v1232
        %v1337 = vsel %vm1129, %v1071, %v1241
        %v1338 = vsel %vm1130, %v1076, %v1250
        %v1339 = vsel %vm1131, %v1081, %v1259
        %v1340 = vsel %vm1132, %v1086, %v1268
        %v1341 = vsel %vm1133, %v1091, %v1277
        %v1342 = vsel %vm1134, %v1096, %v1286
        %v1343 = vsel %vm1135, %v1101, %v1295
        %v1344 = vsel %vm1136, %v1106, %v1304
        %v1345 = vsel %vm1137, %v1111, %v1313
        %v1346 = vsel %vm1138, %v1116, %v1322
        %v1347 = vsel %vm1139, %v1121, %v1331
        %v1348 = vld [vmem:[%s3] sm:$0xff]
        %v1349 = vld [vmem:[%s3 + $0x8] sm:$0xff]
        %v1350 = vld [vmem:[%s3 + $0x10] sm:$0xff]
        %v1351 = vld [vmem:[%s3 + $0x18] sm:$0xff]
        %v1352 = vld [vmem:[%s9] sm:$0x1]
        %v1354 = vlaneseq
        %v1355 = vshrl.u32 %v1354, 7
        %v1356 = vsub.s32 0, %v1355
        %v1357 = vrot.slane %v1352, %v1356
        %vm1359 = vcmask 261120
        %v1361 = vsel %vm1359, %v1332, 0
        %v1364 = vsel %vm1359, %v1333, 0
        %v1367 = vsel %vm1359, %v1334, 0
        %v1370 = vsel %vm1359, %v1335, 0
        %v1373 = vsel %vm1359, %v1336, 0
        %v1376 = vsel %vm1359, %v1337, 0
        %v1379 = vsel %vm1359, %v1338, 0
        %v1382 = vsel %vm1359, %v1339, 0
        %v1385 = vsel %vm1359, %v1340, 0
        %v1388 = vsel %vm1359, %v1341, 0
        %v1391 = vsel %vm1359, %v1342, 0
        %v1394 = vsel %vm1359, %v1343, 0
        %v1397 = vsel %vm1359, %v1344, 0
        %v1400 = vsel %vm1359, %v1345, 0
        %v1403 = vsel %vm1359, %v1346, 0
        %v1406 = vsel %vm1359, %v1347, 0
        %1408 = vmatprep.subr.mxu0 0.0
        %1409 = vmatpush1.msra.mxu0 %v1348
        %1410 = vmatprep.subr.mxu0 0.0
        %1411 = vmatpush1.msra.mxu0 %v1349
        %1412 = vmatprep.subr.mxu0 0.0
        %1413 = vmatpush1.msra.mxu0 %v1350
        %1414 = vmatprep.subr.mxu0 0.0
        %1415 = vmatpush1.msra.mxu0 %v1351
        %1416 = vmatprep.subr.mxu0 0.0
        %1417 = vmatpush1.msra.mxu0 0.0
        %1418 = vmatprep.subr.mxu0 0.0
        %1419 = vmatpush1.msra.mxu0 0.0
        %1420 = vmatprep.subr.mxu0 0.0
        %1421 = vmatpush1.msra.mxu0 0.0
        %1422 = vmatprep.subr.mxu0 0.0
        %1423 = vmatpush1.msra.mxu0 0.0
        %1424 = vmatprep.subr.mxu0 0.0
        %1425 = vmatpush1.msra.mxu0 0.0
        %1426 = vmatprep.subr.mxu0 0.0
        %1427 = vmatpush1.msra.mxu0 0.0
        %1428 = vmatprep.subr.mxu0 0.0
        %1429 = vmatpush1.msra.mxu0 0.0
        %1430 = vmatprep.subr.mxu0 0.0
        %1431 = vmatpush1.msra.mxu0 0.0
        %1432 = vmatprep.subr.mxu0 0.0
        %1433 = vmatpush1.msra.mxu0 0.0
        %1434 = vmatprep.subr.mxu0 0.0
        %1435 = vmatpush1.msra.mxu0 0.0
        %1436 = vmatprep.subr.mxu0 0.0
        %1437 = vmatpush1.msra.mxu0 0.0
        %1438 = vmatprep.subr.mxu0 0.0
        %1439 = vmatpush1.msra.mxu0 0.0
        %1440 = vmatprep.subr.mxu0 0.0
        %1441 = vmatpush1.msra.mxu0 0.0
        %1442 = vmatprep.subr.mxu0 0.0
        %1443 = vmatpush1.msra.mxu0 0.0
        %1444 = vmatprep.subr.mxu0 0.0
        %1445 = vmatpush1.msra.mxu0 0.0
        %1446 = vmatprep.subr.mxu0 0.0
        %1447 = vmatpush1.msra.mxu0 0.0
        %1448 = vmatprep.subr.mxu0 0.0
        %1449 = vmatpush1.msra.mxu0 0.0
        %1450 = vmatprep.subr.mxu0 0.0
        %1451 = vmatpush1.msra.mxu0 0.0
        %1452 = vmatprep.subr.mxu0 0.0
        %1453 = vmatpush1.msra.mxu0 0.0
        %1454 = vmatprep.subr.mxu0 0.0
        %1455 = vmatpush1.msra.mxu0 0.0
        %1456 = vmatprep.subr.mxu0 0.0
        %1457 = vmatpush1.msra.mxu0 0.0
        %1458 = vmatprep.subr.mxu0 0.0
        %1459 = vmatpush1.msra.mxu0 0.0
        %1460 = vmatprep.subr.mxu0 0.0
        %1461 = vmatpush1.msra.mxu0 0.0
        %1462 = vmatprep.subr.mxu0 0.0
        %1463 = vmatpush1.msra.mxu0 0.0
        %1464 = vmatprep.subr.mxu0 0.0
        %1465 = vmatpush1.msra.mxu0 0.0
        %1466 = vmatprep.subr.mxu0 0.0
        %1467 = vmatpush1.msra.mxu0 0.0
        %1468 = vmatprep.subr.mxu0 0.0
        %1469 = vmatpush1.msra.mxu0 0.0
        %1470 = vmatprep.subr.mxu0 0.0
        %1471 = vmatpush1.msra.mxu0 0.0
        %1472 = vmatprep.mubr.f32.mxu0 0.0
        %1473 = vmatmul.mubr.f32.gmra.mrb[0].mxu0 %v1361
        %v1474 = vpop.f32.mrb[0].mxu0
        %v1475 = vadd.f32 %v1357, %v1474
        %v1476 = vpop.f32.mrb[0].mxu0
        %1477 = vmatprep.mubr.f32.mxu0 0.0
        %1478 = vmatmul.mubr.f32.gmra.mrb[0].mxu0 %v1364
        %v1479 = vpop.f32.mrb[0].mxu0
        %v1480 = vadd.f32 %v1357, %v1479
        %v1481 = vpop.f32.mrb[0].mxu0
        %1482 = vmatprep.mubr.f32.mxu0 0.0
        %1483 = vmatmul.mubr.f32.gmra.mrb[0].mxu0 %v1367
        %v1484 = vpop.f32.mrb[0].mxu0
        %v1485 = vadd.f32 %v1357, %v1484
        %v1486 = vpop.f32.mrb[0].mxu0
        %1487 = vmatprep.mubr.f32.mxu0 0.0
        %1488 = vmatmul.mubr.f32.gmra.mrb[0].mxu0 %v1370
        %v1489 = vpop.f32.mrb[0].mxu0
        %v1490 = vadd.f32 %v1357, %v1489
        %v1491 = vpop.f32.mrb[0].mxu0
        %1492 = vmatprep.mubr.f32.mxu0 0.0
        %1493 = vmatmul.mubr.f32.gmra.mrb[0].mxu0 %v1373
        %v1494 = vpop.f32.mrb[0].mxu0
        %v1495 = vadd.f32 %v1357, %v1494
        %v1496 = vpop.f32.mrb[0].mxu0
        %1497 = vmatprep.mubr.f32.mxu0 0.0
        %1498 = vmatmul.mubr.f32.gmra.mrb[0].mxu0 %v1376
        %v1499 = vpop.f32.mrb[0].mxu0
        %v1500 = vadd.f32 %v1357, %v1499
        %v1501 = vpop.f32.mrb[0].mxu0
        %1502 = vmatprep.mubr.f32.mxu0 0.0
        %1503 = vmatmul.mubr.f32.gmra.mrb[0].mxu0 %v1379
        %v1504 = vpop.f32.mrb[0].mxu0
        %v1505 = vadd.f32 %v1357, %v1504
        %v1506 = vpop.f32.mrb[0].mxu0
        %1507 = vmatprep.mubr.f32.mxu0 0.0
        %1508 = vmatmul.mubr.f32.gmra.mrb[0].mxu0 %v1382
        %v1509 = vpop.f32.mrb[0].mxu0
        %v1510 = vadd.f32 %v1357, %v1509
        %v1511 = vpop.f32.mrb[0].mxu0
        %1512 = vmatprep.mubr.f32.mxu0 0.0
        %1513 = vmatmul.mubr.f32.gmra.mrb[0].mxu0 %v1385
        %v1514 = vpop.f32.mrb[0].mxu0
        %v1515 = vadd.f32 %v1357, %v1514
        %v1516 = vpop.f32.mrb[0].mxu0
        %1517 = vmatprep.mubr.f32.mxu0 0.0
        %1518 = vmatmul.mubr.f32.gmra.mrb[0].mxu0 %v1388
        %v1519 = vpop.f32.mrb[0].mxu0
        %v1520 = vadd.f32 %v1357, %v1519
        %v1521 = vpop.f32.mrb[0].mxu0
        %1522 = vmatprep.mubr.f32.mxu0 0.0
        %1523 = vmatmul.mubr.f32.gmra.mrb[0].mxu0 %v1391
        %v1524 = vpop.f32.mrb[0].mxu0
        %v1525 = vadd.f32 %v1357, %v1524
        %v1526 = vpop.f32.mrb[0].mxu0
        %1527 = vmatprep.mubr.f32.mxu0 0.0
        %1528 = vmatmul.mubr.f32.gmra.mrb[0].mxu0 %v1394
        %v1529 = vpop.f32.mrb[0].mxu0
        %v1530 = vadd.f32 %v1357, %v1529
        %v1531 = vpop.f32.mrb[0].mxu0
        %1532 = vmatprep.mubr.f32.mxu0 0.0
        %1533 = vmatmul.mubr.f32.gmra.mrb[0].mxu0 %v1397
        %v1534 = vpop.f32.mrb[0].mxu0
        %v1535 = vadd.f32 %v1357, %v1534
        %v1536 = vpop.f32.mrb[0].mxu0
        %1537 = vmatprep.mubr.f32.mxu0 0.0
        %1538 = vmatmul.mubr.f32.gmra.mrb[0].mxu0 %v1400
        %v1539 = vpop.f32.mrb[0].mxu0
        %v1540 = vadd.f32 %v1357, %v1539
        %v1541 = vpop.f32.mrb[0].mxu0
        %1542 = vmatprep.mubr.f32.mxu0 0.0
        %1543 = vmatmul.mubr.f32.gmra.mrb[0].mxu0 %v1403
        %v1544 = vpop.f32.mrb[0].mxu0
        %v1545 = vadd.f32 %v1357, %v1544
        %v1546 = vpop.f32.mrb[0].mxu0
        %1547 = vmatprep.mubr.f32.mxu0 0.0
        %1548 = vmatmul.mubr.f32.gmra.mrb[0].mxu0 %v1406
        %v1549 = vpop.f32.mrb[0].mxu0
        %v1550 = vadd.f32 %v1357, %v1549
        %v1551 = vpop.f32.mrb[0].mxu0
        %1552 = vdwg.mxu0
        %v1553 = vld [vmem:[%s4] sm:$0xff]
        %v1554 = vld [vmem:[%s10] sm:$0x1]
        %v1556 = vlaneseq
        %v1557 = vshrl.u32 %v1556, 7
        %v1558 = vsub.s32 0, %v1557
        %v1559 = vrot.slane %v1554, %v1558
        %vm1561 = vcmask 64512
        %v1563 = vsel %vm1561, %v1475, 0
        %v1566 = vsel %vm1561, %v1480, 0
        %v1569 = vsel %vm1561, %v1485, 0
        %v1572 = vsel %vm1561, %v1490, 0
        %v1575 = vsel %vm1561, %v1495, 0
        %v1578 = vsel %vm1561, %v1500, 0
        %v1581 = vsel %vm1561, %v1505, 0
        %v1584 = vsel %vm1561, %v1510, 0
        %v1587 = vsel %vm1561, %v1515, 0
        %v1590 = vsel %vm1561, %v1520, 0
        %v1593 = vsel %vm1561, %v1525, 0
        %v1596 = vsel %vm1561, %v1530, 0
        %v1599 = vsel %vm1561, %v1535, 0
        %v1602 = vsel %vm1561, %v1540, 0
        %v1605 = vsel %vm1561, %v1545, 0
        %v1608 = vsel %vm1561, %v1550, 0
        %1610 = vmatprep.subr.mxu0 0.0
        %1611 = vmatpush1.msra.mxu0 %v1553
        %1612 = vmatprep.subr.mxu0 0.0
        %1613 = vmatpush1.msra.mxu0 0.0
        %1614 = vmatprep.subr.mxu0 0.0
        %1615 = vmatpush1.msra.mxu0 0.0
        %1616 = vmatprep.subr.mxu0 0.0
        %1617 = vmatpush1.msra.mxu0 0.0
        %1618 = vmatprep.subr.mxu0 0.0
        %1619 = vmatpush1.msra.mxu0 0.0
        %1620 = vmatprep.subr.mxu0 0.0
        %1621 = vmatpush1.msra.mxu0 0.0
        %1622 = vmatprep.subr.mxu0 0.0
        %1623 = vmatpush1.msra.mxu0 0.0
        %1624 = vmatprep.subr.mxu0 0.0
        %1625 = vmatpush1.msra.mxu0 0.0
        %1626 = vmatprep.subr.mxu0 0.0
        %1627 = vmatpush1.msra.mxu0 0.0
        %1628 = vmatprep.subr.mxu0 0.0
        %1629 = vmatpush1.msra.mxu0 0.0
        %1630 = vmatprep.subr.mxu0 0.0
        %1631 = vmatpush1.msra.mxu0 0.0
        %1632 = vmatprep.subr.mxu0 0.0
        %1633 = vmatpush1.msra.mxu0 0.0
        %1634 = vmatprep.subr.mxu0 0.0
        %1635 = vmatpush1.msra.mxu0 0.0
        %1636 = vmatprep.subr.mxu0 0.0
        %1637 = vmatpush1.msra.mxu0 0.0
        %1638 = vmatprep.subr.mxu0 0.0
        %1639 = vmatpush1.msra.mxu0 0.0
        %1640 = vmatprep.subr.mxu0 0.0
        %1641 = vmatpush1.msra.mxu0 0.0
        %1642 = vmatprep.subr.mxu0 0.0
        %1643 = vmatpush1.msra.mxu0 0.0
        %1644 = vmatprep.subr.mxu0 0.0
        %1645 = vmatpush1.msra.mxu0 0.0
        %1646 = vmatprep.subr.mxu0 0.0
        %1647 = vmatpush1.msra.mxu0 0.0
        %1648 = vmatprep.subr.mxu0 0.0
        %1649 = vmatpush1.msra.mxu0 0.0
        %1650 = vmatprep.subr.mxu0 0.0
        %1651 = vmatpush1.msra.mxu0 0.0
        %1652 = vmatprep.subr.mxu0 0.0
        %1653 = vmatpush1.msra.mxu0 0.0
        %1654 = vmatprep.subr.mxu0 0.0
        %1655 = vmatpush1.msra.mxu0 0.0
        %1656 = vmatprep.subr.mxu0 0.0
        %1657 = vmatpush1.msra.mxu0 0.0
        %1658 = vmatprep.subr.mxu0 0.0
        %1659 = vmatpush1.msra.mxu0 0.0
        %1660 = vmatprep.subr.mxu0 0.0
        %1661 = vmatpush1.msra.mxu0 0.0
        %1662 = vmatprep.subr.mxu0 0.0
        %1663 = vmatpush1.msra.mxu0 0.0
        %1664 = vmatprep.subr.mxu0 0.0
        %1665 = vmatpush1.msra.mxu0 0.0
        %1666 = vmatprep.subr.mxu0 0.0
        %1667 = vmatpush1.msra.mxu0 0.0
        %1668 = vmatprep.subr.mxu0 0.0
        %1669 = vmatpush1.msra.mxu0 0.0
        %1670 = vmatprep.subr.mxu0 0.0
        %1671 = vmatpush1.msra.mxu0 0.0
        %1672 = vmatprep.subr.mxu0 0.0
        %1673 = vmatpush1.msra.mxu0 0.0
        %1674 = vmatprep.mubr.f32.mxu0 0.0
        %1675 = vmatmul.mubr.f32.gmra.mrb[0].mxu0 %v1563
        %v1676 = vpop.f32.mrb[0].mxu0
        %v1677 = vadd.f32 %v1559, %v1676
        %v1678 = vpop.f32.mrb[0].mxu0
        %1679 = vmatprep.mubr.f32.mxu0 0.0
        %1680 = vmatmul.mubr.f32.gmra.mrb[0].mxu0 %v1566
        %v1681 = vpop.f32.mrb[0].mxu0
        %v1682 = vadd.f32 %v1559, %v1681
        %v1683 = vpop.f32.mrb[0].mxu0
        %1684 = vmatprep.mubr.f32.mxu0 0.0
        %1685 = vmatmul.mubr.f32.gmra.mrb[0].mxu0 %v1569
        %v1686 = vpop.f32.mrb[0].mxu0
        %v1687 = vadd.f32 %v1559, %v1686
        %v1688 = vpop.f32.mrb[0].mxu0
        %1689 = vmatprep.mubr.f32.mxu0 0.0
        %1690 = vmatmul.mubr.f32.gmra.mrb[0].mxu0 %v1572
        %v1691 = vpop.f32.mrb[0].mxu0
        %v1692 = vadd.f32 %v1559, %v1691
        %v1693 = vpop.f32.mrb[0].mxu0
        %1694 = vmatprep.mubr.f32.mxu0 0.0
        %1695 = vmatmul.mubr.f32.gmra.mrb[0].mxu0 %v1575
        %v1696 = vpop.f32.mrb[0].mxu0
        %v1697 = vadd.f32 %v1559, %v1696
        %v1698 = vpop.f32.mrb[0].mxu0
        %1699 = vmatprep.mubr.f32.mxu0 0.0
        %1700 = vmatmul.mubr.f32.gmra.mrb[0].mxu0 %v1578
        %v1701 = vpop.f32.mrb[0].mxu0
        %v1702 = vadd.f32 %v1559, %v1701
        %v1703 = vpop.f32.mrb[0].mxu0
        %1704 = vmatprep.mubr.f32.mxu0 0.0
        %1705 = vmatmul.mubr.f32.gmra.mrb[0].mxu0 %v1581
        %v1706 = vpop.f32.mrb[0].mxu0
        %v1707 = vadd.f32 %v1559, %v1706
        %v1708 = vpop.f32.mrb[0].mxu0
        %1709 = vmatprep.mubr.f32.mxu0 0.0
        %1710 = vmatmul.mubr.f32.gmra.mrb[0].mxu0 %v1584
        %v1711 = vpop.f32.mrb[0].mxu0
        %v1712 = vadd.f32 %v1559, %v1711
        %v1713 = vpop.f32.mrb[0].mxu0
        %1714 = vmatprep.mubr.f32.mxu0 0.0
        %1715 = vmatmul.mubr.f32.gmra.mrb[0].mxu0 %v1587
        %v1716 = vpop.f32.mrb[0].mxu0
        %v1717 = vadd.f32 %v1559, %v1716
        %v1718 = vpop.f32.mrb[0].mxu0
        %1719 = vmatprep.mubr.f32.mxu0 0.0
        %1720 = vmatmul.mubr.f32.gmra.mrb[0].mxu0 %v1590
        %v1721 = vpop.f32.mrb[0].mxu0
        %v1722 = vadd.f32 %v1559, %v1721
        %v1723 = vpop.f32.mrb[0].mxu0
        %1724 = vmatprep.mubr.f32.mxu0 0.0
        %1725 = vmatmul.mubr.f32.gmra.mrb[0].mxu0 %v1593
        %v1726 = vpop.f32.mrb[0].mxu0
        %v1727 = vadd.f32 %v1559, %v1726
        %v1728 = vpop.f32.mrb[0].mxu0
        %1729 = vmatprep.mubr.f32.mxu0 0.0
        %1730 = vmatmul.mubr.f32.gmra.mrb[0].mxu0 %v1596
        %v1731 = vpop.f32.mrb[0].mxu0
        %v1732 = vadd.f32 %v1559, %v1731
        %v1733 = vpop.f32.mrb[0].mxu0
        %1734 = vmatprep.mubr.f32.mxu0 0.0
        %1735 = vmatmul.mubr.f32.gmra.mrb[0].mxu0 %v1599
        %v1736 = vpop.f32.mrb[0].mxu0
        %v1737 = vadd.f32 %v1559, %v1736
        %v1738 = vpop.f32.mrb[0].mxu0
        %1739 = vmatprep.mubr.f32.mxu0 0.0
        %1740 = vmatmul.mubr.f32.gmra.mrb[0].mxu0 %v1602
        %v1741 = vpop.f32.mrb[0].mxu0
        %v1742 = vadd.f32 %v1559, %v1741
        %v1743 = vpop.f32.mrb[0].mxu0
        %1744 = vmatprep.mubr.f32.mxu0 0.0
        %1745 = vmatmul.mubr.f32.gmra.mrb[0].mxu0 %v1605
        %v1746 = vpop.f32.mrb[0].mxu0
        %v1747 = vadd.f32 %v1559, %v1746
        %v1748 = vpop.f32.mrb[0].mxu0
        %1749 = vmatprep.mubr.f32.mxu0 0.0
        %1750 = vmatmul.mubr.f32.gmra.mrb[0].mxu0 %v1608
        %v1751 = vpop.f32.mrb[0].mxu0
        %v1752 = vadd.f32 %v1559, %v1751
        %v1753 = vpop.f32.mrb[0].mxu0
        %1754 = vdwg.mxu0
        %vm1755 = vcmp.gt.f32.partialorder %v1677, 20.0
        %vm1756 = vcmp.gt.f32.partialorder %v1682, 20.0
        %vm1757 = vcmp.gt.f32.partialorder %v1687, 20.0
        %vm1758 = vcmp.gt.f32.partialorder %v1692, 20.0
        %vm1759 = vcmp.gt.f32.partialorder %v1697, 20.0
        %vm1760 = vcmp.gt.f32.partialorder %v1702, 20.0
        %vm1761 = vcmp.gt.f32.partialorder %v1707, 20.0
        %vm1762 = vcmp.gt.f32.partialorder %v1712, 20.0
        %vm1763 = vcmp.gt.f32.partialorder %v1717, 20.0
        %vm1764 = vcmp.gt.f32.partialorder %v1722, 20.0
        %vm1765 = vcmp.gt.f32.partialorder %v1727, 20.0
        %vm1766 = vcmp.gt.f32.partialorder %v1732, 20.0
        %vm1767 = vcmp.gt.f32.partialorder %v1737, 20.0
        %vm1768 = vcmp.gt.f32.partialorder %v1742, 20.0
        %vm1769 = vcmp.gt.f32.partialorder %v1747, 20.0
        %vm1770 = vcmp.gt.f32.partialorder %v1752, 20.0
        %v1771 = vmin.f32 %v1677, 20.0
        %v1772 = vmin.f32 %v1682, 20.0
        %v1773 = vmin.f32 %v1687, 20.0
        %v1774 = vmin.f32 %v1692, 20.0
        %v1775 = vmin.f32 %v1697, 20.0
        %v1776 = vmin.f32 %v1702, 20.0
        %v1777 = vmin.f32 %v1707, 20.0
        %v1778 = vmin.f32 %v1712, 20.0
        %v1779 = vmin.f32 %v1717, 20.0
        %v1780 = vmin.f32 %v1722, 20.0
        %v1781 = vmin.f32 %v1727, 20.0
        %v1782 = vmin.f32 %v1732, 20.0
        %v1783 = vmin.f32 %v1737, 20.0
        %v1784 = vmin.f32 %v1742, 20.0
        %v1785 = vmin.f32 %v1747, 20.0
        %v1786 = vmin.f32 %v1752, 20.0
        %v1787 = vmul.f32 %v1771, 1.442695
        %v1788 = vpow.pop %v1787
        %v1789 = vmul.f32 %v1772, 1.442695
        %v1790 = vpow.pop %v1789
        %v1791 = vmul.f32 %v1773, 1.442695
        %v1792 = vpow.pop %v1791
        %v1793 = vmul.f32 %v1774, 1.442695
        %v1794 = vpow.pop %v1793
        %v1795 = vmul.f32 %v1775, 1.442695
        %v1796 = vpow.pop %v1795
        %v1797 = vmul.f32 %v1776, 1.442695
        %v1798 = vpow.pop %v1797
        %v1799 = vmul.f32 %v1777, 1.442695
        %v1800 = vpow.pop %v1799
        %v1801 = vmul.f32 %v1778, 1.442695
        %v1802 = vpow.pop %v1801
        %v1803 = vmul.f32 %v1779, 1.442695
        %v1804 = vpow.pop %v1803
        %v1805 = vmul.f32 %v1780, 1.442695
        %v1806 = vpow.pop %v1805
        %v1807 = vmul.f32 %v1781, 1.442695
        %v1808 = vpow.pop %v1807
        %v1809 = vmul.f32 %v1782, 1.442695
        %v1810 = vpow.pop %v1809
        %v1811 = vmul.f32 %v1783, 1.442695
        %v1812 = vpow.pop %v1811
        %v1813 = vmul.f32 %v1784, 1.442695
        %v1814 = vpow.pop %v1813
        %v1815 = vmul.f32 %v1785, 1.442695
        %v1816 = vpow.pop %v1815
        %v1817 = vmul.f32 %v1786, 1.442695
        %v1818 = vpow.pop %v1817
        %v1819 = vadd.f32 %v1788, 1.0
        %v1820 = vlog2.pop %v1819
        %v1821 = vmul.f32 %v1820, 0.6931472
        %v1822 = vmul.f32 -0.5, %v1788
        %v1823 = vadd.f32 %v1822, 1.0
        %v1824 = vmul.f32 %v1823, %v1788
        %v1825 = vand.u32 2147483647, %v1788
        %vm1826 = vcmp.lt.f32.partialorder %v1825, 0.0004427343
        %v1827 = vsel %vm1826, %v1824, %v1821
        %v1828 = vadd.f32 %v1790, 1.0
        %v1829 = vlog2.pop %v1828
        %v1830 = vmul.f32 %v1829, 0.6931472
        %v1831 = vmul.f32 -0.5, %v1790
        %v1832 = vadd.f32 %v1831, 1.0
        %v1833 = vmul.f32 %v1832, %v1790
        %v1834 = vand.u32 2147483647, %v1790
        %vm1835 = vcmp.lt.f32.partialorder %v1834, 0.0004427343
        %v1836 = vsel %vm1835, %v1833, %v1830
        %v1837 = vadd.f32 %v1792, 1.0
        %v1838 = vlog2.pop %v1837
        %v1839 = vmul.f32 %v1838, 0.6931472
        %v1840 = vmul.f32 -0.5, %v1792
        %v1841 = vadd.f32 %v1840, 1.0
        %v1842 = vmul.f32 %v1841, %v1792
        %v1843 = vand.u32 2147483647, %v1792
        %vm1844 = vcmp.lt.f32.partialorder %v1843, 0.0004427343
        %v1845 = vsel %vm1844, %v1842, %v1839
        %v1846 = vadd.f32 %v1794, 1.0
        %v1847 = vlog2.pop %v1846
        %v1848 = vmul.f32 %v1847, 0.6931472
        %v1849 = vmul.f32 -0.5, %v1794
        %v1850 = vadd.f32 %v1849, 1.0
        %v1851 = vmul.f32 %v1850, %v1794
        %v1852 = vand.u32 2147483647, %v1794
        %vm1853 = vcmp.lt.f32.partialorder %v1852, 0.0004427343
        %v1854 = vsel %vm1853, %v1851, %v1848
        %v1855 = vadd.f32 %v1796, 1.0
        %v1856 = vlog2.pop %v1855
        %v1857 = vmul.f32 %v1856, 0.6931472
        %v1858 = vmul.f32 -0.5, %v1796
        %v1859 = vadd.f32 %v1858, 1.0
        %v1860 = vmul.f32 %v1859, %v1796
        %v1861 = vand.u32 2147483647, %v1796
        %vm1862 = vcmp.lt.f32.partialorder %v1861, 0.0004427343
        %v1863 = vsel %vm1862, %v1860, %v1857
        %v1864 = vadd.f32 %v1798, 1.0
        %v1865 = vlog2.pop %v1864
        %v1866 = vmul.f32 %v1865, 0.6931472
        %v1867 = vmul.f32 -0.5, %v1798
        %v1868 = vadd.f32 %v1867, 1.0
        %v1869 = vmul.f32 %v1868, %v1798
        %v1870 = vand.u32 2147483647, %v1798
        %vm1871 = vcmp.lt.f32.partialorder %v1870, 0.0004427343
        %v1872 = vsel %vm1871, %v1869, %v1866
        %v1873 = vadd.f32 %v1800, 1.0
        %v1874 = vlog2.pop %v1873
        %v1875 = vmul.f32 %v1874, 0.6931472
        %v1876 = vmul.f32 -0.5, %v1800
        %v1877 = vadd.f32 %v1876, 1.0
        %v1878 = vmul.f32 %v1877, %v1800
        %v1879 = vand.u32 2147483647, %v1800
        %vm1880 = vcmp.lt.f32.partialorder %v1879, 0.0004427343
        %v1881 = vsel %vm1880, %v1878, %v1875
        %v1882 = vadd.f32 %v1802, 1.0
        %v1883 = vlog2.pop %v1882
        %v1884 = vmul.f32 %v1883, 0.6931472
        %v1885 = vmul.f32 -0.5, %v1802
        %v1886 = vadd.f32 %v1885, 1.0
        %v1887 = vmul.f32 %v1886, %v1802
        %v1888 = vand.u32 2147483647, %v1802
        %vm1889 = vcmp.lt.f32.partialorder %v1888, 0.0004427343
        %v1890 = vsel %vm1889, %v1887, %v1884
        %v1891 = vadd.f32 %v1804, 1.0
        %v1892 = vlog2.pop %v1891
        %v1893 = vmul.f32 %v1892, 0.6931472
        %v1894 = vmul.f32 -0.5, %v1804
        %v1895 = vadd.f32 %v1894, 1.0
        %v1896 = vmul.f32 %v1895, %v1804
        %v1897 = vand.u32 2147483647, %v1804
        %vm1898 = vcmp.lt.f32.partialorder %v1897, 0.0004427343
        %v1899 = vsel %vm1898, %v1896, %v1893
        %v1900 = vadd.f32 %v1806, 1.0
        %v1901 = vlog2.pop %v1900
        %v1902 = vmul.f32 %v1901, 0.6931472
        %v1903 = vmul.f32 -0.5, %v1806
        %v1904 = vadd.f32 %v1903, 1.0
        %v1905 = vmul.f32 %v1904, %v1806
        %v1906 = vand.u32 2147483647, %v1806
        %vm1907 = vcmp.lt.f32.partialorder %v1906, 0.0004427343
        %v1908 = vsel %vm1907, %v1905, %v1902
        %v1909 = vadd.f32 %v1808, 1.0
        %v1910 = vlog2.pop %v1909
        %v1911 = vmul.f32 %v1910, 0.6931472
        %v1912 = vmul.f32 -0.5, %v1808
        %v1913 = vadd.f32 %v1912, 1.0
        %v1914 = vmul.f32 %v1913, %v1808
        %v1915 = vand.u32 2147483647, %v1808
        %vm1916 = vcmp.lt.f32.partialorder %v1915, 0.0004427343
        %v1917 = vsel %vm1916, %v1914, %v1911
        %v1918 = vadd.f32 %v1810, 1.0
        %v1919 = vlog2.pop %v1918
        %v1920 = vmul.f32 %v1919, 0.6931472
        %v1921 = vmul.f32 -0.5, %v1810
        %v1922 = vadd.f32 %v1921, 1.0
        %v1923 = vmul.f32 %v1922, %v1810
        %v1924 = vand.u32 2147483647, %v1810
        %vm1925 = vcmp.lt.f32.partialorder %v1924, 0.0004427343
        %v1926 = vsel %vm1925, %v1923, %v1920
        %v1927 = vadd.f32 %v1812, 1.0
        %v1928 = vlog2.pop %v1927
        %v1929 = vmul.f32 %v1928, 0.6931472
        %v1930 = vmul.f32 -0.5, %v1812
        %v1931 = vadd.f32 %v1930, 1.0
        %v1932 = vmul.f32 %v1931, %v1812
        %v1933 = vand.u32 2147483647, %v1812
        %vm1934 = vcmp.lt.f32.partialorder %v1933, 0.0004427343
        %v1935 = vsel %vm1934, %v1932, %v1929
        %v1936 = vadd.f32 %v1814, 1.0
        %v1937 = vlog2.pop %v1936
        %v1938 = vmul.f32 %v1937, 0.6931472
        %v1939 = vmul.f32 -0.5, %v1814
        %v1940 = vadd.f32 %v1939, 1.0
        %v1941 = vmul.f32 %v1940, %v1814
        %v1942 = vand.u32 2147483647, %v1814
        %vm1943 = vcmp.lt.f32.partialorder %v1942, 0.0004427343
        %v1944 = vsel %vm1943, %v1941, %v1938
        %v1945 = vadd.f32 %v1816, 1.0
        %v1946 = vlog2.pop %v1945
        %v1947 = vmul.f32 %v1946, 0.6931472
        %v1948 = vmul.f32 -0.5, %v1816
        %v1949 = vadd.f32 %v1948, 1.0
        %v1950 = vmul.f32 %v1949, %v1816
        %v1951 = vand.u32 2147483647, %v1816
        %vm1952 = vcmp.lt.f32.partialorder %v1951, 0.0004427343
        %v1953 = vsel %vm1952, %v1950, %v1947
        %v1954 = vadd.f32 %v1818, 1.0
        %v1955 = vlog2.pop %v1954
        %v1956 = vmul.f32 %v1955, 0.6931472
        %v1957 = vmul.f32 -0.5, %v1818
        %v1958 = vadd.f32 %v1957, 1.0
        %v1959 = vmul.f32 %v1958, %v1818
        %v1960 = vand.u32 2147483647, %v1818
        %vm1961 = vcmp.lt.f32.partialorder %v1960, 0.0004427343
        %v1962 = vsel %vm1961, %v1959, %v1956
        %v1963 = vsel %vm1755, %v1677, %v1827
        %v1964 = vsel %vm1756, %v1682, %v1836
        %v1965 = vsel %vm1757, %v1687, %v1845
        %v1966 = vsel %vm1758, %v1692, %v1854
        %v1967 = vsel %vm1759, %v1697, %v1863
        %v1968 = vsel %vm1760, %v1702, %v1872
        %v1969 = vsel %vm1761, %v1707, %v1881
        %v1970 = vsel %vm1762, %v1712, %v1890
        %v1971 = vsel %vm1763, %v1717, %v1899
        %v1972 = vsel %vm1764, %v1722, %v1908
        %v1973 = vsel %vm1765, %v1727, %v1917
        %v1974 = vsel %vm1766, %v1732, %v1926
        %v1975 = vsel %vm1767, %v1737, %v1935
        %v1976 = vsel %vm1768, %v1742, %v1944
        %v1977 = vsel %vm1769, %v1747, %v1953
        %v1978 = vsel %vm1770, %v1752, %v1962
        %v1979 = vld [vmem:[#allocation2] sm:$0xff]
        %v1980 = vld [vmem:[#allocation2 + $0x8] sm:$0xff]
        %v1981 = vld [vmem:[#allocation2 + $0x10] sm:$0xff]
        %v1982 = vld [vmem:[#allocation2 + $0x18] sm:$0xff]
        %v1983 = vld [vmem:[%s11] sm:$0x1]
        %v1985 = vlaneseq
        %v1986 = vshrl.u32 %v1985, 7
        %v1987 = vsub.s32 0, %v1986
        %v1988 = vrot.slane %v1983, %v1987
        %v1991 = vsel %vm1359, %v1963, 0
        %v1994 = vsel %vm1359, %v1964, 0
        %v1997 = vsel %vm1359, %v1965, 0
        %v2000 = vsel %vm1359, %v1966, 0
        %v2003 = vsel %vm1359, %v1967, 0
        %v2006 = vsel %vm1359, %v1968, 0
        %v2009 = vsel %vm1359, %v1969, 0
        %v2012 = vsel %vm1359, %v1970, 0
        %v2015 = vsel %vm1359, %v1971, 0
        %v2018 = vsel %vm1359, %v1972, 0
        %v2021 = vsel %vm1359, %v1973, 0
        %v2024 = vsel %vm1359, %v1974, 0
        %v2027 = vsel %vm1359, %v1975, 0
        %v2030 = vsel %vm1359, %v1976, 0
        %v2033 = vsel %vm1359, %v1977, 0
        %v2036 = vsel %vm1359, %v1978, 0
        %2038 = vmatprep.subr.mxu0 0.0
        %2039 = vmatpush1.msra.mxu0 %v1979
        %2040 = vmatprep.subr.mxu0 0.0
        %2041 = vmatpush1.msra.mxu0 %v1980
        %2042 = vmatprep.subr.mxu0 0.0
        %2043 = vmatpush1.msra.mxu0 %v1981
        %2044 = vmatprep.subr.mxu0 0.0
        %2045 = vmatpush1.msra.mxu0 %v1982
        %2046 = vmatprep.subr.mxu0 0.0
        %2047 = vmatpush1.msra.mxu0 0.0
        %2048 = vmatprep.subr.mxu0 0.0
        %2049 = vmatpush1.msra.mxu0 0.0
        %2050 = vmatprep.subr.mxu0 0.0
        %2051 = vmatpush1.msra.mxu0 0.0
        %2052 = vmatprep.subr.mxu0 0.0
        %2053 = vmatpush1.msra.mxu0 0.0
        %2054 = vmatprep.subr.mxu0 0.0
        %2055 = vmatpush1.msra.mxu0 0.0
        %2056 = vmatprep.subr.mxu0 0.0
        %2057 = vmatpush1.msra.mxu0 0.0
        %2058 = vmatprep.subr.mxu0 0.0
        %2059 = vmatpush1.msra.mxu0 0.0
        %2060 = vmatprep.subr.mxu0 0.0
        %2061 = vmatpush1.msra.mxu0 0.0
        %2062 = vmatprep.subr.mxu0 0.0
        %2063 = vmatpush1.msra.mxu0 0.0
        %2064 = vmatprep.subr.mxu0 0.0
        %2065 = vmatpush1.msra.mxu0 0.0
        %2066 = vmatprep.subr.mxu0 0.0
        %2067 = vmatpush1.msra.mxu0 0.0
        %2068 = vmatprep.subr.mxu0 0.0
        %2069 = vmatpush1.msra.mxu0 0.0
        %2070 = vmatprep.subr.mxu0 0.0
        %2071 = vmatpush1.msra.mxu0 0.0
        %2072 = vmatprep.subr.mxu0 0.0
        %2073 = vmatpush1.msra.mxu0 0.0
        %2074 = vmatprep.subr.mxu0 0.0
        %2075 = vmatpush1.msra.mxu0 0.0
        %2076 = vmatprep.subr.mxu0 0.0
        %2077 = vmatpush1.msra.mxu0 0.0
        %2078 = vmatprep.subr.mxu0 0.0
        %2079 = vmatpush1.msra.mxu0 0.0
        %2080 = vmatprep.subr.mxu0 0.0
        %2081 = vmatpush1.msra.mxu0 0.0
        %2082 = vmatprep.subr.mxu0 0.0
        %2083 = vmatpush1.msra.mxu0 0.0
        %2084 = vmatprep.subr.mxu0 0.0
        %2085 = vmatpush1.msra.mxu0 0.0
        %2086 = vmatprep.subr.mxu0 0.0
        %2087 = vmatpush1.msra.mxu0 0.0
        %2088 = vmatprep.subr.mxu0 0.0
        %2089 = vmatpush1.msra.mxu0 0.0
        %2090 = vmatprep.subr.mxu0 0.0
        %2091 = vmatpush1.msra.mxu0 0.0
        %2092 = vmatprep.subr.mxu0 0.0
        %2093 = vmatpush1.msra.mxu0 0.0
        %2094 = vmatprep.subr.mxu0 0.0
        %2095 = vmatpush1.msra.mxu0 0.0
        %2096 = vmatprep.subr.mxu0 0.0
        %2097 = vmatpush1.msra.mxu0 0.0
        %2098 = vmatprep.subr.mxu0 0.0
        %2099 = vmatpush1.msra.mxu0 0.0
        %2100 = vmatprep.subr.mxu0 0.0
        %2101 = vmatpush1.msra.mxu0 0.0
        %2102 = vmatprep.mubr.f32.mxu0 0.0
        %2103 = vmatmul.mubr.f32.gmra.mrb[0].mxu0 %v1991
        %v2104 = vpop.f32.mrb[0].mxu0
        %v2105 = vadd.f32 %v1988, %v2104
        %v2106 = vpop.f32.mrb[0].mxu0
        %2107 = vmatprep.mubr.f32.mxu0 0.0
        %2108 = vmatmul.mubr.f32.gmra.mrb[0].mxu0 %v1994
        %v2109 = vpop.f32.mrb[0].mxu0
        %v2110 = vadd.f32 %v1988, %v2109
        %v2111 = vpop.f32.mrb[0].mxu0
        %2112 = vmatprep.mubr.f32.mxu0 0.0
        %2113 = vmatmul.mubr.f32.gmra.mrb[0].mxu0 %v1997
        %v2114 = vpop.f32.mrb[0].mxu0
        %v2115 = vadd.f32 %v1988, %v2114
        %v2116 = vpop.f32.mrb[0].mxu0
        %2117 = vmatprep.mubr.f32.mxu0 0.0
        %2118 = vmatmul.mubr.f32.gmra.mrb[0].mxu0 %v2000
        %v2119 = vpop.f32.mrb[0].mxu0
        %v2120 = vadd.f32 %v1988, %v2119
        %v2121 = vpop.f32.mrb[0].mxu0
        %2122 = vmatprep.mubr.f32.mxu0 0.0
        %2123 = vmatmul.mubr.f32.gmra.mrb[0].mxu0 %v2003
        %v2124 = vpop.f32.mrb[0].mxu0
        %v2125 = vadd.f32 %v1988, %v2124
        %v2126 = vpop.f32.mrb[0].mxu0
        %2127 = vmatprep.mubr.f32.mxu0 0.0
        %2128 = vmatmul.mubr.f32.gmra.mrb[0].mxu0 %v2006
        %v2129 = vpop.f32.mrb[0].mxu0
        %v2130 = vadd.f32 %v1988, %v2129
        %v2131 = vpop.f32.mrb[0].mxu0
        %2132 = vmatprep.mubr.f32.mxu0 0.0
        %2133 = vmatmul.mubr.f32.gmra.mrb[0].mxu0 %v2009
        %v2134 = vpop.f32.mrb[0].mxu0
        %v2135 = vadd.f32 %v1988, %v2134
        %v2136 = vpop.f32.mrb[0].mxu0
        %2137 = vmatprep.mubr.f32.mxu0 0.0
        %2138 = vmatmul.mubr.f32.gmra.mrb[0].mxu0 %v2012
        %v2139 = vpop.f32.mrb[0].mxu0
        %v2140 = vadd.f32 %v1988, %v2139
        %v2141 = vpop.f32.mrb[0].mxu0
        %2142 = vmatprep.mubr.f32.mxu0 0.0
        %2143 = vmatmul.mubr.f32.gmra.mrb[0].mxu0 %v2015
        %v2144 = vpop.f32.mrb[0].mxu0
        %v2145 = vadd.f32 %v1988, %v2144
        %v2146 = vpop.f32.mrb[0].mxu0
        %2147 = vmatprep.mubr.f32.mxu0 0.0
        %2148 = vmatmul.mubr.f32.gmra.mrb[0].mxu0 %v2018
        %v2149 = vpop.f32.mrb[0].mxu0
        %v2150 = vadd.f32 %v1988, %v2149
        %v2151 = vpop.f32.mrb[0].mxu0
        %2152 = vmatprep.mubr.f32.mxu0 0.0
        %2153 = vmatmul.mubr.f32.gmra.mrb[0].mxu0 %v2021
        %v2154 = vpop.f32.mrb[0].mxu0
        %v2155 = vadd.f32 %v1988, %v2154
        %v2156 = vpop.f32.mrb[0].mxu0
        %2157 = vmatprep.mubr.f32.mxu0 0.0
        %2158 = vmatmul.mubr.f32.gmra.mrb[0].mxu0 %v2024
        %v2159 = vpop.f32.mrb[0].mxu0
        %v2160 = vadd.f32 %v1988, %v2159
        %v2161 = vpop.f32.mrb[0].mxu0
        %2162 = vmatprep.mubr.f32.mxu0 0.0
        %2163 = vmatmul.mubr.f32.gmra.mrb[0].mxu0 %v2027
        %v2164 = vpop.f32.mrb[0].mxu0
        %v2165 = vadd.f32 %v1988, %v2164
        %v2166 = vpop.f32.mrb[0].mxu0
        %2167 = vmatprep.mubr.f32.mxu0 0.0
        %2168 = vmatmul.mubr.f32.gmra.mrb[0].mxu0 %v2030
        %v2169 = vpop.f32.mrb[0].mxu0
        %v2170 = vadd.f32 %v1988, %v2169
        %v2171 = vpop.f32.mrb[0].mxu0
        %2172 = vmatprep.mubr.f32.mxu0 0.0
        %2173 = vmatmul.mubr.f32.gmra.mrb[0].mxu0 %v2033
        %v2174 = vpop.f32.mrb[0].mxu0
        %v2175 = vadd.f32 %v1988, %v2174
        %v2176 = vpop.f32.mrb[0].mxu0
        %2177 = vmatprep.mubr.f32.mxu0 0.0
        %2178 = vmatmul.mubr.f32.gmra.mrb[0].mxu0 %v2036
        %v2179 = vpop.f32.mrb[0].mxu0
        %v2180 = vadd.f32 %v1988, %v2179
        %v2181 = vpop.f32.mrb[0].mxu0
        %2182 = vdwg.mxu0
        %vm2183 = vcmp.gt.f32.partialorder %v2105, 20.0
        %vm2184 = vcmp.gt.f32.partialorder %v2110, 20.0
        %vm2185 = vcmp.gt.f32.partialorder %v2115, 20.0
        %vm2186 = vcmp.gt.f32.partialorder %v2120, 20.0
        %vm2187 = vcmp.gt.f32.partialorder %v2125, 20.0
        %vm2188 = vcmp.gt.f32.partialorder %v2130, 20.0
        %vm2189 = vcmp.gt.f32.partialorder %v2135, 20.0
        %vm2190 = vcmp.gt.f32.partialorder %v2140, 20.0
        %vm2191 = vcmp.gt.f32.partialorder %v2145, 20.0
        %vm2192 = vcmp.gt.f32.partialorder %v2150, 20.0
        %vm2193 = vcmp.gt.f32.partialorder %v2155, 20.0
        %vm2194 = vcmp.gt.f32.partialorder %v2160, 20.0
        %vm2195 = vcmp.gt.f32.partialorder %v2165, 20.0
        %vm2196 = vcmp.gt.f32.partialorder %v2170, 20.0
        %vm2197 = vcmp.gt.f32.partialorder %v2175, 20.0
        %vm2198 = vcmp.gt.f32.partialorder %v2180, 20.0
        %v2199 = vmin.f32 %v2105, 20.0
        %v2200 = vmin.f32 %v2110, 20.0
        %v2201 = vmin.f32 %v2115, 20.0
        %v2202 = vmin.f32 %v2120, 20.0
        %v2203 = vmin.f32 %v2125, 20.0
        %v2204 = vmin.f32 %v2130, 20.0
        %v2205 = vmin.f32 %v2135, 20.0
        %v2206 = vmin.f32 %v2140, 20.0
        %v2207 = vmin.f32 %v2145, 20.0
        %v2208 = vmin.f32 %v2150, 20.0
        %v2209 = vmin.f32 %v2155, 20.0
        %v2210 = vmin.f32 %v2160, 20.0
        %v2211 = vmin.f32 %v2165, 20.0
        %v2212 = vmin.f32 %v2170, 20.0
        %v2213 = vmin.f32 %v2175, 20.0
        %v2214 = vmin.f32 %v2180, 20.0
        %v2215 = vmul.f32 %v2199, 1.442695
        %v2216 = vpow.pop %v2215
        %v2217 = vmul.f32 %v2200, 1.442695
        %v2218 = vpow.pop %v2217
        %v2219 = vmul.f32 %v2201, 1.442695
        %v2220 = vpow.pop %v2219
        %v2221 = vmul.f32 %v2202, 1.442695
        %v2222 = vpow.pop %v2221
        %v2223 = vmul.f32 %v2203, 1.442695
        %v2224 = vpow.pop %v2223
        %v2225 = vmul.f32 %v2204, 1.442695
        %v2226 = vpow.pop %v2225
        %v2227 = vmul.f32 %v2205, 1.442695
        %v2228 = vpow.pop %v2227
        %v2229 = vmul.f32 %v2206, 1.442695
        %v2230 = vpow.pop %v2229
        %v2231 = vmul.f32 %v2207, 1.442695
        %v2232 = vpow.pop %v2231
        %v2233 = vmul.f32 %v2208, 1.442695
        %v2234 = vpow.pop %v2233
        %v2235 = vmul.f32 %v2209, 1.442695
        %v2236 = vpow.pop %v2235
        %v2237 = vmul.f32 %v2210, 1.442695
        %v2238 = vpow.pop %v2237
        %v2239 = vmul.f32 %v2211, 1.442695
        %v2240 = vpow.pop %v2239
        %v2241 = vmul.f32 %v2212, 1.442695
        %v2242 = vpow.pop %v2241
        %v2243 = vmul.f32 %v2213, 1.442695
        %v2244 = vpow.pop %v2243
        %v2245 = vmul.f32 %v2214, 1.442695
        %v2246 = vpow.pop %v2245
        %v2247 = vadd.f32 %v2216, 1.0
        %v2248 = vlog2.pop %v2247
        %v2249 = vmul.f32 %v2248, 0.6931472
        %v2250 = vmul.f32 -0.5, %v2216
        %v2251 = vadd.f32 %v2250, 1.0
        %v2252 = vmul.f32 %v2251, %v2216
        %v2253 = vand.u32 2147483647, %v2216
        %vm2254 = vcmp.lt.f32.partialorder %v2253, 0.0004427343
        %v2255 = vsel %vm2254, %v2252, %v2249
        %v2256 = vadd.f32 %v2218, 1.0
        %v2257 = vlog2.pop %v2256
        %v2258 = vmul.f32 %v2257, 0.6931472
        %v2259 = vmul.f32 -0.5, %v2218
        %v2260 = vadd.f32 %v2259, 1.0
        %v2261 = vmul.f32 %v2260, %v2218
        %v2262 = vand.u32 2147483647, %v2218
        %vm2263 = vcmp.lt.f32.partialorder %v2262, 0.0004427343
        %v2264 = vsel %vm2263, %v2261, %v2258
        %v2265 = vadd.f32 %v2220, 1.0
        %v2266 = vlog2.pop %v2265
        %v2267 = vmul.f32 %v2266, 0.6931472
        %v2268 = vmul.f32 -0.5, %v2220
        %v2269 = vadd.f32 %v2268, 1.0
        %v2270 = vmul.f32 %v2269, %v2220
        %v2271 = vand.u32 2147483647, %v2220
        %vm2272 = vcmp.lt.f32.partialorder %v2271, 0.0004427343
        %v2273 = vsel %vm2272, %v2270, %v2267
        %v2274 = vadd.f32 %v2222, 1.0
        %v2275 = vlog2.pop %v2274
        %v2276 = vmul.f32 %v2275, 0.6931472
        %v2277 = vmul.f32 -0.5, %v2222
        %v2278 = vadd.f32 %v2277, 1.0
        %v2279 = vmul.f32 %v2278, %v2222
        %v2280 = vand.u32 2147483647, %v2222
        %vm2281 = vcmp.lt.f32.partialorder %v2280, 0.0004427343
        %v2282 = vsel %vm2281, %v2279, %v2276
        %v2283 = vadd.f32 %v2224, 1.0
        %v2284 = vlog2.pop %v2283
        %v2285 = vmul.f32 %v2284, 0.6931472
        %v2286 = vmul.f32 -0.5, %v2224
        %v2287 = vadd.f32 %v2286, 1.0
        %v2288 = vmul.f32 %v2287, %v2224
        %v2289 = vand.u32 2147483647, %v2224
        %vm2290 = vcmp.lt.f32.partialorder %v2289, 0.0004427343
        %v2291 = vsel %vm2290, %v2288, %v2285
        %v2292 = vadd.f32 %v2226, 1.0
        %v2293 = vlog2.pop %v2292
        %v2294 = vmul.f32 %v2293, 0.6931472
        %v2295 = vmul.f32 -0.5, %v2226
        %v2296 = vadd.f32 %v2295, 1.0
        %v2297 = vmul.f32 %v2296, %v2226
        %v2298 = vand.u32 2147483647, %v2226
        %vm2299 = vcmp.lt.f32.partialorder %v2298, 0.0004427343
        %v2300 = vsel %vm2299, %v2297, %v2294
        %v2301 = vadd.f32 %v2228, 1.0
        %v2302 = vlog2.pop %v2301
        %v2303 = vmul.f32 %v2302, 0.6931472
        %v2304 = vmul.f32 -0.5, %v2228
        %v2305 = vadd.f32 %v2304, 1.0
        %v2306 = vmul.f32 %v2305, %v2228
        %v2307 = vand.u32 2147483647, %v2228
        %vm2308 = vcmp.lt.f32.partialorder %v2307, 0.0004427343
        %v2309 = vsel %vm2308, %v2306, %v2303
        %v2310 = vadd.f32 %v2230, 1.0
        %v2311 = vlog2.pop %v2310
        %v2312 = vmul.f32 %v2311, 0.6931472
        %v2313 = vmul.f32 -0.5, %v2230
        %v2314 = vadd.f32 %v2313, 1.0
        %v2315 = vmul.f32 %v2314, %v2230
        %v2316 = vand.u32 2147483647, %v2230
        %vm2317 = vcmp.lt.f32.partialorder %v2316, 0.0004427343
        %v2318 = vsel %vm2317, %v2315, %v2312
        %v2319 = vadd.f32 %v2232, 1.0
        %v2320 = vlog2.pop %v2319
        %v2321 = vmul.f32 %v2320, 0.6931472
        %v2322 = vmul.f32 -0.5, %v2232
        %v2323 = vadd.f32 %v2322, 1.0
        %v2324 = vmul.f32 %v2323, %v2232
        %v2325 = vand.u32 2147483647, %v2232
        %vm2326 = vcmp.lt.f32.partialorder %v2325, 0.0004427343
        %v2327 = vsel %vm2326, %v2324, %v2321
        %v2328 = vadd.f32 %v2234, 1.0
        %v2329 = vlog2.pop %v2328
        %v2330 = vmul.f32 %v2329, 0.6931472
        %v2331 = vmul.f32 -0.5, %v2234
        %v2332 = vadd.f32 %v2331, 1.0
        %v2333 = vmul.f32 %v2332, %v2234
        %v2334 = vand.u32 2147483647, %v2234
        %vm2335 = vcmp.lt.f32.partialorder %v2334, 0.0004427343
        %v2336 = vsel %vm2335, %v2333, %v2330
        %v2337 = vadd.f32 %v2236, 1.0
        %v2338 = vlog2.pop %v2337
        %v2339 = vmul.f32 %v2338, 0.6931472
        %v2340 = vmul.f32 -0.5, %v2236
        %v2341 = vadd.f32 %v2340, 1.0
        %v2342 = vmul.f32 %v2341, %v2236
        %v2343 = vand.u32 2147483647, %v2236
        %vm2344 = vcmp.lt.f32.partialorder %v2343, 0.0004427343
        %v2345 = vsel %vm2344, %v2342, %v2339
        %v2346 = vadd.f32 %v2238, 1.0
        %v2347 = vlog2.pop %v2346
        %v2348 = vmul.f32 %v2347, 0.6931472
        %v2349 = vmul.f32 -0.5, %v2238
        %v2350 = vadd.f32 %v2349, 1.0
        %v2351 = vmul.f32 %v2350, %v2238
        %v2352 = vand.u32 2147483647, %v2238
        %vm2353 = vcmp.lt.f32.partialorder %v2352, 0.0004427343
        %v2354 = vsel %vm2353, %v2351, %v2348
        %v2355 = vadd.f32 %v2240, 1.0
        %v2356 = vlog2.pop %v2355
        %v2357 = vmul.f32 %v2356, 0.6931472
        %v2358 = vmul.f32 -0.5, %v2240
        %v2359 = vadd.f32 %v2358, 1.0
        %v2360 = vmul.f32 %v2359, %v2240
        %v2361 = vand.u32 2147483647, %v2240
        %vm2362 = vcmp.lt.f32.partialorder %v2361, 0.0004427343
        %v2363 = vsel %vm2362, %v2360, %v2357
        %v2364 = vadd.f32 %v2242, 1.0
        %v2365 = vlog2.pop %v2364
        %v2366 = vmul.f32 %v2365, 0.6931472
        %v2367 = vmul.f32 -0.5, %v2242
        %v2368 = vadd.f32 %v2367, 1.0
        %v2369 = vmul.f32 %v2368, %v2242
        %v2370 = vand.u32 2147483647, %v2242
        %vm2371 = vcmp.lt.f32.partialorder %v2370, 0.0004427343
        %v2372 = vsel %vm2371, %v2369, %v2366
        %v2373 = vadd.f32 %v2244, 1.0
        %v2374 = vlog2.pop %v2373
        %v2375 = vmul.f32 %v2374, 0.6931472
        %v2376 = vmul.f32 -0.5, %v2244
        %v2377 = vadd.f32 %v2376, 1.0
        %v2378 = vmul.f32 %v2377, %v2244
        %v2379 = vand.u32 2147483647, %v2244
        %vm2380 = vcmp.lt.f32.partialorder %v2379, 0.0004427343
        %v2381 = vsel %vm2380, %v2378, %v2375
        %v2382 = vadd.f32 %v2246, 1.0
        %v2383 = vlog2.pop %v2382
        %v2384 = vmul.f32 %v2383, 0.6931472
        %v2385 = vmul.f32 -0.5, %v2246
        %v2386 = vadd.f32 %v2385, 1.0
        %v2387 = vmul.f32 %v2386, %v2246
        %v2388 = vand.u32 2147483647, %v2246
        %vm2389 = vcmp.lt.f32.partialorder %v2388, 0.0004427343
        %v2390 = vsel %vm2389, %v2387, %v2384
        %v2391 = vsel %vm2183, %v2105, %v2255
        %v2392 = vsel %vm2184, %v2110, %v2264
        %v2393 = vsel %vm2185, %v2115, %v2273
        %v2394 = vsel %vm2186, %v2120, %v2282
        %v2395 = vsel %vm2187, %v2125, %v2291
        %v2396 = vsel %vm2188, %v2130, %v2300
        %v2397 = vsel %vm2189, %v2135, %v2309
        %v2398 = vsel %vm2190, %v2140, %v2318
        %v2399 = vsel %vm2191, %v2145, %v2327
        %v2400 = vsel %vm2192, %v2150, %v2336
        %v2401 = vsel %vm2193, %v2155, %v2345
        %v2402 = vsel %vm2194, %v2160, %v2354
        %v2403 = vsel %vm2195, %v2165, %v2363
        %v2404 = vsel %vm2196, %v2170, %v2372
        %v2405 = vsel %vm2197, %v2175, %v2381
        %v2406 = vsel %vm2198, %v2180, %v2390
        %v2407 = vld [vmem:[#allocation5] sm:$0xff]
        %v2408 = vld [vmem:[#allocation5 + $0x8] sm:$0xff]
        %v2409 = vld [vmem:[#allocation5 + $0x10] sm:$0xff]
        %v2410 = vld [vmem:[#allocation5 + $0x18] sm:$0xff]
        %v2411 = vld [vmem:[#allocation5 + $0x20] sm:$0xff]
        %v2412 = vld [vmem:[#allocation5 + $0x28] sm:$0xff]
        %v2413 = vld [vmem:[#allocation5 + $0x30] sm:$0xff]
        %v2414 = vld [vmem:[#allocation5 + $0x38] sm:$0xff]
        %v2415 = vld [vmem:[#allocation5 + $0x40] sm:$0xff]
        %v2416 = vld [vmem:[#allocation5 + $0x48] sm:$0xff]
        %v2417 = vld [vmem:[#allocation5 + $0x50] sm:$0xff]
        %v2418 = vld [vmem:[#allocation5 + $0x58] sm:$0xff]
        %v2419 = vld [vmem:[#allocation5 + $0x60] sm:$0xff]
        %v2420 = vld [vmem:[#allocation5 + $0x68] sm:$0xff]
        %v2421 = vld [vmem:[#allocation5 + $0x70] sm:$0xff]
        %v2422 = vld [vmem:[#allocation5 + $0x78] sm:$0xff]
        %v2423 = vld [vmem:[%s12] sm:$0x3]
        %v2425 = vlaneseq
        %v2426 = vshrl.u32 %v2425, 7
        %v2427 = vsub.s32 0, %v2426
        %v2428 = vrot.slane %v2423, %v2427
        %v2429 = vlaneseq
        %v2430 = vshrl.u32 %v2429, 7
        %v2431 = vsub.s32 1, %v2430
        %v2432 = vrot.slane %v2423, %v2431
        %v2436 = vsel %vm930, %v2391, 0
        %v2439 = vsel %vm930, %v2392, 0
        %v2442 = vsel %vm930, %v2393, 0
        %v2445 = vsel %vm930, %v2394, 0
        %v2448 = vsel %vm930, %v2395, 0
        %v2451 = vsel %vm930, %v2396, 0
        %v2454 = vsel %vm930, %v2397, 0
        %v2457 = vsel %vm930, %v2398, 0
        %v2460 = vsel %vm930, %v2399, 0
        %v2463 = vsel %vm930, %v2400, 0
        %v2466 = vsel %vm930, %v2401, 0
        %v2469 = vsel %vm930, %v2402, 0
        %v2472 = vsel %vm930, %v2403, 0
        %v2475 = vsel %vm930, %v2404, 0
        %v2478 = vsel %vm930, %v2405, 0
        %v2481 = vsel %vm930, %v2406, 0
        %2483 = vmatprep.subr.mxu0 %v2408
        %2484 = vmatpush1.msra.mxu0 %v2407
        %2485 = vmatprep.subr.mxu0 %v2410
        %2486 = vmatpush1.msra.mxu0 %v2409
        %2487 = vmatprep.subr.mxu0 %v2412
        %2488 = vmatpush1.msra.mxu0 %v2411
        %2489 = vmatprep.subr.mxu0 %v2414
        %2490 = vmatpush1.msra.mxu0 %v2413
        %2491 = vmatprep.subr.mxu0 %v2416
        %2492 = vmatpush1.msra.mxu0 %v2415
        %2493 = vmatprep.subr.mxu0 %v2418
        %2494 = vmatpush1.msra.mxu0 %v2417
        %2495 = vmatprep.subr.mxu0 %v2420
        %2496 = vmatpush1.msra.mxu0 %v2419
        %2497 = vmatprep.subr.mxu0 %v2422
        %2498 = vmatpush1.msra.mxu0 %v2421
        %2499 = vmatprep.subr.mxu0 0.0
        %2500 = vmatpush1.msra.mxu0 0.0
        %2501 = vmatprep.subr.mxu0 0.0
        %2502 = vmatpush1.msra.mxu0 0.0
        %2503 = vmatprep.subr.mxu0 0.0
        %2504 = vmatpush1.msra.mxu0 0.0
        %2505 = vmatprep.subr.mxu0 0.0
        %2506 = vmatpush1.msra.mxu0 0.0
        %2507 = vmatprep.subr.mxu0 0.0
        %2508 = vmatpush1.msra.mxu0 0.0
        %2509 = vmatprep.subr.mxu0 0.0
        %2510 = vmatpush1.msra.mxu0 0.0
        %2511 = vmatprep.subr.mxu0 0.0
        %2512 = vmatpush1.msra.mxu0 0.0
        %2513 = vmatprep.subr.mxu0 0.0
        %2514 = vmatpush1.msra.mxu0 0.0
        %2515 = vmatprep.subr.mxu0 0.0
        %2516 = vmatpush1.msra.mxu0 0.0
        %2517 = vmatprep.subr.mxu0 0.0
        %2518 = vmatpush1.msra.mxu0 0.0
        %2519 = vmatprep.subr.mxu0 0.0
        %2520 = vmatpush1.msra.mxu0 0.0
        %2521 = vmatprep.subr.mxu0 0.0
        %2522 = vmatpush1.msra.mxu0 0.0
        %2523 = vmatprep.subr.mxu0 0.0
        %2524 = vmatpush1.msra.mxu0 0.0
        %2525 = vmatprep.subr.mxu0 0.0
        %2526 = vmatpush1.msra.mxu0 0.0
        %2527 = vmatprep.subr.mxu0 0.0
        %2528 = vmatpush1.msra.mxu0 0.0
        %2529 = vmatprep.subr.mxu0 0.0
        %2530 = vmatpush1.msra.mxu0 0.0
        %2531 = vmatprep.subr.mxu0 0.0
        %2532 = vmatpush1.msra.mxu0 0.0
        %2533 = vmatprep.subr.mxu0 0.0
        %2534 = vmatpush1.msra.mxu0 0.0
        %2535 = vmatprep.subr.mxu0 0.0
        %2536 = vmatpush1.msra.mxu0 0.0
        %2537 = vmatprep.subr.mxu0 0.0
        %2538 = vmatpush1.msra.mxu0 0.0
        %2539 = vmatprep.subr.mxu0 0.0
        %2540 = vmatpush1.msra.mxu0 0.0
        %2541 = vmatprep.subr.mxu0 0.0
        %2542 = vmatpush1.msra.mxu0 0.0
        %2543 = vmatprep.subr.mxu0 0.0
        %2544 = vmatpush1.msra.mxu0 0.0
        %2545 = vmatprep.subr.mxu0 0.0
        %2546 = vmatpush1.msra.mxu0 0.0
        %2547 = vmatprep.mubr.f32.mxu0 0.0
        %2548 = vmatmul.mubr.f32.gmra.mrb[0].mxu0 %v2436
        %v2549 = vpop.f32.mrb[0].mxu0
        %v2550 = vadd.f32 %v2428, %v2549
        %v2551 = vpop.f32.mrb[0].mxu0
        %v2552 = vadd.f32 %v2432, %v2551
        %2553 = vmatprep.mubr.f32.mxu0 0.0
        %2554 = vmatmul.mubr.f32.gmra.mrb[0].mxu0 %v2439
        %v2555 = vpop.f32.mrb[0].mxu0
        %v2556 = vadd.f32 %v2428, %v2555
        %v2557 = vpop.f32.mrb[0].mxu0
        %v2558 = vadd.f32 %v2432, %v2557
        %2559 = vmatprep.mubr.f32.mxu0 0.0
        %2560 = vmatmul.mubr.f32.gmra.mrb[0].mxu0 %v2442
        %v2561 = vpop.f32.mrb[0].mxu0
        %v2562 = vadd.f32 %v2428, %v2561
        %v2563 = vpop.f32.mrb[0].mxu0
        %v2564 = vadd.f32 %v2432, %v2563
        %2565 = vmatprep.mubr.f32.mxu0 0.0
        %2566 = vmatmul.mubr.f32.gmra.mrb[0].mxu0 %v2445
        %v2567 = vpop.f32.mrb[0].mxu0
        %v2568 = vadd.f32 %v2428, %v2567
        %v2569 = vpop.f32.mrb[0].mxu0
        %v2570 = vadd.f32 %v2432, %v2569
        %2571 = vmatprep.mubr.f32.mxu0 0.0
        %2572 = vmatmul.mubr.f32.gmra.mrb[0].mxu0 %v2448
        %v2573 = vpop.f32.mrb[0].mxu0
        %v2574 = vadd.f32 %v2428, %v2573
        %v2575 = vpop.f32.mrb[0].mxu0
        %v2576 = vadd.f32 %v2432, %v2575
        %2577 = vmatprep.mubr.f32.mxu0 0.0
        %2578 = vmatmul.mubr.f32.gmra.mrb[0].mxu0 %v2451
        %v2579 = vpop.f32.mrb[0].mxu0
        %v2580 = vadd.f32 %v2428, %v2579
        %v2581 = vpop.f32.mrb[0].mxu0
        %v2582 = vadd.f32 %v2432, %v2581
        %2583 = vmatprep.mubr.f32.mxu0 0.0
        %2584 = vmatmul.mubr.f32.gmra.mrb[0].mxu0 %v2454
        %v2585 = vpop.f32.mrb[0].mxu0
        %v2586 = vadd.f32 %v2428, %v2585
        %v2587 = vpop.f32.mrb[0].mxu0
        %v2588 = vadd.f32 %v2432, %v2587
        %2589 = vmatprep.mubr.f32.mxu0 0.0
        %2590 = vmatmul.mubr.f32.gmra.mrb[0].mxu0 %v2457
        %v2591 = vpop.f32.mrb[0].mxu0
        %v2592 = vadd.f32 %v2428, %v2591
        %v2593 = vpop.f32.mrb[0].mxu0
        %v2594 = vadd.f32 %v2432, %v2593
        %2595 = vmatprep.mubr.f32.mxu0 0.0
        %2596 = vmatmul.mubr.f32.gmra.mrb[0].mxu0 %v2460
        %v2597 = vpop.f32.mrb[0].mxu0
        %v2598 = vadd.f32 %v2428, %v2597
        %v2599 = vpop.f32.mrb[0].mxu0
        %v2600 = vadd.f32 %v2432, %v2599
        %2601 = vmatprep.mubr.f32.mxu0 0.0
        %2602 = vmatmul.mubr.f32.gmra.mrb[0].mxu0 %v2463
        %v2603 = vpop.f32.mrb[0].mxu0
        %v2604 = vadd.f32 %v2428, %v2603
        %v2605 = vpop.f32.mrb[0].mxu0
        %v2606 = vadd.f32 %v2432, %v2605
        %2607 = vmatprep.mubr.f32.mxu0 0.0
        %2608 = vmatmul.mubr.f32.gmra.mrb[0].mxu0 %v2466
        %v2609 = vpop.f32.mrb[0].mxu0
        %v2610 = vadd.f32 %v2428, %v2609
        %v2611 = vpop.f32.mrb[0].mxu0
        %v2612 = vadd.f32 %v2432, %v2611
        %2613 = vmatprep.mubr.f32.mxu0 0.0
        %2614 = vmatmul.mubr.f32.gmra.mrb[0].mxu0 %v2469
        %v2615 = vpop.f32.mrb[0].mxu0
        %v2616 = vadd.f32 %v2428, %v2615
        %v2617 = vpop.f32.mrb[0].mxu0
        %v2618 = vadd.f32 %v2432, %v2617
        %2619 = vmatprep.mubr.f32.mxu0 0.0
        %2620 = vmatmul.mubr.f32.gmra.mrb[0].mxu0 %v2472
        %v2621 = vpop.f32.mrb[0].mxu0
        %v2622 = vadd.f32 %v2428, %v2621
        %v2623 = vpop.f32.mrb[0].mxu0
        %v2624 = vadd.f32 %v2432, %v2623
        %2625 = vmatprep.mubr.f32.mxu0 0.0
        %2626 = vmatmul.mubr.f32.gmra.mrb[0].mxu0 %v2475
        %v2627 = vpop.f32.mrb[0].mxu0
        %v2628 = vadd.f32 %v2428, %v2627
        %v2629 = vpop.f32.mrb[0].mxu0
        %v2630 = vadd.f32 %v2432, %v2629
        %2631 = vmatprep.mubr.f32.mxu0 0.0
        %2632 = vmatmul.mubr.f32.gmra.mrb[0].mxu0 %v2478
        %v2633 = vpop.f32.mrb[0].mxu0
        %v2634 = vadd.f32 %v2428, %v2633
        %v2635 = vpop.f32.mrb[0].mxu0
        %v2636 = vadd.f32 %v2432, %v2635
        %2637 = vmatprep.mubr.f32.mxu0 0.0
        %2638 = vmatmul.mubr.f32.gmra.mrb[0].mxu0 %v2481
        %v2639 = vpop.f32.mrb[0].mxu0
        %v2640 = vadd.f32 %v2428, %v2639
        %v2641 = vpop.f32.mrb[0].mxu0
        %v2642 = vadd.f32 %v2432, %v2641
        %2643 = vdwg.mxu0
        %2644 = vst [vmem:[%s466] sm:$0xff] %v2550
        %2645 = vst [vmem:[%s466 + $0x8] sm:$0xff] %v2552
        %2646 = vst [vmem:[%s466 + $0x10] sm:$0xff] %v2556
        %2647 = vst [vmem:[%s466 + $0x18] sm:$0xff] %v2558
        %2648 = vst [vmem:[%s466 + $0x20] sm:$0xff] %v2562
        %2649 = vst [vmem:[%s466 + $0x28] sm:$0xff] %v2564
        %2650 = vst [vmem:[%s466 + $0x30] sm:$0xff] %v2568
        %2651 = vst [vmem:[%s466 + $0x38] sm:$0xff] %v2570
        %2652 = vst [vmem:[%s466 + $0x40] sm:$0xff] %v2574
        %2653 = vst [vmem:[%s466 + $0x48] sm:$0xff] %v2576
        %2654 = vst [vmem:[%s466 + $0x50] sm:$0xff] %v2580
        %2655 = vst [vmem:[%s466 + $0x58] sm:$0xff] %v2582
        %2656 = vst [vmem:[%s466 + $0x60] sm:$0xff] %v2586
        %2657 = vst [vmem:[%s466 + $0x68] sm:$0xff] %v2588
        %2658 = vst [vmem:[%s466 + $0x70] sm:$0xff] %v2592
        %2659 = vst [vmem:[%s466 + $0x78] sm:$0xff] %v2594
        %2660 = vst [vmem:[%s466 + $0x80] sm:$0xff] %v2598
        %2661 = vst [vmem:[%s466 + $0x88] sm:$0xff] %v2600
        %2662 = vst [vmem:[%s466 + $0x90] sm:$0xff] %v2604
        %2663 = vst [vmem:[%s466 + $0x98] sm:$0xff] %v2606
        %2664 = vst [vmem:[%s466 + $0xa0] sm:$0xff] %v2610
        %2665 = vst [vmem:[%s466 + $0xa8] sm:$0xff] %v2612
        %2666 = vst [vmem:[%s466 + $0xb0] sm:$0xff] %v2616
        %2667 = vst [vmem:[%s466 + $0xb8] sm:$0xff] %v2618
        %2668 = vst [vmem:[%s466 + $0xc0] sm:$0xff] %v2622
        %2669 = vst [vmem:[%s466 + $0xc8] sm:$0xff] %v2624
        %2670 = vst [vmem:[%s466 + $0xd0] sm:$0xff] %v2628
        %2671 = vst [vmem:[%s466 + $0xd8] sm:$0xff] %v2630
        %2672 = vst [vmem:[%s466 + $0xe0] sm:$0xff] %v2634
        %2673 = vst [vmem:[%s466 + $0xe8] sm:$0xff] %v2636
        %2674 = vst [vmem:[%s466 + $0xf0] sm:$0xff] %v2640
        %2675 = vst [vmem:[%s466 + $0xf8] sm:$0xff] %v2642
        %s2676 = sand.u32 %s315, 1
        %s2677 = scalar_lea.sflag [#allocation4], %s2676
        %s2678 = sand.u32 %s315, 1
        %s2679 = smul.addr %s2678, 256
        %s2680 = scalar_lea.vmem [#allocation7], %s2679
        // Predicated region
        $region81: #{tpu_custom_call.1} parent=71 // pred_check
          %p2681 = pneg %p325
        $region82: #{tpu_custom_call.1} parent=71 // pred_check_branch
          %2683 = sbr.rel (%p2681) target = $region84
        $region83: #{tpu_custom_call.1} parent=71 // pred_region
          %s2684 = smul.u32 16, %s29
          %s2686 = ssub.s32 4096, 4096
          %2687 = vsyncadd %s2677, %s2686
          %s2688 = smul.addr %s2684, 2
          %s2689 = smul.addr %s2688, 128
          %s2690 = scalar_lea.hbm %s13, %s2689
          %s2691 = sshll.u32 %s2680, 4
          %s2692 = int_to_ptr.vmem [resolvable:$true] %s2691
          %2697 = dma.vmem_to_hbm [thread:$0]  %s2692, 4096, %s2690, %s2677, 256, 256, 16
        $region84: #{tpu_custom_call.1} parent=71 // pred_fallthru
          _
      $region72: #{tpu_custom_call.1} parent=5 // pred_fallthru
        _
      %p2698 = scmp.le.s32.totalorder 2, %s24
      // Predicated region
      $region85: #{tpu_custom_call.1} parent=5 // pred_check
        %p2699 = pneg %p2698
      $region86: #{tpu_custom_call.1} parent=5 // pred_check_branch
        %2701 = sbr.rel (%p2699) target = $region88
      $region87: #{tpu_custom_call.1} parent=5 // pred_region
        %s2702 = ssub.s32 %s24, 2
        // Predicated region
        $region89: #{tpu_custom_call.1} parent=87 // pred_check
          %p2703 = pneg %p331
        $region90: #{tpu_custom_call.1} parent=87 // pred_check_branch
          %2705 = sbr.rel (%p2703) target = $region92
        $region91: #{tpu_custom_call.1} parent=87 // pred_region
          %s2706 = sand.u32 %s316, 1
          %s2707 = scalar_lea.sflag [#allocation4], %s2706
          %s2708 = sand.u32 %s316, 1
          %s2709 = smul.addr %s2708, 256
          %s2710 = scalar_lea.vmem [#allocation7], %s2709
          %2711 = dma.done %s2707, 4096
        $region92: #{tpu_custom_call.1} parent=87 // pred_fallthru
          _
      $region88: #{tpu_custom_call.1} parent=5 // pred_fallthru
        _
    $region6: #{tpu_custom_call.1} parent=1 // loop_footer
      %s28 = sadd.s32 1, %s24
    $region7: #{tpu_custom_call.1} parent=1 // loop_footer_branch
      %23 = sbr.rel target = $region3
    $region8: #{tpu_custom_call.1} parent=1 // loop_exit
      _
    %2712 = vsyncpa [#allocation3], 1
    %s2713 = scalar_lea.sflag [#allocation3], 1
    %2714 = vsyncpa %s2713, 1
    %2715 = vsyncpa [#allocation6], 1
    %2716 = vsyncpa [#allocation4], 1
    %s2717 = scalar_lea.sflag [#allocation4], 1
    %2718 = vsyncpa %s2717, 1

</llo_original>
